<compile_context>
chip_gen: v7x
topology: tpu7x:2x2x1
jax: 0.10.0
libtpu: 0.0.40
codegen_flags: <defaults>
</compile_context>

<pallas_src>
import jax
import jax.numpy as jnp
import numpy as np
from jax.experimental import pallas as pl
from jax.experimental.pallas import tpu as pltpu


# --------------------------------------------------------------------------
# Fused decoder kernel (factory closes over static shape parameters)
# --------------------------------------------------------------------------
def _make_decoder_kernel(Cout, Cl, Wp, NBL):
    """Layout inside the kernel: channels on sublanes, flattened padded
    spatial (batch packed along lanes) on lanes: every operand is (C, NBL)."""
    Ctot = Cout + Cl

    def tap(v, off):
        # result[:, q] = v[:, (q + off) % NBL]  ==  roll by -off (XLU lane rot)
        if off == 0:
            return v
        return pltpu.roll(v, (-off) % NBL, axis=1)

    def conv3x3(w_ref, xin):
        # 3x3 "same" conv as 9 accumulating MXU matmuls fed by lane rotations;
        # no im2col scratch round trip.
        acc = None
        for t in range(9):
            dy, dx = t // 3, t % 3
            off = (dy - 1) * Wp + (dx - 1)
            p = jnp.dot(w_ref[t], tap(xin, off),
                        preferred_element_type=jnp.float32)
            acc = p if acc is None else acc + p
        return acc

    def kernel(hrep_ref, low_ref, masks_ref, wup_ref, upb_ref,
               w1_ref, s1_ref, b1_ref, w2_ref, s2_ref, b2_ref, o_ref):
        f32 = jnp.float32
        cdt = w1_ref.dtype                      # matmul operand dtype (f32/bf16)
        C = Cout

        m = masks_ref[...]                      # (3, NBL) f32
        interior = m[0:1, :]                    # 1 inside the HxW image, else 0
        sel_r = m[1:2, :] != 0.0                # transposed-conv tap row parity
        sel_c = m[2:3, :] != 0.0                # transposed-conv tap col parity

        # ---- ConvTranspose2d(k=2, s=2): one matmul + parity select --------
        y_up = jnp.dot(wup_ref[...], hrep_ref[...],
                       preferred_element_type=f32)          # (4*Cout, NBL)
        top = jnp.where(sel_c, y_up[0:C], y_up[C:2 * C])        # di = 0 taps
        bot = jnp.where(sel_c, y_up[2 * C:3 * C], y_up[3 * C:4 * C])  # di = 1
        x1 = (jnp.where(sel_r, top, bot) + upb_ref[...]) * interior

        # channel concat(x1, low) built once in vregs (low stays bf16 in the
        # bf16 path — no full-matrix upcast)
        xcat = jnp.concatenate([x1.astype(cdt), low_ref[...]], axis=0)

        # ---- conv1 3x3 + folded BN + ReLU ---------------------------------
        h1 = conv3x3(w1_ref, xcat)                           # (Cout, NBL) f32
        h1 = jnp.maximum(h1 * s1_ref[...] + b1_ref[...], 0.0) * interior

        # ---- conv2 3x3 + folded BN + ReLU ---------------------------------
        h2 = conv3x3(w2_ref, h1.astype(cdt))                 # (Cout, NBL) f32
        h2 = jnp.maximum(h2 * s2_ref[...] + b2_ref[...], 0.0)

        o_ref[...] = h2.astype(o_ref.dtype)

    return kernel


def _fold_bn(conv_b, gamma, beta, mean, var, eps=1e-5):
    scale = gamma / jnp.sqrt(var + eps)
    shift = beta + scale * (conv_b - mean)
    return scale, shift


def _pick_images_per_step(N, Lpad, max_lanes=2048):
    nb = 1
    for d in range(1, N + 1):
        if N % d == 0 and d * Lpad <= max_lanes:
            nb = d
    return nb


# --------------------------------------------------------------------------
# Decoder forward (NCHW in / NCHW out, like the PyTorch module)
# --------------------------------------------------------------------------
def decoder_forward(params, high_nchw, low_nchw, *, use_bf16=True,
                    images_per_step=None):
    N, Cin, Hh, Wh = high_nchw.shape
    Cl = low_nchw.shape[1]
    Cout = params["up_w"].shape[1]
    Ctot = Cout + Cl
    H, W = 2 * Hh, 2 * Wh
    Hp, Wp = H + 2, W + 2
    Lv = Hp * Wp                                   # valid flattened length
    Lpad = ((Lv + 127) // 128) * 128               # lane-dense padded length

    # x2 = F.pad(low, [offset//2]*4); plus the 1-pixel zero ring used by the
    # padding=1 convs -> embed low directly in the (Hp, Wp) padded grid.
    offset = H - low_nchw.shape[2]
    p = offset // 2
    if low_nchw.shape[2] + 2 * p != H or low_nchw.shape[3] + 2 * p != W:
        raise ValueError("high/low spatial sizes incompatible (odd offset), "
                         "same failure mode as the PyTorch reference")

    NB = images_per_step or _pick_images_per_step(N, Lpad)
    if N % NB != 0:
        raise ValueError("images_per_step must divide the batch size")
    G = N // NB
    NBL = NB * Lpad

    low_e = jnp.pad(low_nchw, ((0, 0), (0, 0), (p + 1, p + 1), (p + 1, p + 1)))
    low_e = low_e.reshape(N, Cl, Lv)

    # 2x nearest upsample of `high` embedded in the padded grid; static parity
    # selects pick the correct transposed-conv tap per position.
    hrep = jnp.repeat(jnp.repeat(high_nchw, 2, axis=2), 2, axis=3)
    hrep = jnp.pad(hrep, ((0, 0), (0, 0), (1, 1), (1, 1))).reshape(N, Cin, Lv)

    def to_lanes(a):                               # (N, C, Lv) -> (C, N*Lpad)
        a = jnp.pad(a, ((0, 0), (0, 0), (0, Lpad - Lv)))
        return jnp.transpose(a, (1, 0, 2)).reshape(a.shape[1], N * Lpad)

    hrep = to_lanes(hrep)
    low_e = to_lanes(low_e)

    # tiny static masks: interior, row parity (di==0), col parity (dj==0)
    ys, xs = np.meshgrid(np.arange(Hp), np.arange(Wp), indexing="ij")
    interior = (ys >= 1) & (ys <= H) & (xs >= 1) & (xs <= W)
    m = np.stack([interior, (ys % 2) == 1, (xs % 2) == 1], 0)
    m = m.astype(np.float32).reshape(3, Lv)
    m = np.pad(m, ((0, 0), (0, Lpad - Lv)))
    masks = jnp.asarray(np.tile(m, (1, NB)))       # (3, NBL)

    # --- weights (PyTorch layouts) re-packed for the in-kernel matmuls ------
    # up_w (Cin,Cout,2,2) -> rows ordered ((di*2+dj)*Cout + o)
    wup = jnp.transpose(params["up_w"], (2, 3, 1, 0)).reshape(4 * Cout, Cin)
    # conv w (Cout,Cin,3,3) -> (9, Cout, Cin) per-tap matrices
    w1 = jnp.transpose(params["c1_w"], (2, 3, 0, 1)).reshape(9, Cout, Ctot)
    w2 = jnp.transpose(params["c2_w"], (2, 3, 0, 1)).reshape(9, Cout, Cout)
    s1, b1 = _fold_bn(params["c1_b"], params["bn1_g"], params["bn1_b"],
                      params["bn1_m"], params["bn1_v"])
    s2, b2 = _fold_bn(params["c2_b"], params["bn2_g"], params["bn2_b"],
                      params["bn2_m"], params["bn2_v"])
    upb = params["up_b"].reshape(Cout, 1)
    s1, b1 = s1.reshape(Cout, 1), b1.reshape(Cout, 1)
    s2, b2 = s2.reshape(Cout, 1), b2.reshape(Cout, 1)

    if use_bf16:   # bf16 matmul operands, f32 accumulate + f32 epilogue
        hrep, low_e, wup, w1, w2 = (a.astype(jnp.bfloat16)
                                    for a in (hrep, low_e, wup, w1, w2))

    kernel = _make_decoder_kernel(Cout, Cl, Wp, NBL)

    def _full(shape):
        nd = len(shape)
        return pl.BlockSpec(shape, lambda g, nd=nd: (0,) * nd)

    out_flat = pl.pallas_call(
        kernel,
        out_shape=jax.ShapeDtypeStruct((Cout, N * Lpad), jnp.float32),
        grid=(G,),
        in_specs=[
            pl.BlockSpec((Cin, NBL), lambda g: (0, g)),    # upsampled high
            pl.BlockSpec((Cl, NBL), lambda g: (0, g)),     # embedded low
            pl.BlockSpec((3, NBL), lambda g: (0, 0)),      # interior/parity
            _full((4 * Cout, Cin)),                        # up weights
            _full((Cout, 1)),                              # up bias
            _full((9, Cout, Ctot)),                        # conv1 taps
            _full((Cout, 1)), _full((Cout, 1)),            # bn1 scale/shift
            _full((9, Cout, Cout)),                        # conv2 taps
            _full((Cout, 1)), _full((Cout, 1)),            # bn2 scale/shift
        ],
        out_specs=pl.BlockSpec((Cout, NBL), lambda g: (0, g)),
        compiler_params=pltpu.CompilerParams(
            dimension_semantics=("parallel",)),
    )(hrep, low_e, masks, wup, upb, w1, s1, b1, w2, s2, b2)

    # drop lane padding + the 1-pixel ring -> NCHW, matching the PyTorch module
    out = out_flat.reshape(Cout, N, Lpad)[:, :, :Lv].reshape(Cout, N, Hp, Wp)
    out = jnp.transpose(out, (1, 0, 2, 3))[:, :, 1:H + 1, 1:W + 1]
    return out


# --------------------------------------------------------------------------
# Pure-JAX reference (for correctness check only)
# --------------------------------------------------------------------------
def _ref_conv_bn_relu(x, w, b, g, be, m, v, eps=1e-5):
    w_hwio = jnp.transpose(w, (2, 3, 1, 0))
    y = jax.lax.conv_general_dilated(
        x, w_hwio, window_strides=(1, 1), padding="SAME",
        dimension_numbers=("NHWC", "HWIO", "NHWC")) + b
    y = g * (y - m) / jnp.sqrt(v + eps) + be
    return jnp.maximum(y, 0.0)


def _ref_forward(params, high_nchw, low_nchw):
    high = jnp.transpose(high_nchw, (0, 2, 3, 1))
    low = jnp.transpose(low_nchw, (0, 2, 3, 1))
    w, b = params["up_w"], params["up_b"]
    N, Hh, Wh, Cin = high.shape
    Cout = w.shape[1]
    x1 = jnp.einsum("nhwc,coij->nhiwjo", high, w).reshape(N, 2 * Hh, 2 * Wh, Cout) + b
    offset = x1.shape[1] - low.shape[1]
    p = offset // 2
    x2 = jnp.pad(low, ((0, 0), (p, p), (p, p), (0, 0)))
    x = jnp.concatenate([x1, x2], axis=-1)
    y = _ref_conv_bn_relu(x, params["c1_w"], params["c1_b"], params["bn1_g"],
                          params["bn1_b"], params["bn1_m"], params["bn1_v"])
    y = _ref_conv_bn_relu(y, params["c2_w"], params["c2_b"], params["bn2_g"],
                          params["bn2_b"], params["bn2_m"], params["bn2_v"])
    return jnp.transpose(y, (0, 3, 1, 2))


def init_params(key, cin, cout):
    ks = jax.random.split(key, 12)
    n = lambda k, s, sc=0.1: sc * jax.random.normal(k, s, jnp.float32)
    u = lambda k, s: jax.random.uniform(k, s, jnp.float32, 0.5, 1.5)
    return dict(
        up_w=n(ks[0], (cin, cout, 2, 2)), up_b=n(ks[1], (cout,)),
        c1_w=n(ks[2], (cout, cin, 3, 3)), c1_b=n(ks[3], (cout,)),
        bn1_g=u(ks[4], (cout,)), bn1_b=n(ks[5], (cout,)),
        bn1_m=n(ks[6], (cout,)), bn1_v=u(ks[7], (cout,)),
        c2_w=n(ks[8], (cout, cout, 3, 3)), c2_b=n(ks[9], (cout,)),
        bn2_g=u(ks[10], (cout,)), bn2_b=n(ks[11], (cout,)),
        bn2_m=jnp.zeros((cout,), jnp.float32), bn2_v=jnp.ones((cout,), jnp.float32),
    )


if __name__ == "__main__":
    key = jax.random.PRNGKey(0)
    in_channels, out_channels = 16, 8
    N, Hh, Wh = 2, 8, 8                       # high: (N, Cin, 8, 8)
    Hl, Wl = 2 * Hh, 2 * Wh                   # low : (N, Cin-Cout, 16, 16)

    kp, kh, kl = jax.random.split(key, 3)
    params = init_params(kp, in_channels, out_channels)
    high = jax.random.normal(kh, (N, in_channels, Hh, Wh), jnp.float32)
    low = jax.random.normal(kl, (N, in_channels - out_channels, Hl, Wl), jnp.float32)

    ref = jax.block_until_ready(_ref_forward(params, high, low))

    # full f32 path
    out_f32 = jax.block_until_ready(
        decoder_forward(params, high, low, use_bf16=False))
    assert out_f32.shape == (N, out_channels, 2 * Hh, 2 * Wh), out_f32.shape
    np.testing.assert_allclose(np.asarray(out_f32), np.asarray(ref),
                               rtol=1e-3, atol=1e-3)

    # default path: bf16 matmul operands, f32 accumulation + f32 epilogue
    out_bf16 = jax.block_until_ready(decoder_forward(params, high, low))
    np.testing.assert_allclose(np.asarray(out_bf16), np.asarray(ref),
                               rtol=3e-2, atol=3e-2)

    print("KERNEL_OK")
</pallas_src>

<mosaic_0001>
module attributes {stable_mosaic.version = 11 : i64} {
  func.func @kernel(%arg0: i32, %arg1: memref<16x768xf32, #tpu.memory_space<vmem>>, %arg2: memref<8x768xf32, #tpu.memory_space<vmem>>, %arg3: memref<3x768xf32, #tpu.memory_space<vmem>>, %arg4: memref<32x16xf32, #tpu.memory_space<vmem>>, %arg5: memref<8x1xf32, #tpu.memory_space<vmem>>, %arg6: memref<9x8x16xf32, #tpu.memory_space<vmem>>, %arg7: memref<8x1xf32, #tpu.memory_space<vmem>>, %arg8: memref<8x1xf32, #tpu.memory_space<vmem>>, %arg9: memref<9x8x8xf32, #tpu.memory_space<vmem>>, %arg10: memref<8x1xf32, #tpu.memory_space<vmem>>, %arg11: memref<8x1xf32, #tpu.memory_space<vmem>>, %arg12: memref<8x768xf32, #tpu.memory_space<vmem>>) attributes {dimension_semantics = [#tpu.dimension_semantics<parallel>], iteration_bounds = array<i64: 1>, scalar_prefetch = 0 : i64, scratch_operands = 0 : i64, tpu.core_type = #tpu.core_type<tc>, window_params = [{transform_indices = @transform_0, window_bounds = array<i64: 16, 768>}, {transform_indices = @transform_1, window_bounds = array<i64: 8, 768>}, {pipeline_mode = #tpu.pipeline_mode<synchronous>, transform_indices = @transform_2, window_bounds = array<i64: 3, 768>}, {pipeline_mode = #tpu.pipeline_mode<synchronous>, transform_indices = @transform_3, window_bounds = array<i64: 32, 16>}, {pipeline_mode = #tpu.pipeline_mode<synchronous>, transform_indices = @transform_4, window_bounds = array<i64: 8, 1>}, {pipeline_mode = #tpu.pipeline_mode<synchronous>, transform_indices = @transform_5, window_bounds = array<i64: 9, 8, 16>}, {pipeline_mode = #tpu.pipeline_mode<synchronous>, transform_indices = @transform_6, window_bounds = array<i64: 8, 1>}, {pipeline_mode = #tpu.pipeline_mode<synchronous>, transform_indices = @transform_7, window_bounds = array<i64: 8, 1>}, {pipeline_mode = #tpu.pipeline_mode<synchronous>, transform_indices = @transform_8, window_bounds = array<i64: 9, 8, 8>}, {pipeline_mode = #tpu.pipeline_mode<synchronous>, transform_indices = @transform_9, window_bounds = array<i64: 8, 1>}, {pipeline_mode = #tpu.pipeline_mode<synchronous>, transform_indices = @transform_10, window_bounds = array<i64: 8, 1>}, {transform_indices = @transform_11, window_bounds = array<i64: 8, 768>}]} {
    %c0 = arith.constant 0 : index
    %c0_0 = arith.constant 0 : index
    %0 = vector.load %arg3[%c0, %c0_0] : memref<3x768xf32, #tpu.memory_space<vmem>>, vector<3x768xf32>
    %1 = vector.extract_strided_slice %0 {offsets = [0, 0], sizes = [1, 768], strides = [1, 1]} : vector<3x768xf32> to vector<1x768xf32>
    %2 = vector.extract_strided_slice %0 {offsets = [1, 0], sizes = [1, 768], strides = [1, 1]} : vector<3x768xf32> to vector<1x768xf32>
    %cst = arith.constant 0.000000e+00 : f32
    %3 = vector.broadcast %cst : f32 to vector<1x768xf32>
    %4 = arith.cmpf one, %2, %3 : vector<1x768xf32>
    %5 = vector.extract_strided_slice %0 {offsets = [2, 0], sizes = [1, 768], strides = [1, 1]} : vector<3x768xf32> to vector<1x768xf32>
    %cst_1 = arith.constant 0.000000e+00 : f32
    %6 = vector.broadcast %cst_1 : f32 to vector<1x768xf32>
    %7 = arith.cmpf one, %5, %6 : vector<1x768xf32>
    %c0_2 = arith.constant 0 : index
    %c0_3 = arith.constant 0 : index
    %8 = vector.load %arg4[%c0_2, %c0_3] : memref<32x16xf32, #tpu.memory_space<vmem>>, vector<32x16xf32>
    %c0_4 = arith.constant 0 : index
    %c0_5 = arith.constant 0 : index
    %9 = vector.load %arg1[%c0_4, %c0_5] : memref<16x768xf32, #tpu.memory_space<vmem>>, vector<16x768xf32>
    %cst_6 = arith.constant dense<0.000000e+00> : vector<32x768xf32>
    %10 = tpu.matmul %8, %9, %cst_6 {dimension_numbers = #tpu.dot_dimension_numbers<[1], [0], [0], [1], [0, 0, 1, 1], [], []>} : vector<32x16xf32>, vector<16x768xf32>, vector<32x768xf32> -> vector<32x768xf32>
    %11 = vector.extract_strided_slice %10 {offsets = [0, 0], sizes = [8, 768], strides = [1, 1]} : vector<32x768xf32> to vector<8x768xf32>
    %12 = vector.extract_strided_slice %10 {offsets = [8, 0], sizes = [8, 768], strides = [1, 1]} : vector<32x768xf32> to vector<8x768xf32>
    %13 = vector.shape_cast %7 : vector<1x768xi1> to vector<1x768xi1>
    %14 = vector.broadcast %13 : vector<1x768xi1> to vector<8x768xi1>
    %15 = arith.select %14, %11, %12 : vector<8x768xi1>, vector<8x768xf32>
    %16 = vector.extract_strided_slice %10 {offsets = [16, 0], sizes = [8, 768], strides = [1, 1]} : vector<32x768xf32> to vector<8x768xf32>
    %17 = vector.extract_strided_slice %10 {offsets = [24, 0], sizes = [8, 768], strides = [1, 1]} : vector<32x768xf32> to vector<8x768xf32>
    %18 = vector.shape_cast %7 : vector<1x768xi1> to vector<1x768xi1>
    %19 = vector.broadcast %18 : vector<1x768xi1> to vector<8x768xi1>
    %20 = arith.select %19, %16, %17 : vector<8x768xi1>, vector<8x768xf32>
    %21 = vector.shape_cast %4 : vector<1x768xi1> to vector<1x768xi1>
    %22 = vector.broadcast %21 : vector<1x768xi1> to vector<8x768xi1>
    %23 = arith.select %22, %15, %20 : vector<8x768xi1>, vector<8x768xf32>
    %c0_7 = arith.constant 0 : index
    %c0_8 = arith.constant 0 : index
    %24 = vector.load %arg5[%c0_7, %c0_8] : memref<8x1xf32, #tpu.memory_space<vmem>>, vector<8x1xf32>
    %25 = vector.broadcast %24 : vector<8x1xf32> to vector<8x768xf32>
    %26 = arith.addf %23, %25 : vector<8x768xf32>
    %27 = vector.broadcast %1 : vector<1x768xf32> to vector<8x768xf32>
    %28 = arith.mulf %26, %27 : vector<8x768xf32>
    %c0_9 = arith.constant 0 : index
    %c0_10 = arith.constant 0 : index
    %29 = vector.load %arg2[%c0_9, %c0_10] : memref<8x768xf32, #tpu.memory_space<vmem>>, vector<8x768xf32>
    %30 = tpu.concatenate %28, %29 in 0 : vector<8x768xf32>, vector<8x768xf32> -> vector<16x768xf32>
    %c0_11 = arith.constant 0 : index
    %c0_12 = arith.constant 0 : index
    %c0_13 = arith.constant 0 : index
    %31 = vector.load %arg6[%c0_11, %c0_12, %c0_13] : memref<9x8x16xf32, #tpu.memory_space<vmem>>, vector<1x8x16xf32>
    %32 = vector.shape_cast %31 : vector<1x8x16xf32> to vector<8x16xf32>
    %c19_i32 = arith.constant 19 : i32
    %33 = tpu.dynamic_rotate %30 by %c19_i32 dim 1 : vector<16x768xf32>, i32 -> vector<16x768xf32>
    %cst_14 = arith.constant dense<0.000000e+00> : vector<8x768xf32>
    %34 = tpu.matmul %32, %33, %cst_14 {dimension_numbers = #tpu.dot_dimension_numbers<[1], [0], [0], [1], [0, 0, 1, 1], [], []>} : vector<8x16xf32>, vector<16x768xf32>, vector<8x768xf32> -> vector<8x768xf32>
    %c1 = arith.constant 1 : index
    %c0_15 = arith.constant 0 : index
    %c0_16 = arith.constant 0 : index
    %35 = vector.load %arg6[%c1, %c0_15, %c0_16] : memref<9x8x16xf32, #tpu.memory_space<vmem>>, vector<1x8x16xf32>
    %36 = vector.shape_cast %35 : vector<1x8x16xf32> to vector<8x16xf32>
    %c18_i32 = arith.constant 18 : i32
    %37 = tpu.dynamic_rotate %30 by %c18_i32 dim 1 : vector<16x768xf32>, i32 -> vector<16x768xf32>
    %cst_17 = arith.constant dense<0.000000e+00> : vector<8x768xf32>
    %38 = tpu.matmul %36, %37, %cst_17 {dimension_numbers = #tpu.dot_dimension_numbers<[1], [0], [0], [1], [0, 0, 1, 1], [], []>} : vector<8x16xf32>, vector<16x768xf32>, vector<8x768xf32> -> vector<8x768xf32>
    %39 = arith.addf %34, %38 : vector<8x768xf32>
    %c2 = arith.constant 2 : index
    %c0_18 = arith.constant 0 : index
    %c0_19 = arith.constant 0 : index
    %40 = vector.load %arg6[%c2, %c0_18, %c0_19] : memref<9x8x16xf32, #tpu.memory_space<vmem>>, vector<1x8x16xf32>
    %41 = vector.shape_cast %40 : vector<1x8x16xf32> to vector<8x16xf32>
    %c17_i32 = arith.constant 17 : i32
    %42 = tpu.dynamic_rotate %30 by %c17_i32 dim 1 : vector<16x768xf32>, i32 -> vector<16x768xf32>
    %cst_20 = arith.constant dense<0.000000e+00> : vector<8x768xf32>
    %43 = tpu.matmul %41, %42, %cst_20 {dimension_numbers = #tpu.dot_dimension_numbers<[1], [0], [0], [1], [0, 0, 1, 1], [], []>} : vector<8x16xf32>, vector<16x768xf32>, vector<8x768xf32> -> vector<8x768xf32>
    %44 = arith.addf %39, %43 : vector<8x768xf32>
    %c3 = arith.constant 3 : index
    %c0_21 = arith.constant 0 : index
    %c0_22 = arith.constant 0 : index
    %45 = vector.load %arg6[%c3, %c0_21, %c0_22] : memref<9x8x16xf32, #tpu.memory_space<vmem>>, vector<1x8x16xf32>
    %46 = vector.shape_cast %45 : vector<1x8x16xf32> to vector<8x16xf32>
    %c1_i32 = arith.constant 1 : i32
    %47 = tpu.dynamic_rotate %30 by %c1_i32 dim 1 : vector<16x768xf32>, i32 -> vector<16x768xf32>
    %cst_23 = arith.constant dense<0.000000e+00> : vector<8x768xf32>
    %48 = tpu.matmul %46, %47, %cst_23 {dimension_numbers = #tpu.dot_dimension_numbers<[1], [0], [0], [1], [0, 0, 1, 1], [], []>} : vector<8x16xf32>, vector<16x768xf32>, vector<8x768xf32> -> vector<8x768xf32>
    %49 = arith.addf %44, %48 : vector<8x768xf32>
    %c4 = arith.constant 4 : index
    %c0_24 = arith.constant 0 : index
    %c0_25 = arith.constant 0 : index
    %50 = vector.load %arg6[%c4, %c0_24, %c0_25] : memref<9x8x16xf32, #tpu.memory_space<vmem>>, vector<1x8x16xf32>
    %51 = vector.shape_cast %50 : vector<1x8x16xf32> to vector<8x16xf32>
    %cst_26 = arith.constant dense<0.000000e+00> : vector<8x768xf32>
    %52 = tpu.matmul %51, %30, %cst_26 {dimension_numbers = #tpu.dot_dimension_numbers<[1], [0], [0], [1], [0, 0, 1, 1], [], []>} : vector<8x16xf32>, vector<16x768xf32>, vector<8x768xf32> -> vector<8x768xf32>
    %53 = arith.addf %49, %52 : vector<8x768xf32>
    %c5 = arith.constant 5 : index
    %c0_27 = arith.constant 0 : index
    %c0_28 = arith.constant 0 : index
    %54 = vector.load %arg6[%c5, %c0_27, %c0_28] : memref<9x8x16xf32, #tpu.memory_space<vmem>>, vector<1x8x16xf32>
    %55 = vector.shape_cast %54 : vector<1x8x16xf32> to vector<8x16xf32>
    %c767_i32 = arith.constant 767 : i32
    %56 = tpu.dynamic_rotate %30 by %c767_i32 dim 1 : vector<16x768xf32>, i32 -> vector<16x768xf32>
    %cst_29 = arith.constant dense<0.000000e+00> : vector<8x768xf32>
    %57 = tpu.matmul %55, %56, %cst_29 {dimension_numbers = #tpu.dot_dimension_numbers<[1], [0], [0], [1], [0, 0, 1, 1], [], []>} : vector<8x16xf32>, vector<16x768xf32>, vector<8x768xf32> -> vector<8x768xf32>
    %58 = arith.addf %53, %57 : vector<8x768xf32>
    %c6 = arith.constant 6 : index
    %c0_30 = arith.constant 0 : index
    %c0_31 = arith.constant 0 : index
    %59 = vector.load %arg6[%c6, %c0_30, %c0_31] : memref<9x8x16xf32, #tpu.memory_space<vmem>>, vector<1x8x16xf32>
    %60 = vector.shape_cast %59 : vector<1x8x16xf32> to vector<8x16xf32>
    %c751_i32 = arith.constant 751 : i32
    %61 = tpu.dynamic_rotate %30 by %c751_i32 dim 1 : vector<16x768xf32>, i32 -> vector<16x768xf32>
    %cst_32 = arith.constant dense<0.000000e+00> : vector<8x768xf32>
    %62 = tpu.matmul %60, %61, %cst_32 {dimension_numbers = #tpu.dot_dimension_numbers<[1], [0], [0], [1], [0, 0, 1, 1], [], []>} : vector<8x16xf32>, vector<16x768xf32>, vector<8x768xf32> -> vector<8x768xf32>
    %63 = arith.addf %58, %62 : vector<8x768xf32>
    %c7 = arith.constant 7 : index
    %c0_33 = arith.constant 0 : index
    %c0_34 = arith.constant 0 : index
    %64 = vector.load %arg6[%c7, %c0_33, %c0_34] : memref<9x8x16xf32, #tpu.memory_space<vmem>>, vector<1x8x16xf32>
    %65 = vector.shape_cast %64 : vector<1x8x16xf32> to vector<8x16xf32>
    %c750_i32 = arith.constant 750 : i32
    %66 = tpu.dynamic_rotate %30 by %c750_i32 dim 1 : vector<16x768xf32>, i32 -> vector<16x768xf32>
    %cst_35 = arith.constant dense<0.000000e+00> : vector<8x768xf32>
    %67 = tpu.matmul %65, %66, %cst_35 {dimension_numbers = #tpu.dot_dimension_numbers<[1], [0], [0], [1], [0, 0, 1, 1], [], []>} : vector<8x16xf32>, vector<16x768xf32>, vector<8x768xf32> -> vector<8x768xf32>
    %68 = arith.addf %63, %67 : vector<8x768xf32>
    %c8 = arith.constant 8 : index
    %c0_36 = arith.constant 0 : index
    %c0_37 = arith.constant 0 : index
    %69 = vector.load %arg6[%c8, %c0_36, %c0_37] : memref<9x8x16xf32, #tpu.memory_space<vmem>>, vector<1x8x16xf32>
    %70 = vector.shape_cast %69 : vector<1x8x16xf32> to vector<8x16xf32>
    %c749_i32 = arith.constant 749 : i32
    %71 = tpu.dynamic_rotate %30 by %c749_i32 dim 1 : vector<16x768xf32>, i32 -> vector<16x768xf32>
    %cst_38 = arith.constant dense<0.000000e+00> : vector<8x768xf32>
    %72 = tpu.matmul %70, %71, %cst_38 {dimension_numbers = #tpu.dot_dimension_numbers<[1], [0], [0], [1], [0, 0, 1, 1], [], []>} : vector<8x16xf32>, vector<16x768xf32>, vector<8x768xf32> -> vector<8x768xf32>
    %73 = arith.addf %68, %72 : vector<8x768xf32>
    %c0_39 = arith.constant 0 : index
    %c0_40 = arith.constant 0 : index
    %74 = vector.load %arg7[%c0_39, %c0_40] : memref<8x1xf32, #tpu.memory_space<vmem>>, vector<8x1xf32>
    %75 = vector.broadcast %74 : vector<8x1xf32> to vector<8x768xf32>
    %76 = arith.mulf %73, %75 : vector<8x768xf32>
    %c0_41 = arith.constant 0 : index
    %c0_42 = arith.constant 0 : index
    %77 = vector.load %arg8[%c0_41, %c0_42] : memref<8x1xf32, #tpu.memory_space<vmem>>, vector<8x1xf32>
    %78 = vector.broadcast %77 : vector<8x1xf32> to vector<8x768xf32>
    %79 = arith.addf %76, %78 : vector<8x768xf32>
    %cst_43 = arith.constant 0.000000e+00 : f32
    %80 = vector.broadcast %cst_43 : f32 to vector<8x768xf32>
    %81 = arith.maximumf %79, %80 : vector<8x768xf32>
    %82 = vector.broadcast %1 : vector<1x768xf32> to vector<8x768xf32>
    %83 = arith.mulf %81, %82 : vector<8x768xf32>
    %c0_44 = arith.constant 0 : index
    %c0_45 = arith.constant 0 : index
    %c0_46 = arith.constant 0 : index
    %84 = vector.load %arg9[%c0_44, %c0_45, %c0_46] : memref<9x8x8xf32, #tpu.memory_space<vmem>>, vector<1x8x8xf32>
    %85 = vector.shape_cast %84 : vector<1x8x8xf32> to vector<8x8xf32>
    %c19_i32_47 = arith.constant 19 : i32
    %86 = tpu.dynamic_rotate %83 by %c19_i32_47 dim 1 : vector<8x768xf32>, i32 -> vector<8x768xf32>
    %cst_48 = arith.constant dense<0.000000e+00> : vector<8x768xf32>
    %87 = tpu.matmul %85, %86, %cst_48 {dimension_numbers = #tpu.dot_dimension_numbers<[1], [0], [0], [1], [0, 0, 1, 1], [], []>} : vector<8x8xf32>, vector<8x768xf32>, vector<8x768xf32> -> vector<8x768xf32>
    %c1_49 = arith.constant 1 : index
    %c0_50 = arith.constant 0 : index
    %c0_51 = arith.constant 0 : index
    %88 = vector.load %arg9[%c1_49, %c0_50, %c0_51] : memref<9x8x8xf32, #tpu.memory_space<vmem>>, vector<1x8x8xf32>
    %89 = vector.shape_cast %88 : vector<1x8x8xf32> to vector<8x8xf32>
    %c18_i32_52 = arith.constant 18 : i32
    %90 = tpu.dynamic_rotate %83 by %c18_i32_52 dim 1 : vector<8x768xf32>, i32 -> vector<8x768xf32>
    %cst_53 = arith.constant dense<0.000000e+00> : vector<8x768xf32>
    %91 = tpu.matmul %89, %90, %cst_53 {dimension_numbers = #tpu.dot_dimension_numbers<[1], [0], [0], [1], [0, 0, 1, 1], [], []>} : vector<8x8xf32>, vector<8x768xf32>, vector<8x768xf32> -> vector<8x768xf32>
    %92 = arith.addf %87, %91 : vector<8x768xf32>
    %c2_54 = arith.constant 2 : index
    %c0_55 = arith.constant 0 : index
    %c0_56 = arith.constant 0 : index
    %93 = vector.load %arg9[%c2_54, %c0_55, %c0_56] : memref<9x8x8xf32, #tpu.memory_space<vmem>>, vector<1x8x8xf32>
    %94 = vector.shape_cast %93 : vector<1x8x8xf32> to vector<8x8xf32>
    %c17_i32_57 = arith.constant 17 : i32
    %95 = tpu.dynamic_rotate %83 by %c17_i32_57 dim 1 : vector<8x768xf32>, i32 -> vector<8x768xf32>
    %cst_58 = arith.constant dense<0.000000e+00> : vector<8x768xf32>
    %96 = tpu.matmul %94, %95, %cst_58 {dimension_numbers = #tpu.dot_dimension_numbers<[1], [0], [0], [1], [0, 0, 1, 1], [], []>} : vector<8x8xf32>, vector<8x768xf32>, vector<8x768xf32> -> vector<8x768xf32>
    %97 = arith.addf %92, %96 : vector<8x768xf32>
    %c3_59 = arith.constant 3 : index
    %c0_60 = arith.constant 0 : index
    %c0_61 = arith.constant 0 : index
    %98 = vector.load %arg9[%c3_59, %c0_60, %c0_61] : memref<9x8x8xf32, #tpu.memory_space<vmem>>, vector<1x8x8xf32>
    %99 = vector.shape_cast %98 : vector<1x8x8xf32> to vector<8x8xf32>
    %c1_i32_62 = arith.constant 1 : i32
    %100 = tpu.dynamic_rotate %83 by %c1_i32_62 dim 1 : vector<8x768xf32>, i32 -> vector<8x768xf32>
    %cst_63 = arith.constant dense<0.000000e+00> : vector<8x768xf32>
    %101 = tpu.matmul %99, %100, %cst_63 {dimension_numbers = #tpu.dot_dimension_numbers<[1], [0], [0], [1], [0, 0, 1, 1], [], []>} : vector<8x8xf32>, vector<8x768xf32>, vector<8x768xf32> -> vector<8x768xf32>
    %102 = arith.addf %97, %101 : vector<8x768xf32>
    %c4_64 = arith.constant 4 : index
    %c0_65 = arith.constant 0 : index
    %c0_66 = arith.constant 0 : index
    %103 = vector.load %arg9[%c4_64, %c0_65, %c0_66] : memref<9x8x8xf32, #tpu.memory_space<vmem>>, vector<1x8x8xf32>
    %104 = vector.shape_cast %103 : vector<1x8x8xf32> to vector<8x8xf32>
    %cst_67 = arith.constant dense<0.000000e+00> : vector<8x768xf32>
    %105 = tpu.matmul %104, %83, %cst_67 {dimension_numbers = #tpu.dot_dimension_numbers<[1], [0], [0], [1], [0, 0, 1, 1], [], []>} : vector<8x8xf32>, vector<8x768xf32>, vector<8x768xf32> -> vector<8x768xf32>
    %106 = arith.addf %102, %105 : vector<8x768xf32>
    %c5_68 = arith.constant 5 : index
    %c0_69 = arith.constant 0 : index
    %c0_70 = arith.constant 0 : index
    %107 = vector.load %arg9[%c5_68, %c0_69, %c0_70] : memref<9x8x8xf32, #tpu.memory_space<vmem>>, vector<1x8x8xf32>
    %108 = vector.shape_cast %107 : vector<1x8x8xf32> to vector<8x8xf32>
    %c767_i32_71 = arith.constant 767 : i32
    %109 = tpu.dynamic_rotate %83 by %c767_i32_71 dim 1 : vector<8x768xf32>, i32 -> vector<8x768xf32>
    %cst_72 = arith.constant dense<0.000000e+00> : vector<8x768xf32>
    %110 = tpu.matmul %108, %109, %cst_72 {dimension_numbers = #tpu.dot_dimension_numbers<[1], [0], [0], [1], [0, 0, 1, 1], [], []>} : vector<8x8xf32>, vector<8x768xf32>, vector<8x768xf32> -> vector<8x768xf32>
    %111 = arith.addf %106, %110 : vector<8x768xf32>
    %c6_73 = arith.constant 6 : index
    %c0_74 = arith.constant 0 : index
    %c0_75 = arith.constant 0 : index
    %112 = vector.load %arg9[%c6_73, %c0_74, %c0_75] : memref<9x8x8xf32, #tpu.memory_space<vmem>>, vector<1x8x8xf32>
    %113 = vector.shape_cast %112 : vector<1x8x8xf32> to vector<8x8xf32>
    %c751_i32_76 = arith.constant 751 : i32
    %114 = tpu.dynamic_rotate %83 by %c751_i32_76 dim 1 : vector<8x768xf32>, i32 -> vector<8x768xf32>
    %cst_77 = arith.constant dense<0.000000e+00> : vector<8x768xf32>
    %115 = tpu.matmul %113, %114, %cst_77 {dimension_numbers = #tpu.dot_dimension_numbers<[1], [0], [0], [1], [0, 0, 1, 1], [], []>} : vector<8x8xf32>, vector<8x768xf32>, vector<8x768xf32> -> vector<8x768xf32>
    %116 = arith.addf %111, %115 : vector<8x768xf32>
    %c7_78 = arith.constant 7 : index
    %c0_79 = arith.constant 0 : index
    %c0_80 = arith.constant 0 : index
    %117 = vector.load %arg9[%c7_78, %c0_79, %c0_80] : memref<9x8x8xf32, #tpu.memory_space<vmem>>, vector<1x8x8xf32>
    %118 = vector.shape_cast %117 : vector<1x8x8xf32> to vector<8x8xf32>
    %c750_i32_81 = arith.constant 750 : i32
    %119 = tpu.dynamic_rotate %83 by %c750_i32_81 dim 1 : vector<8x768xf32>, i32 -> vector<8x768xf32>
    %cst_82 = arith.constant dense<0.000000e+00> : vector<8x768xf32>
    %120 = tpu.matmul %118, %119, %cst_82 {dimension_numbers = #tpu.dot_dimension_numbers<[1], [0], [0], [1], [0, 0, 1, 1], [], []>} : vector<8x8xf32>, vector<8x768xf32>, vector<8x768xf32> -> vector<8x768xf32>
    %121 = arith.addf %116, %120 : vector<8x768xf32>
    %c8_83 = arith.constant 8 : index
    %c0_84 = arith.constant 0 : index
    %c0_85 = arith.constant 0 : index
    %122 = vector.load %arg9[%c8_83, %c0_84, %c0_85] : memref<9x8x8xf32, #tpu.memory_space<vmem>>, vector<1x8x8xf32>
    %123 = vector.shape_cast %122 : vector<1x8x8xf32> to vector<8x8xf32>
    %c749_i32_86 = arith.constant 749 : i32
    %124 = tpu.dynamic_rotate %83 by %c749_i32_86 dim 1 : vector<8x768xf32>, i32 -> vector<8x768xf32>
    %cst_87 = arith.constant dense<0.000000e+00> : vector<8x768xf32>
    %125 = tpu.matmul %123, %124, %cst_87 {dimension_numbers = #tpu.dot_dimension_numbers<[1], [0], [0], [1], [0, 0, 1, 1], [], []>} : vector<8x8xf32>, vector<8x768xf32>, vector<8x768xf32> -> vector<8x768xf32>
    %126 = arith.addf %121, %125 : vector<8x768xf32>
    %c0_88 = arith.constant 0 : index
    %c0_89 = arith.constant 0 : index
    %127 = vector.load %arg10[%c0_88, %c0_89] : memref<8x1xf32, #tpu.memory_space<vmem>>, vector<8x1xf32>
    %128 = vector.broadcast %127 : vector<8x1xf32> to vector<8x768xf32>
    %129 = arith.mulf %126, %128 : vector<8x768xf32>
    %c0_90 = arith.constant 0 : index
    %c0_91 = arith.constant 0 : index
    %130 = vector.load %arg11[%c0_90, %c0_91] : memref<8x1xf32, #tpu.memory_space<vmem>>, vector<8x1xf32>
    %131 = vector.broadcast %130 : vector<8x1xf32> to vector<8x768xf32>
    %132 = arith.addf %129, %131 : vector<8x768xf32>
    %cst_92 = arith.constant 0.000000e+00 : f32
    %133 = vector.broadcast %cst_92 : f32 to vector<8x768xf32>
    %134 = arith.maximumf %132, %133 : vector<8x768xf32>
    %c0_93 = arith.constant 0 : index
    %c0_94 = arith.constant 0 : index
    %135 = vector.load %arg12[%c0_93, %c0_94] : memref<8x768xf32, #tpu.memory_space<vmem>>, vector<8x768xf32>
    tpu.vector_store %arg12[%c0_93, %c0_94], %134 {strides = array<i32>} : memref<8x768xf32, #tpu.memory_space<vmem>>, vector<8x768xf32>,
    return
  }
  func.func @transform_0(%arg0: i32) -> (i32, i32) {
    %c0_i32 = arith.constant 0 : i32
    %c0_i32_0 = arith.constant 0 : i32
    return %c0_i32, %arg0 : i32, i32
  }
  func.func @transform_1(%arg0: i32) -> (i32, i32) {
    %c0_i32 = arith.constant 0 : i32
    %c0_i32_0 = arith.constant 0 : i32
    return %c0_i32, %arg0 : i32, i32
  }
  func.func @transform_2(%arg0: i32) -> (i32, i32) {
    %c0_i32 = arith.constant 0 : i32
    %c0_i32_0 = arith.constant 0 : i32
    %c0_i32_1 = arith.constant 0 : i32
    return %c0_i32, %c0_i32_0 : i32, i32
  }
  func.func @transform_3(%arg0: i32) -> (i32, i32) {
    %c0_i32 = arith.constant 0 : i32
    %c0_i32_0 = arith.constant 0 : i32
    %c0_i32_1 = arith.constant 0 : i32
    return %c0_i32, %c0_i32_0 : i32, i32
  }
  func.func @transform_4(%arg0: i32) -> (i32, i32) {
    %c0_i32 = arith.constant 0 : i32
    %c0_i32_0 = arith.constant 0 : i32
    %c0_i32_1 = arith.constant 0 : i32
    return %c0_i32, %c0_i32_0 : i32, i32
  }
  func.func @transform_5(%arg0: i32) -> (i32, i32, i32) {
    %c0_i32 = arith.constant 0 : i32
    %c0_i32_0 = arith.constant 0 : i32
    %c0_i32_1 = arith.constant 0 : i32
    %c0_i32_2 = arith.constant 0 : i32
    return %c0_i32, %c0_i32_0, %c0_i32_1 : i32, i32, i32
  }
  func.func @transform_6(%arg0: i32) -> (i32, i32) {
    %c0_i32 = arith.constant 0 : i32
    %c0_i32_0 = arith.constant 0 : i32
    %c0_i32_1 = arith.constant 0 : i32
    return %c0_i32, %c0_i32_0 : i32, i32
  }
  func.func @transform_7(%arg0: i32) -> (i32, i32) {
    %c0_i32 = arith.constant 0 : i32
    %c0_i32_0 = arith.constant 0 : i32
    %c0_i32_1 = arith.constant 0 : i32
    return %c0_i32, %c0_i32_0 : i32, i32
  }
  func.func @transform_8(%arg0: i32) -> (i32, i32, i32) {
    %c0_i32 = arith.constant 0 : i32
    %c0_i32_0 = arith.constant 0 : i32
    %c0_i32_1 = arith.constant 0 : i32
    %c0_i32_2 = arith.constant 0 : i32
    return %c0_i32, %c0_i32_0, %c0_i32_1 : i32, i32, i32
  }
  func.func @transform_9(%arg0: i32) -> (i32, i32) {
    %c0_i32 = arith.constant 0 : i32
    %c0_i32_0 = arith.constant 0 : i32
    %c0_i32_1 = arith.constant 0 : i32
    return %c0_i32, %c0_i32_0 : i32, i32
  }
  func.func @transform_10(%arg0: i32) -> (i32, i32) {
    %c0_i32 = arith.constant 0 : i32
    %c0_i32_0 = arith.constant 0 : i32
    %c0_i32_1 = arith.constant 0 : i32
    return %c0_i32, %c0_i32_0 : i32, i32
  }
  func.func @transform_11(%arg0: i32) -> (i32, i32) {
    %c0_i32 = arith.constant 0 : i32
    %c0_i32_0 = arith.constant 0 : i32
    return %c0_i32, %arg0 : i32, i32
  }
}

</mosaic_0001>

<llo_original>
// kernel: tpu_custom_call.1
$region0: #{tpu_custom_call.1}
  #allocation0 [shape = 'u32[]', space=smem, size = 0x4, offset = 0x4, fixed_abs, tag = 'smem constant byte address 0x4 - core index']
  #allocation1 [shape = 'u32[144,128]{1,0:T(1,128)}', space=vmem, size = 0x12000, scoped, tag = 'internal scratch']
  %s0 = inlined_call_operand.vmem [shape: f32[16,768], index: 0, kind: input, shape index: {}]
  %s1 = inlined_call_operand.hbm [shape: f32[8,768], index: 1, kind: input, shape index: {}]
  %s2 = inlined_call_operand.vmem [shape: f32[3,768], index: 2, kind: input, shape index: {}]
  %s3 = inlined_call_operand.vmem [shape: f32[32,16], index: 3, kind: input, shape index: {}]
  %s4 = inlined_call_operand.vmem [shape: f32[8,1], index: 4, kind: input, shape index: {}]
  %s5 = inlined_call_operand.vmem [shape: f32[9,8,16], index: 5, kind: input, shape index: {}]
  %s6 = inlined_call_operand.vmem [shape: f32[8,1], index: 6, kind: input, shape index: {}]
  %s7 = inlined_call_operand.vmem [shape: f32[8,1], index: 7, kind: input, shape index: {}]
  %s8 = inlined_call_operand.vmem [shape: f32[9,8,8], index: 8, kind: input, shape index: {}]
  %s9 = inlined_call_operand.vmem [shape: f32[8,1], index: 9, kind: input, shape index: {}]
  %s10 = inlined_call_operand.vmem [shape: f32[8,1], index: 10, kind: input, shape index: {}]
  %s11 = inlined_call_operand.hbm [shape: f32[8,768], index: 11, kind: output, shape index: {}]
  %s12 = sld [smem:[#allocation0]]
  $region58: #{tpu_custom_call.1} parent=0
    _
  %s14 = ssub.s32 1, %s12
  %s15 = scalar_select 0, %s14, %s12
  $region1: #{tpu_custom_call.1} parent=0
    #allocation2 [shape = 'u8[24576]{0}', space=vmem, size = 0x6000, scoped, tag = 'input window, operand 1, single buffered']
    #allocation3 [shape = 's32[1]{0}', space=sflag, size = 0x4, scoped, tag = 'scoped memory for tpu_custom_call.1']
    #allocation4 [shape = 's32[1]{0}', space=sflag, size = 0x4, scoped, tag = 'scoped memory for tpu_custom_call.1']
    #allocation5 [shape = 'u8[24576]{0}', space=vmem, size = 0x6000, scoped, tag = 'output window, operand 0, single buffered']
    %16 = vsyncpa [#allocation3], 0
    %17 = vsyncpa [#allocation4], 0
    // Predicated region
    $region2: #{tpu_custom_call.1} parent=1 // pred_check
      _
    $region3: #{tpu_custom_call.1} parent=1 // pred_check_branch
      %19 = sbr.rel (0) target = $region5
    $region4: #{tpu_custom_call.1} parent=1 // pred_region
      _
    $region5: #{tpu_custom_call.1} parent=1 // pred_fallthru
      _
    // Predicated region
    $region6: #{tpu_custom_call.1} parent=1 // pred_check
      _
    $region7: #{tpu_custom_call.1} parent=1 // pred_check_branch
      %21 = sbr.rel (0) target = $region9
    $region8: #{tpu_custom_call.1} parent=1 // pred_region
      %s23 = ssub.s32 768, 768
      %24 = vsyncadd [#allocation3], %s23
      %s26 = sshll.u32 [#allocation2], 4
      %s27 = int_to_ptr.vmem [resolvable:$true] %s26
      %29 = dma.hbm_to_vmem [thread:$0]  %s1, 768, %s27, [#allocation3]
    $region9: #{tpu_custom_call.1} parent=1 // pred_fallthru
      _
    // Predicated region
    $region10: #{tpu_custom_call.1} parent=1 // pred_check
      _
    $region11: #{tpu_custom_call.1} parent=1 // pred_check_branch
      %31 = sbr.rel (0) target = $region13
    $region12: #{tpu_custom_call.1} parent=1 // pred_region
      _
    $region13: #{tpu_custom_call.1} parent=1 // pred_fallthru
      _
    // Predicated region
    $region14: #{tpu_custom_call.1} parent=1 // pred_check
      _
    $region15: #{tpu_custom_call.1} parent=1 // pred_check_branch
      %33 = sbr.rel (0) target = $region17
    $region16: #{tpu_custom_call.1} parent=1 // pred_region
      _
    $region17: #{tpu_custom_call.1} parent=1 // pred_fallthru
      _
    // Predicated region
    $region18: #{tpu_custom_call.1} parent=1 // pred_check
      _
    $region19: #{tpu_custom_call.1} parent=1 // pred_check_branch
      %35 = sbr.rel (0) target = $region21
    $region20: #{tpu_custom_call.1} parent=1 // pred_region
      _
    $region21: #{tpu_custom_call.1} parent=1 // pred_fallthru
      _
    // Predicated region
    $region22: #{tpu_custom_call.1} parent=1 // pred_check
      _
    $region23: #{tpu_custom_call.1} parent=1 // pred_check_branch
      %37 = sbr.rel (0) target = $region25
    $region24: #{tpu_custom_call.1} parent=1 // pred_region
      _
    $region25: #{tpu_custom_call.1} parent=1 // pred_fallthru
      _
    // Predicated region
    $region26: #{tpu_custom_call.1} parent=1 // pred_check
      _
    $region27: #{tpu_custom_call.1} parent=1 // pred_check_branch
      %39 = sbr.rel (0) target = $region29
    $region28: #{tpu_custom_call.1} parent=1 // pred_region
      _
    $region29: #{tpu_custom_call.1} parent=1 // pred_fallthru
      _
    // Predicated region
    $region30: #{tpu_custom_call.1} parent=1 // pred_check
      _
    $region31: #{tpu_custom_call.1} parent=1 // pred_check_branch
      %41 = sbr.rel (0) target = $region33
    $region32: #{tpu_custom_call.1} parent=1 // pred_region
      _
    $region33: #{tpu_custom_call.1} parent=1 // pred_fallthru
      _
    // Predicated region
    $region34: #{tpu_custom_call.1} parent=1 // pred_check
      _
    $region35: #{tpu_custom_call.1} parent=1 // pred_check_branch
      %43 = sbr.rel (0) target = $region37
    $region36: #{tpu_custom_call.1} parent=1 // pred_region
      _
    $region37: #{tpu_custom_call.1} parent=1 // pred_fallthru
      _
    // Predicated region
    $region38: #{tpu_custom_call.1} parent=1 // pred_check
      _
    $region39: #{tpu_custom_call.1} parent=1 // pred_check_branch
      %45 = sbr.rel (0) target = $region41
    $region40: #{tpu_custom_call.1} parent=1 // pred_region
      _
    $region41: #{tpu_custom_call.1} parent=1 // pred_fallthru
      _
    // Predicated region
    $region42: #{tpu_custom_call.1} parent=1 // pred_check
      _
    $region43: #{tpu_custom_call.1} parent=1 // pred_check_branch
      %47 = sbr.rel (0) target = $region45
    $region44: #{tpu_custom_call.1} parent=1 // pred_region
      _
    $region45: #{tpu_custom_call.1} parent=1 // pred_fallthru
      _
    // Predicated region
    $region46: #{tpu_custom_call.1} parent=1 // pred_check
      _
    $region47: #{tpu_custom_call.1} parent=1 // pred_check_branch
      %49 = sbr.rel (0) target = $region49
    $region48: #{tpu_custom_call.1} parent=1 // pred_region
      %50 = dma.done [#allocation3], 768
    $region49: #{tpu_custom_call.1} parent=1 // pred_fallthru
      _
    %v51 = vld [vmem:[%s2] sm:$0x77]
    %v52 = vld [vmem:[%s2 + $0x8] sm:$0x77]
    %v53 = vld [vmem:[%s2 + $0x10] sm:$0x77]
    %vm54 = vcmp.ne.f32.partialorder %v51, 0.0
    %vm55 = vcmp.ne.f32.partialorder %v52, 0.0
    %vm56 = vcmp.ne.f32.partialorder %v53, 0.0
    %v57 = vld [vmem:[%s3] sm:$0xff]
    %v58 = vld [vmem:[%s3 + $0x8] sm:$0xff]
    %v59 = vld [vmem:[%s3 + $0x10] sm:$0xff]
    %v60 = vld [vmem:[%s3 + $0x18] sm:$0xff]
    %v61 = vld [vmem:[%s0] sm:$0xff]
    %v62 = vld [vmem:[%s0 + $0x8] sm:$0xff]
    %v63 = vld [vmem:[%s0 + $0x10] sm:$0xff]
    %v64 = vld [vmem:[%s0 + $0x18] sm:$0xff]
    %v65 = vld [vmem:[%s0 + $0x20] sm:$0xff]
    %v66 = vld [vmem:[%s0 + $0x28] sm:$0xff]
    %v67 = vld [vmem:[%s0 + $0x30] sm:$0xff]
    %v68 = vld [vmem:[%s0 + $0x38] sm:$0xff]
    %v69 = vld [vmem:[%s0 + $0x40] sm:$0xff]
    %v70 = vld [vmem:[%s0 + $0x48] sm:$0xff]
    %v71 = vld [vmem:[%s0 + $0x50] sm:$0xff]
    %v72 = vld [vmem:[%s0 + $0x58] sm:$0xff]
    %vm73 = vcmask 130048
    %v75 = vsel %vm73, %v57, 0
    %v78 = vsel %vm73, %v58, 0
    %v81 = vsel %vm73, %v59, 0
    %v84 = vsel %vm73, %v60, 0
    %86 = vmatprep.subr.mxu0 %v62
    %87 = vmatpush1.msra.mxu0 %v61
    %88 = vmatprep.subr.mxu0 %v68
    %89 = vmatpush1.msra.mxu0 %v67
    %90 = vmatprep.subr.mxu0 0.0
    %91 = vmatpush1.msra.mxu0 0.0
    %92 = vmatprep.subr.mxu0 0.0
    %93 = vmatpush1.msra.mxu0 0.0
    %94 = vmatprep.subr.mxu0 0.0
    %95 = vmatpush1.msra.mxu0 0.0
    %96 = vmatprep.subr.mxu0 0.0
    %97 = vmatpush1.msra.mxu0 0.0
    %98 = vmatprep.subr.mxu0 0.0
    %99 = vmatpush1.msra.mxu0 0.0
    %100 = vmatprep.subr.mxu0 0.0
    %101 = vmatpush1.msra.mxu0 0.0
    %102 = vmatprep.subr.mxu0 0.0
    %103 = vmatpush1.msra.mxu0 0.0
    %104 = vmatprep.subr.mxu0 0.0
    %105 = vmatpush1.msra.mxu0 0.0
    %106 = vmatprep.subr.mxu0 0.0
    %107 = vmatpush1.msra.mxu0 0.0
    %108 = vmatprep.subr.mxu0 0.0
    %109 = vmatpush1.msra.mxu0 0.0
    %110 = vmatprep.subr.mxu0 0.0
    %111 = vmatpush1.msra.mxu0 0.0
    %112 = vmatprep.subr.mxu0 0.0
    %113 = vmatpush1.msra.mxu0 0.0
    %114 = vmatprep.subr.mxu0 0.0
    %115 = vmatpush1.msra.mxu0 0.0
    %116 = vmatprep.subr.mxu0 0.0
    %117 = vmatpush1.msra.mxu0 0.0
    %118 = vmatprep.subr.mxu0 0.0
    %119 = vmatpush1.msra.mxu0 0.0
    %120 = vmatprep.subr.mxu0 0.0
    %121 = vmatpush1.msra.mxu0 0.0
    %122 = vmatprep.subr.mxu0 0.0
    %123 = vmatpush1.msra.mxu0 0.0
    %124 = vmatprep.subr.mxu0 0.0
    %125 = vmatpush1.msra.mxu0 0.0
    %126 = vmatprep.subr.mxu0 0.0
    %127 = vmatpush1.msra.mxu0 0.0
    %128 = vmatprep.subr.mxu0 0.0
    %129 = vmatpush1.msra.mxu0 0.0
    %130 = vmatprep.subr.mxu0 0.0
    %131 = vmatpush1.msra.mxu0 0.0
    %132 = vmatprep.subr.mxu0 0.0
    %133 = vmatpush1.msra.mxu0 0.0
    %134 = vmatprep.subr.mxu0 0.0
    %135 = vmatpush1.msra.mxu0 0.0
    %136 = vmatprep.subr.mxu0 0.0
    %137 = vmatpush1.msra.mxu0 0.0
    %138 = vmatprep.subr.mxu0 0.0
    %139 = vmatpush1.msra.mxu0 0.0
    %140 = vmatprep.subr.mxu0 0.0
    %141 = vmatpush1.msra.mxu0 0.0
    %142 = vmatprep.subr.mxu0 0.0
    %143 = vmatpush1.msra.mxu0 0.0
    %144 = vmatprep.subr.mxu0 0.0
    %145 = vmatpush1.msra.mxu0 0.0
    %146 = vmatprep.subr.mxu0 0.0
    %147 = vmatpush1.msra.mxu0 0.0
    %148 = vmatprep.subr.mxu0 0.0
    %149 = vmatpush1.msra.mxu0 0.0
    %150 = vmatprep.mubr.f32.mxu0 0.0
    %151 = vmatmul.mubr.f32.gmra.mrb[0].mxu0 %v75
    %v152 = vpop.f32.mrb[0].mxu0
    %v153 = vadd.f32 0.0, %v152
    %v154 = vpop.f32.mrb[0].mxu0
    %v155 = vadd.f32 0.0, %v154
    %156 = vmatprep.mubr.f32.mxu0 0.0
    %157 = vmatmul.mubr.f32.gmra.mrb[0].mxu0 %v78
    %v158 = vpop.f32.mrb[0].mxu0
    %v159 = vadd.f32 0.0, %v158
    %v160 = vpop.f32.mrb[0].mxu0
    %v161 = vadd.f32 0.0, %v160
    %162 = vmatprep.mubr.f32.mxu0 0.0
    %163 = vmatmul.mubr.f32.gmra.mrb[0].mxu0 %v81
    %v164 = vpop.f32.mrb[0].mxu0
    %v165 = vadd.f32 0.0, %v164
    %v166 = vpop.f32.mrb[0].mxu0
    %v167 = vadd.f32 0.0, %v166
    %168 = vmatprep.mubr.f32.mxu0 0.0
    %169 = vmatmul.mubr.f32.gmra.mrb[0].mxu0 %v84
    %v170 = vpop.f32.mrb[0].mxu0
    %v171 = vadd.f32 0.0, %v170
    %v172 = vpop.f32.mrb[0].mxu0
    %v173 = vadd.f32 0.0, %v172
    %174 = vdwg.mxu0
    %175 = vmatprep.subr.mxu0 %v64
    %176 = vmatpush1.msra.mxu0 %v63
    %177 = vmatprep.subr.mxu0 %v70
    %178 = vmatpush1.msra.mxu0 %v69
    %179 = vmatprep.subr.mxu0 0.0
    %180 = vmatpush1.msra.mxu0 0.0
    %181 = vmatprep.subr.mxu0 0.0
    %182 = vmatpush1.msra.mxu0 0.0
    %183 = vmatprep.subr.mxu0 0.0
    %184 = vmatpush1.msra.mxu0 0.0
    %185 = vmatprep.subr.mxu0 0.0
    %186 = vmatpush1.msra.mxu0 0.0
    %187 = vmatprep.subr.mxu0 0.0
    %188 = vmatpush1.msra.mxu0 0.0
    %189 = vmatprep.subr.mxu0 0.0
    %190 = vmatpush1.msra.mxu0 0.0
    %191 = vmatprep.subr.mxu0 0.0
    %192 = vmatpush1.msra.mxu0 0.0
    %193 = vmatprep.subr.mxu0 0.0
    %194 = vmatpush1.msra.mxu0 0.0
    %195 = vmatprep.subr.mxu0 0.0
    %196 = vmatpush1.msra.mxu0 0.0
    %197 = vmatprep.subr.mxu0 0.0
    %198 = vmatpush1.msra.mxu0 0.0
    %199 = vmatprep.subr.mxu0 0.0
    %200 = vmatpush1.msra.mxu0 0.0
    %201 = vmatprep.subr.mxu0 0.0
    %202 = vmatpush1.msra.mxu0 0.0
    %203 = vmatprep.subr.mxu0 0.0
    %204 = vmatpush1.msra.mxu0 0.0
    %205 = vmatprep.subr.mxu0 0.0
    %206 = vmatpush1.msra.mxu0 0.0
    %207 = vmatprep.subr.mxu0 0.0
    %208 = vmatpush1.msra.mxu0 0.0
    %209 = vmatprep.subr.mxu0 0.0
    %210 = vmatpush1.msra.mxu0 0.0
    %211 = vmatprep.subr.mxu0 0.0
    %212 = vmatpush1.msra.mxu0 0.0
    %213 = vmatprep.subr.mxu0 0.0
    %214 = vmatpush1.msra.mxu0 0.0
    %215 = vmatprep.subr.mxu0 0.0
    %216 = vmatpush1.msra.mxu0 0.0
    %217 = vmatprep.subr.mxu0 0.0
    %218 = vmatpush1.msra.mxu0 0.0
    %219 = vmatprep.subr.mxu0 0.0
    %220 = vmatpush1.msra.mxu0 0.0
    %221 = vmatprep.subr.mxu0 0.0
    %222 = vmatpush1.msra.mxu0 0.0
    %223 = vmatprep.subr.mxu0 0.0
    %224 = vmatpush1.msra.mxu0 0.0
    %225 = vmatprep.subr.mxu0 0.0
    %226 = vmatpush1.msra.mxu0 0.0
    %227 = vmatprep.subr.mxu0 0.0
    %228 = vmatpush1.msra.mxu0 0.0
    %229 = vmatprep.subr.mxu0 0.0
    %230 = vmatpush1.msra.mxu0 0.0
    %231 = vmatprep.subr.mxu0 0.0
    %232 = vmatpush1.msra.mxu0 0.0
    %233 = vmatprep.subr.mxu0 0.0
    %234 = vmatpush1.msra.mxu0 0.0
    %235 = vmatprep.subr.mxu0 0.0
    %236 = vmatpush1.msra.mxu0 0.0
    %237 = vmatprep.subr.mxu0 0.0
    %238 = vmatpush1.msra.mxu0 0.0
    %239 = vmatprep.mubr.f32.mxu0 0.0
    %240 = vmatmul.mubr.f32.gmra.mrb[0].mxu0 %v75
    %v241 = vpop.f32.mrb[0].mxu0
    %v242 = vadd.f32 0.0, %v241
    %v243 = vpop.f32.mrb[0].mxu0
    %v244 = vadd.f32 0.0, %v243
    %245 = vmatprep.mubr.f32.mxu0 0.0
    %246 = vmatmul.mubr.f32.gmra.mrb[0].mxu0 %v78
    %v247 = vpop.f32.mrb[0].mxu0
    %v248 = vadd.f32 0.0, %v247
    %v249 = vpop.f32.mrb[0].mxu0
    %v250 = vadd.f32 0.0, %v249
    %251 = vmatprep.mubr.f32.mxu0 0.0
    %252 = vmatmul.mubr.f32.gmra.mrb[0].mxu0 %v81
    %v253 = vpop.f32.mrb[0].mxu0
    %v254 = vadd.f32 0.0, %v253
    %v255 = vpop.f32.mrb[0].mxu0
    %v256 = vadd.f32 0.0, %v255
    %257 = vmatprep.mubr.f32.mxu0 0.0
    %258 = vmatmul.mubr.f32.gmra.mrb[0].mxu0 %v84
    %v259 = vpop.f32.mrb[0].mxu0
    %v260 = vadd.f32 0.0, %v259
    %v261 = vpop.f32.mrb[0].mxu0
    %v262 = vadd.f32 0.0, %v261
    %263 = vdwg.mxu0
    %264 = vmatprep.subr.mxu0 %v66
    %265 = vmatpush1.msra.mxu0 %v65
    %266 = vmatprep.subr.mxu0 %v72
    %267 = vmatpush1.msra.mxu0 %v71
    %268 = vmatprep.subr.mxu0 0.0
    %269 = vmatpush1.msra.mxu0 0.0
    %270 = vmatprep.subr.mxu0 0.0
    %271 = vmatpush1.msra.mxu0 0.0
    %272 = vmatprep.subr.mxu0 0.0
    %273 = vmatpush1.msra.mxu0 0.0
    %274 = vmatprep.subr.mxu0 0.0
    %275 = vmatpush1.msra.mxu0 0.0
    %276 = vmatprep.subr.mxu0 0.0
    %277 = vmatpush1.msra.mxu0 0.0
    %278 = vmatprep.subr.mxu0 0.0
    %279 = vmatpush1.msra.mxu0 0.0
    %280 = vmatprep.subr.mxu0 0.0
    %281 = vmatpush1.msra.mxu0 0.0
    %282 = vmatprep.subr.mxu0 0.0
    %283 = vmatpush1.msra.mxu0 0.0
    %284 = vmatprep.subr.mxu0 0.0
    %285 = vmatpush1.msra.mxu0 0.0
    %286 = vmatprep.subr.mxu0 0.0
    %287 = vmatpush1.msra.mxu0 0.0
    %288 = vmatprep.subr.mxu0 0.0
    %289 = vmatpush1.msra.mxu0 0.0
    %290 = vmatprep.subr.mxu0 0.0
    %291 = vmatpush1.msra.mxu0 0.0
    %292 = vmatprep.subr.mxu0 0.0
    %293 = vmatpush1.msra.mxu0 0.0
    %294 = vmatprep.subr.mxu0 0.0
    %295 = vmatpush1.msra.mxu0 0.0
    %296 = vmatprep.subr.mxu0 0.0
    %297 = vmatpush1.msra.mxu0 0.0
    %298 = vmatprep.subr.mxu0 0.0
    %299 = vmatpush1.msra.mxu0 0.0
    %300 = vmatprep.subr.mxu0 0.0
    %301 = vmatpush1.msra.mxu0 0.0
    %302 = vmatprep.subr.mxu0 0.0
    %303 = vmatpush1.msra.mxu0 0.0
    %304 = vmatprep.subr.mxu0 0.0
    %305 = vmatpush1.msra.mxu0 0.0
    %306 = vmatprep.subr.mxu0 0.0
    %307 = vmatpush1.msra.mxu0 0.0
    %308 = vmatprep.subr.mxu0 0.0
    %309 = vmatpush1.msra.mxu0 0.0
    %310 = vmatprep.subr.mxu0 0.0
    %311 = vmatpush1.msra.mxu0 0.0
    %312 = vmatprep.subr.mxu0 0.0
    %313 = vmatpush1.msra.mxu0 0.0
    %314 = vmatprep.subr.mxu0 0.0
    %315 = vmatpush1.msra.mxu0 0.0
    %316 = vmatprep.subr.mxu0 0.0
    %317 = vmatpush1.msra.mxu0 0.0
    %318 = vmatprep.subr.mxu0 0.0
    %319 = vmatpush1.msra.mxu0 0.0
    %320 = vmatprep.subr.mxu0 0.0
    %321 = vmatpush1.msra.mxu0 0.0
    %322 = vmatprep.subr.mxu0 0.0
    %323 = vmatpush1.msra.mxu0 0.0
    %324 = vmatprep.subr.mxu0 0.0
    %325 = vmatpush1.msra.mxu0 0.0
    %326 = vmatprep.subr.mxu0 0.0
    %327 = vmatpush1.msra.mxu0 0.0
    %328 = vmatprep.mubr.f32.mxu0 0.0
    %329 = vmatmul.mubr.f32.gmra.mrb[0].mxu0 %v75
    %v330 = vpop.f32.mrb[0].mxu0
    %v331 = vadd.f32 0.0, %v330
    %v332 = vpop.f32.mrb[0].mxu0
    %v333 = vadd.f32 0.0, %v332
    %334 = vmatprep.mubr.f32.mxu0 0.0
    %335 = vmatmul.mubr.f32.gmra.mrb[0].mxu0 %v78
    %v336 = vpop.f32.mrb[0].mxu0
    %v337 = vadd.f32 0.0, %v336
    %v338 = vpop.f32.mrb[0].mxu0
    %v339 = vadd.f32 0.0, %v338
    %340 = vmatprep.mubr.f32.mxu0 0.0
    %341 = vmatmul.mubr.f32.gmra.mrb[0].mxu0 %v81
    %v342 = vpop.f32.mrb[0].mxu0
    %v343 = vadd.f32 0.0, %v342
    %v344 = vpop.f32.mrb[0].mxu0
    %v345 = vadd.f32 0.0, %v344
    %346 = vmatprep.mubr.f32.mxu0 0.0
    %347 = vmatmul.mubr.f32.gmra.mrb[0].mxu0 %v84
    %v348 = vpop.f32.mrb[0].mxu0
    %v349 = vadd.f32 0.0, %v348
    %v350 = vpop.f32.mrb[0].mxu0
    %v351 = vadd.f32 0.0, %v350
    %352 = vdwg.mxu0
    %v353 = vsel %vm54, 1, 0
    %v354 = vsel %vm55, 1, 0
    %v355 = vsel %vm56, 1, 0
    %v356 = vlaneseq
    %v357 = vshrl.u32 %v356, 7
    %v358 = vsub.s32 2, %v357
    %v359 = vrot.slane %v353, %v358
    %v360 = vlaneseq
    %v361 = vshrl.u32 %v360, 7
    %v362 = vsub.s32 6, %v361
    %v363 = vrot.slane %v353, %v362
    %v364 = vlaneseq
    %v365 = vshrl.u32 %v364, 7
    %v366 = vsub.s32 2, %v365
    %v367 = vrot.slane %v354, %v366
    %v368 = vlaneseq
    %v369 = vshrl.u32 %v368, 7
    %v370 = vsub.s32 6, %v369
    %v371 = vrot.slane %v354, %v370
    %v372 = vlaneseq
    %v373 = vshrl.u32 %v372, 7
    %v374 = vsub.s32 2, %v373
    %v375 = vrot.slane %v355, %v374
    %v376 = vlaneseq
    %v377 = vshrl.u32 %v376, 7
    %v378 = vsub.s32 6, %v377
    %v379 = vrot.slane %v355, %v378
    %v380 = vlaneseq
    %v381 = vshrl.u32 %v380, 7
    %v382 = vsub.s32 2, %v381
    %v383 = vrot.slane %v359, %v382
    %v384 = vlaneseq
    %v385 = vshrl.u32 %v384, 7
    %v386 = vsub.s32 2, %v385
    %v387 = vrot.slane %v363, %v386
    %v388 = vlaneseq
    %v389 = vshrl.u32 %v388, 7
    %v390 = vsub.s32 2, %v389
    %v391 = vrot.slane %v367, %v390
    %v392 = vlaneseq
    %v393 = vshrl.u32 %v392, 7
    %v394 = vsub.s32 2, %v393
    %v395 = vrot.slane %v371, %v394
    %v396 = vlaneseq
    %v397 = vshrl.u32 %v396, 7
    %v398 = vsub.s32 2, %v397
    %v399 = vrot.slane %v375, %v398
    %v400 = vlaneseq
    %v401 = vshrl.u32 %v400, 7
    %v402 = vsub.s32 2, %v401
    %v403 = vrot.slane %v379, %v402
    %vm404 = vcmp.eq.s32.totalorder %v383, 1
    %vm405 = vcmp.eq.s32.totalorder %v387, 1
    %vm406 = vcmp.eq.s32.totalorder %v391, 1
    %vm407 = vcmp.eq.s32.totalorder %v395, 1
    %vm408 = vcmp.eq.s32.totalorder %v399, 1
    %vm409 = vcmp.eq.s32.totalorder %v403, 1
    %v410 = vsel %vm404, %v153, %v159
    %v411 = vsel %vm405, %v155, %v161
    %v412 = vsel %vm406, %v242, %v248
    %v413 = vsel %vm407, %v244, %v250
    %v414 = vsel %vm408, %v331, %v337
    %v415 = vsel %vm409, %v333, %v339
    %v416 = vsel %vm404, %v165, %v171
    %v417 = vsel %vm405, %v167, %v173
    %v418 = vsel %vm406, %v254, %v260
    %v419 = vsel %vm407, %v256, %v262
    %v420 = vsel %vm408, %v343, %v349
    %v421 = vsel %vm409, %v345, %v351
    %v422 = vlaneseq
    %v423 = vshrl.u32 %v422, 7
    %v424 = vsub.s32 1, %v423
    %v425 = vrot.slane %v353, %v424
    %v426 = vlaneseq
    %v427 = vshrl.u32 %v426, 7
    %v428 = vsub.s32 5, %v427
    %v429 = vrot.slane %v353, %v428
    %v430 = vlaneseq
    %v431 = vshrl.u32 %v430, 7
    %v432 = vsub.s32 1, %v431
    %v433 = vrot.slane %v354, %v432
    %v434 = vlaneseq
    %v435 = vshrl.u32 %v434, 7
    %v436 = vsub.s32 5, %v435
    %v437 = vrot.slane %v354, %v436
    %v438 = vlaneseq
    %v439 = vshrl.u32 %v438, 7
    %v440 = vsub.s32 1, %v439
    %v441 = vrot.slane %v355, %v440
    %v442 = vlaneseq
    %v443 = vshrl.u32 %v442, 7
    %v444 = vsub.s32 5, %v443
    %v445 = vrot.slane %v355, %v444
    %v446 = vlaneseq
    %v447 = vshrl.u32 %v446, 7
    %v448 = vsub.s32 1, %v447
    %v449 = vrot.slane %v425, %v448
    %v450 = vlaneseq
    %v451 = vshrl.u32 %v450, 7
    %v452 = vsub.s32 1, %v451
    %v453 = vrot.slane %v429, %v452
    %v454 = vlaneseq
    %v455 = vshrl.u32 %v454, 7
    %v456 = vsub.s32 1, %v455
    %v457 = vrot.slane %v433, %v456
    %v458 = vlaneseq
    %v459 = vshrl.u32 %v458, 7
    %v460 = vsub.s32 1, %v459
    %v461 = vrot.slane %v437, %v460
    %v462 = vlaneseq
    %v463 = vshrl.u32 %v462, 7
    %v464 = vsub.s32 1, %v463
    %v465 = vrot.slane %v441, %v464
    %v466 = vlaneseq
    %v467 = vshrl.u32 %v466, 7
    %v468 = vsub.s32 1, %v467
    %v469 = vrot.slane %v445, %v468
    %vm470 = vcmp.eq.s32.totalorder %v449, 1
    %vm471 = vcmp.eq.s32.totalorder %v453, 1
    %vm472 = vcmp.eq.s32.totalorder %v457, 1
    %vm473 = vcmp.eq.s32.totalorder %v461, 1
    %vm474 = vcmp.eq.s32.totalorder %v465, 1
    %vm475 = vcmp.eq.s32.totalorder %v469, 1
    %v476 = vsel %vm470, %v410, %v416
    %v477 = vsel %vm471, %v411, %v417
    %v478 = vsel %vm472, %v412, %v418
    %v479 = vsel %vm473, %v413, %v419
    %v480 = vsel %vm474, %v414, %v420
    %v481 = vsel %vm475, %v415, %v421
    %v482 = vld [vmem:[%s4] sm:$0xff]
    %484 = vset.pattern.permute.xlu0 0
    %485 = vperm.xlu0 %484, %v482
    %v486 = vpop.permute.xlu0 %485
    %v488 = vadd.f32 %v476, %v486
    %v489 = vadd.f32 %v477, %v486
    %v490 = vadd.f32 %v478, %v486
    %v491 = vadd.f32 %v479, %v486
    %v492 = vadd.f32 %v480, %v486
    %v493 = vadd.f32 %v481, %v486
    %v497 = vlaneseq
    %v498 = vshrl.u32 %v497, 7
    %v499 = vsub.s32 0, %v498
    %v500 = vrot.slane %v51, %v499
    %v501 = vlaneseq
    %v502 = vshrl.u32 %v501, 7
    %v503 = vsub.s32 4, %v502
    %v504 = vrot.slane %v51, %v503
    %v505 = vlaneseq
    %v506 = vshrl.u32 %v505, 7
    %v507 = vsub.s32 0, %v506
    %v508 = vrot.slane %v52, %v507
    %v509 = vlaneseq
    %v510 = vshrl.u32 %v509, 7
    %v511 = vsub.s32 4, %v510
    %v512 = vrot.slane %v52, %v511
    %v513 = vlaneseq
    %v514 = vshrl.u32 %v513, 7
    %v515 = vsub.s32 0, %v514
    %v516 = vrot.slane %v53, %v515
    %v517 = vlaneseq
    %v518 = vshrl.u32 %v517, 7
    %v519 = vsub.s32 4, %v518
    %v520 = vrot.slane %v53, %v519
    %v527 = vlaneseq
    %v528 = vshrl.u32 %v527, 7
    %v529 = vsub.s32 0, %v528
    %v530 = vrot.slane %v500, %v529
    %v531 = vlaneseq
    %v532 = vshrl.u32 %v531, 7
    %v533 = vsub.s32 0, %v532
    %v534 = vrot.slane %v504, %v533
    %v535 = vlaneseq
    %v536 = vshrl.u32 %v535, 7
    %v537 = vsub.s32 0, %v536
    %v538 = vrot.slane %v508, %v537
    %v539 = vlaneseq
    %v540 = vshrl.u32 %v539, 7
    %v541 = vsub.s32 0, %v540
    %v542 = vrot.slane %v512, %v541
    %v543 = vlaneseq
    %v544 = vshrl.u32 %v543, 7
    %v545 = vsub.s32 0, %v544
    %v546 = vrot.slane %v516, %v545
    %v547 = vlaneseq
    %v548 = vshrl.u32 %v547, 7
    %v549 = vsub.s32 0, %v548
    %v550 = vrot.slane %v520, %v549
    %v551 = vmul.f32 %v488, %v530
    %v552 = vmul.f32 %v489, %v534
    %v553 = vmul.f32 %v490, %v538
    %v554 = vmul.f32 %v491, %v542
    %v555 = vmul.f32 %v492, %v546
    %v556 = vmul.f32 %v493, %v550
    %v557 = vld [vmem:[#allocation2] sm:$0xff]
    %v558 = vld [vmem:[#allocation2 + $0x8] sm:$0xff]
    %v559 = vld [vmem:[#allocation2 + $0x10] sm:$0xff]
    %v560 = vld [vmem:[#allocation2 + $0x18] sm:$0xff]
    %v561 = vld [vmem:[#allocation2 + $0x20] sm:$0xff]
    %v562 = vld [vmem:[#allocation2 + $0x28] sm:$0xff]
    %v563 = vld [vmem:[%s5] sm:$0xff]
    %564 = vrot.lane.b32.xlu0 %v551, 19
    %v565 = vpop.permute.xlu0 %564
    %566 = vrot.lane.b32.xlu0 %v557, 19
    %v567 = vpop.permute.xlu0 %566
    %568 = vrot.lane.b32.xlu0 %v552, 19
    %v569 = vpop.permute.xlu0 %568
    %570 = vrot.lane.b32.xlu0 %v558, 19
    %v571 = vpop.permute.xlu0 %570
    %572 = vrot.lane.b32.xlu0 %v553, 19
    %v573 = vpop.permute.xlu0 %572
    %574 = vrot.lane.b32.xlu0 %v559, 19
    %v575 = vpop.permute.xlu0 %574
    %576 = vrot.lane.b32.xlu0 %v554, 19
    %v577 = vpop.permute.xlu0 %576
    %578 = vrot.lane.b32.xlu0 %v560, 19
    %v579 = vpop.permute.xlu0 %578
    %580 = vrot.lane.b32.xlu0 %v555, 19
    %v581 = vpop.permute.xlu0 %580
    %582 = vrot.lane.b32.xlu0 %v561, 19
    %v583 = vpop.permute.xlu0 %582
    %584 = vrot.lane.b32.xlu0 %v556, 19
    %v585 = vpop.permute.xlu0 %584
    %586 = vrot.lane.b32.xlu0 %v562, 19
    %v587 = vpop.permute.xlu0 %586
    %v588 = vlaneseq
    %v589 = vand.u32 %v588, 127
    %vm590 = vcmp.lt.s32.totalorder %v589, 19
    %v591 = vsel %vm590, %v581, %v585
    %v592 = vsel %vm590, %v583, %v587
    %v593 = vsel %vm590, %v577, %v581
    %v594 = vsel %vm590, %v579, %v583
    %v595 = vsel %vm590, %v573, %v577
    %v596 = vsel %vm590, %v575, %v579
    %v597 = vsel %vm590, %v569, %v573
    %v598 = vsel %vm590, %v571, %v575
    %v599 = vsel %vm590, %v565, %v569
    %v600 = vsel %vm590, %v567, %v571
    %v601 = vsel %vm590, %v585, %v565
    %v602 = vsel %vm590, %v587, %v567
    %s603 = scalar_lea.vmem %s5, 8
    %v604 = vld [vmem:[%s603] sm:$0xff]
    %605 = vrot.lane.b32.xlu0 %v551, 18
    %v606 = vpop.permute.xlu0 %605
    %607 = vrot.lane.b32.xlu0 %v557, 18
    %v608 = vpop.permute.xlu0 %607
    %609 = vrot.lane.b32.xlu0 %v552, 18
    %v610 = vpop.permute.xlu0 %609
    %611 = vrot.lane.b32.xlu0 %v558, 18
    %v612 = vpop.permute.xlu0 %611
    %613 = vrot.lane.b32.xlu0 %v553, 18
    %v614 = vpop.permute.xlu0 %613
    %615 = vrot.lane.b32.xlu0 %v559, 18
    %v616 = vpop.permute.xlu0 %615
    %617 = vrot.lane.b32.xlu0 %v554, 18
    %v618 = vpop.permute.xlu0 %617
    %619 = vrot.lane.b32.xlu0 %v560, 18
    %v620 = vpop.permute.xlu0 %619
    %621 = vrot.lane.b32.xlu0 %v555, 18
    %v622 = vpop.permute.xlu0 %621
    %623 = vrot.lane.b32.xlu0 %v561, 18
    %v624 = vpop.permute.xlu0 %623
    %625 = vrot.lane.b32.xlu0 %v556, 18
    %v626 = vpop.permute.xlu0 %625
    %627 = vrot.lane.b32.xlu0 %v562, 18
    %v628 = vpop.permute.xlu0 %627
    %vm629 = vcmp.lt.s32.totalorder %v589, 18
    %v630 = vsel %vm629, %v622, %v626
    %v631 = vsel %vm629, %v624, %v628
    %v632 = vsel %vm629, %v618, %v622
    %v633 = vsel %vm629, %v620, %v624
    %v634 = vsel %vm629, %v614, %v618
    %v635 = vsel %vm629, %v616, %v620
    %v636 = vsel %vm629, %v610, %v614
    %v637 = vsel %vm629, %v612, %v616
    %v638 = vsel %vm629, %v606, %v610
    %v639 = vsel %vm629, %v608, %v612
    %v640 = vsel %vm629, %v626, %v606
    %v641 = vsel %vm629, %v628, %v608
    %v643 = vsel %vm73, %v604, 0
    %645 = vmatprep.subr.mxu0 %v638
    %646 = vmatpush1.msra.mxu0 %v640
    %647 = vmatprep.subr.mxu0 %v639
    %648 = vmatpush1.msra.mxu0 %v641
    %649 = vmatprep.subr.mxu0 0.0
    %650 = vmatpush1.msra.mxu0 0.0
    %651 = vmatprep.subr.mxu0 0.0
    %652 = vmatpush1.msra.mxu0 0.0
    %653 = vmatprep.subr.mxu0 0.0
    %654 = vmatpush1.msra.mxu0 0.0
    %655 = vmatprep.subr.mxu0 0.0
    %656 = vmatpush1.msra.mxu0 0.0
    %657 = vmatprep.subr.mxu0 0.0
    %658 = vmatpush1.msra.mxu0 0.0
    %659 = vmatprep.subr.mxu0 0.0
    %660 = vmatpush1.msra.mxu0 0.0
    %661 = vmatprep.subr.mxu0 0.0
    %662 = vmatpush1.msra.mxu0 0.0
    %663 = vmatprep.subr.mxu0 0.0
    %664 = vmatpush1.msra.mxu0 0.0
    %665 = vmatprep.subr.mxu0 0.0
    %666 = vmatpush1.msra.mxu0 0.0
    %667 = vmatprep.subr.mxu0 0.0
    %668 = vmatpush1.msra.mxu0 0.0
    %669 = vmatprep.subr.mxu0 0.0
    %670 = vmatpush1.msra.mxu0 0.0
    %671 = vmatprep.subr.mxu0 0.0
    %672 = vmatpush1.msra.mxu0 0.0
    %673 = vmatprep.subr.mxu0 0.0
    %674 = vmatpush1.msra.mxu0 0.0
    %675 = vmatprep.subr.mxu0 0.0
    %676 = vmatpush1.msra.mxu0 0.0
    %677 = vmatprep.subr.mxu0 0.0
    %678 = vmatpush1.msra.mxu0 0.0
    %679 = vmatprep.subr.mxu0 0.0
    %680 = vmatpush1.msra.mxu0 0.0
    %681 = vmatprep.subr.mxu0 0.0
    %682 = vmatpush1.msra.mxu0 0.0
    %683 = vmatprep.subr.mxu0 0.0
    %684 = vmatpush1.msra.mxu0 0.0
    %685 = vmatprep.subr.mxu0 0.0
    %686 = vmatpush1.msra.mxu0 0.0
    %687 = vmatprep.subr.mxu0 0.0
    %688 = vmatpush1.msra.mxu0 0.0
    %689 = vmatprep.subr.mxu0 0.0
    %690 = vmatpush1.msra.mxu0 0.0
    %691 = vmatprep.subr.mxu0 0.0
    %692 = vmatpush1.msra.mxu0 0.0
    %693 = vmatprep.subr.mxu0 0.0
    %694 = vmatpush1.msra.mxu0 0.0
    %695 = vmatprep.subr.mxu0 0.0
    %696 = vmatpush1.msra.mxu0 0.0
    %697 = vmatprep.subr.mxu0 0.0
    %698 = vmatpush1.msra.mxu0 0.0
    %699 = vmatprep.subr.mxu0 0.0
    %700 = vmatpush1.msra.mxu0 0.0
    %701 = vmatprep.subr.mxu0 0.0
    %702 = vmatpush1.msra.mxu0 0.0
    %703 = vmatprep.subr.mxu0 0.0
    %704 = vmatpush1.msra.mxu0 0.0
    %705 = vmatprep.subr.mxu0 0.0
    %706 = vmatpush1.msra.mxu0 0.0
    %707 = vmatprep.subr.mxu0 0.0
    %708 = vmatpush1.msra.mxu0 0.0
    %709 = vmatprep.mubr.f32.mxu0 0.0
    %710 = vmatmul.mubr.f32.gmra.mrb[0].mxu0 %v643
    %v711 = vpop.f32.mrb[0].mxu0
    %v712 = vadd.f32 0.0, %v711
    %v713 = vpop.f32.mrb[0].mxu0
    %v714 = vadd.f32 0.0, %v713
    %715 = vdwg.mxu0
    %716 = vmatprep.subr.mxu0 %v634
    %717 = vmatpush1.msra.mxu0 %v636
    %718 = vmatprep.subr.mxu0 %v635
    %719 = vmatpush1.msra.mxu0 %v637
    %720 = vmatprep.subr.mxu0 0.0
    %721 = vmatpush1.msra.mxu0 0.0
    %722 = vmatprep.subr.mxu0 0.0
    %723 = vmatpush1.msra.mxu0 0.0
    %724 = vmatprep.subr.mxu0 0.0
    %725 = vmatpush1.msra.mxu0 0.0
    %726 = vmatprep.subr.mxu0 0.0
    %727 = vmatpush1.msra.mxu0 0.0
    %728 = vmatprep.subr.mxu0 0.0
    %729 = vmatpush1.msra.mxu0 0.0
    %730 = vmatprep.subr.mxu0 0.0
    %731 = vmatpush1.msra.mxu0 0.0
    %732 = vmatprep.subr.mxu0 0.0
    %733 = vmatpush1.msra.mxu0 0.0
    %734 = vmatprep.subr.mxu0 0.0
    %735 = vmatpush1.msra.mxu0 0.0
    %736 = vmatprep.subr.mxu0 0.0
    %737 = vmatpush1.msra.mxu0 0.0
    %738 = vmatprep.subr.mxu0 0.0
    %739 = vmatpush1.msra.mxu0 0.0
    %740 = vmatprep.subr.mxu0 0.0
    %741 = vmatpush1.msra.mxu0 0.0
    %742 = vmatprep.subr.mxu0 0.0
    %743 = vmatpush1.msra.mxu0 0.0
    %744 = vmatprep.subr.mxu0 0.0
    %745 = vmatpush1.msra.mxu0 0.0
    %746 = vmatprep.subr.mxu0 0.0
    %747 = vmatpush1.msra.mxu0 0.0
    %748 = vmatprep.subr.mxu0 0.0
    %749 = vmatpush1.msra.mxu0 0.0
    %750 = vmatprep.subr.mxu0 0.0
    %751 = vmatpush1.msra.mxu0 0.0
    %752 = vmatprep.subr.mxu0 0.0
    %753 = vmatpush1.msra.mxu0 0.0
    %754 = vmatprep.subr.mxu0 0.0
    %755 = vmatpush1.msra.mxu0 0.0
    %756 = vmatprep.subr.mxu0 0.0
    %757 = vmatpush1.msra.mxu0 0.0
    %758 = vmatprep.subr.mxu0 0.0
    %759 = vmatpush1.msra.mxu0 0.0
    %760 = vmatprep.subr.mxu0 0.0
    %761 = vmatpush1.msra.mxu0 0.0
    %762 = vmatprep.subr.mxu0 0.0
    %763 = vmatpush1.msra.mxu0 0.0
    %764 = vmatprep.subr.mxu0 0.0
    %765 = vmatpush1.msra.mxu0 0.0
    %766 = vmatprep.subr.mxu0 0.0
    %767 = vmatpush1.msra.mxu0 0.0
    %768 = vmatprep.subr.mxu0 0.0
    %769 = vmatpush1.msra.mxu0 0.0
    %770 = vmatprep.subr.mxu0 0.0
    %771 = vmatpush1.msra.mxu0 0.0
    %772 = vmatprep.subr.mxu0 0.0
    %773 = vmatpush1.msra.mxu0 0.0
    %774 = vmatprep.subr.mxu0 0.0
    %775 = vmatpush1.msra.mxu0 0.0
    %776 = vmatprep.subr.mxu0 0.0
    %777 = vmatpush1.msra.mxu0 0.0
    %778 = vmatprep.subr.mxu0 0.0
    %779 = vmatpush1.msra.mxu0 0.0
    %780 = vmatprep.mubr.f32.mxu0 0.0
    %781 = vmatmul.mubr.f32.gmra.mrb[0].mxu0 %v643
    %v782 = vpop.f32.mrb[0].mxu0
    %v783 = vadd.f32 0.0, %v782
    %v784 = vpop.f32.mrb[0].mxu0
    %v785 = vadd.f32 0.0, %v784
    %786 = vdwg.mxu0
    %787 = vmatprep.subr.mxu0 %v630
    %788 = vmatpush1.msra.mxu0 %v632
    %789 = vmatprep.subr.mxu0 %v631
    %790 = vmatpush1.msra.mxu0 %v633
    %791 = vmatprep.subr.mxu0 0.0
    %792 = vmatpush1.msra.mxu0 0.0
    %793 = vmatprep.subr.mxu0 0.0
    %794 = vmatpush1.msra.mxu0 0.0
    %795 = vmatprep.subr.mxu0 0.0
    %796 = vmatpush1.msra.mxu0 0.0
    %797 = vmatprep.subr.mxu0 0.0
    %798 = vmatpush1.msra.mxu0 0.0
    %799 = vmatprep.subr.mxu0 0.0
    %800 = vmatpush1.msra.mxu0 0.0
    %801 = vmatprep.subr.mxu0 0.0
    %802 = vmatpush1.msra.mxu0 0.0
    %803 = vmatprep.subr.mxu0 0.0
    %804 = vmatpush1.msra.mxu0 0.0
    %805 = vmatprep.subr.mxu0 0.0
    %806 = vmatpush1.msra.mxu0 0.0
    %807 = vmatprep.subr.mxu0 0.0
    %808 = vmatpush1.msra.mxu0 0.0
    %809 = vmatprep.subr.mxu0 0.0
    %810 = vmatpush1.msra.mxu0 0.0
    %811 = vmatprep.subr.mxu0 0.0
    %812 = vmatpush1.msra.mxu0 0.0
    %813 = vmatprep.subr.mxu0 0.0
    %814 = vmatpush1.msra.mxu0 0.0
    %815 = vmatprep.subr.mxu0 0.0
    %816 = vmatpush1.msra.mxu0 0.0
    %817 = vmatprep.subr.mxu0 0.0
    %818 = vmatpush1.msra.mxu0 0.0
    %819 = vmatprep.subr.mxu0 0.0
    %820 = vmatpush1.msra.mxu0 0.0
    %821 = vmatprep.subr.mxu0 0.0
    %822 = vmatpush1.msra.mxu0 0.0
    %823 = vmatprep.subr.mxu0 0.0
    %824 = vmatpush1.msra.mxu0 0.0
    %825 = vmatprep.subr.mxu0 0.0
    %826 = vmatpush1.msra.mxu0 0.0
    %827 = vmatprep.subr.mxu0 0.0
    %828 = vmatpush1.msra.mxu0 0.0
    %829 = vmatprep.subr.mxu0 0.0
    %830 = vmatpush1.msra.mxu0 0.0
    %831 = vmatprep.subr.mxu0 0.0
    %832 = vmatpush1.msra.mxu0 0.0
    %833 = vmatprep.subr.mxu0 0.0
    %834 = vmatpush1.msra.mxu0 0.0
    %835 = vmatprep.subr.mxu0 0.0
    %836 = vmatpush1.msra.mxu0 0.0
    %837 = vmatprep.subr.mxu0 0.0
    %838 = vmatpush1.msra.mxu0 0.0
    %839 = vmatprep.subr.mxu0 0.0
    %840 = vmatpush1.msra.mxu0 0.0
    %841 = vmatprep.subr.mxu0 0.0
    %842 = vmatpush1.msra.mxu0 0.0
    %843 = vmatprep.subr.mxu0 0.0
    %844 = vmatpush1.msra.mxu0 0.0
    %845 = vmatprep.subr.mxu0 0.0
    %846 = vmatpush1.msra.mxu0 0.0
    %847 = vmatprep.subr.mxu0 0.0
    %848 = vmatpush1.msra.mxu0 0.0
    %849 = vmatprep.subr.mxu0 0.0
    %850 = vmatpush1.msra.mxu0 0.0
    %851 = vmatprep.mubr.f32.mxu0 0.0
    %852 = vmatmul.mubr.f32.gmra.mrb[0].mxu0 %v643
    %v853 = vpop.f32.mrb[0].mxu0
    %v854 = vadd.f32 0.0, %v853
    %v855 = vpop.f32.mrb[0].mxu0
    %v856 = vadd.f32 0.0, %v855
    %857 = vdwg.mxu0
    %v859 = vsel %vm73, %v563, 0
    %861 = vmatprep.subr.mxu0 %v599
    %862 = vmatpush1.msra.mxu0 %v601
    %863 = vmatprep.subr.mxu0 %v600
    %864 = vmatpush1.msra.mxu0 %v602
    %865 = vmatprep.subr.mxu0 0.0
    %866 = vmatpush1.msra.mxu0 0.0
    %867 = vmatprep.subr.mxu0 0.0
    %868 = vmatpush1.msra.mxu0 0.0
    %869 = vmatprep.subr.mxu0 0.0
    %870 = vmatpush1.msra.mxu0 0.0
    %871 = vmatprep.subr.mxu0 0.0
    %872 = vmatpush1.msra.mxu0 0.0
    %873 = vmatprep.subr.mxu0 0.0
    %874 = vmatpush1.msra.mxu0 0.0
    %875 = vmatprep.subr.mxu0 0.0
    %876 = vmatpush1.msra.mxu0 0.0
    %877 = vmatprep.subr.mxu0 0.0
    %878 = vmatpush1.msra.mxu0 0.0
    %879 = vmatprep.subr.mxu0 0.0
    %880 = vmatpush1.msra.mxu0 0.0
    %881 = vmatprep.subr.mxu0 0.0
    %882 = vmatpush1.msra.mxu0 0.0
    %883 = vmatprep.subr.mxu0 0.0
    %884 = vmatpush1.msra.mxu0 0.0
    %885 = vmatprep.subr.mxu0 0.0
    %886 = vmatpush1.msra.mxu0 0.0
    %887 = vmatprep.subr.mxu0 0.0
    %888 = vmatpush1.msra.mxu0 0.0
    %889 = vmatprep.subr.mxu0 0.0
    %890 = vmatpush1.msra.mxu0 0.0
    %891 = vmatprep.subr.mxu0 0.0
    %892 = vmatpush1.msra.mxu0 0.0
    %893 = vmatprep.subr.mxu0 0.0
    %894 = vmatpush1.msra.mxu0 0.0
    %895 = vmatprep.subr.mxu0 0.0
    %896 = vmatpush1.msra.mxu0 0.0
    %897 = vmatprep.subr.mxu0 0.0
    %898 = vmatpush1.msra.mxu0 0.0
    %899 = vmatprep.subr.mxu0 0.0
    %900 = vmatpush1.msra.mxu0 0.0
    %901 = vmatprep.subr.mxu0 0.0
    %902 = vmatpush1.msra.mxu0 0.0
    %903 = vmatprep.subr.mxu0 0.0
    %904 = vmatpush1.msra.mxu0 0.0
    %905 = vmatprep.subr.mxu0 0.0
    %906 = vmatpush1.msra.mxu0 0.0
    %907 = vmatprep.subr.mxu0 0.0
    %908 = vmatpush1.msra.mxu0 0.0
    %909 = vmatprep.subr.mxu0 0.0
    %910 = vmatpush1.msra.mxu0 0.0
    %911 = vmatprep.subr.mxu0 0.0
    %912 = vmatpush1.msra.mxu0 0.0
    %913 = vmatprep.subr.mxu0 0.0
    %914 = vmatpush1.msra.mxu0 0.0
    %915 = vmatprep.subr.mxu0 0.0
    %916 = vmatpush1.msra.mxu0 0.0
    %917 = vmatprep.subr.mxu0 0.0
    %918 = vmatpush1.msra.mxu0 0.0
    %919 = vmatprep.subr.mxu0 0.0
    %920 = vmatpush1.msra.mxu0 0.0
    %921 = vmatprep.subr.mxu0 0.0
    %922 = vmatpush1.msra.mxu0 0.0
    %923 = vmatprep.subr.mxu0 0.0
    %924 = vmatpush1.msra.mxu0 0.0
    %925 = vmatprep.mubr.f32.mxu0 0.0
    %926 = vmatmul.mubr.f32.gmra.mrb[0].mxu0 %v859
    %v927 = vpop.f32.mrb[0].mxu0
    %v928 = vadd.f32 %v712, %v927
    %v929 = vpop.f32.mrb[0].mxu0
    %v930 = vadd.f32 %v714, %v929
    %931 = vdwg.mxu0
    %932 = vmatprep.subr.mxu0 %v595
    %933 = vmatpush1.msra.mxu0 %v597
    %934 = vmatprep.subr.mxu0 %v596
    %935 = vmatpush1.msra.mxu0 %v598
    %936 = vmatprep.subr.mxu0 0.0
    %937 = vmatpush1.msra.mxu0 0.0
    %938 = vmatprep.subr.mxu0 0.0
    %939 = vmatpush1.msra.mxu0 0.0
    %940 = vmatprep.subr.mxu0 0.0
    %941 = vmatpush1.msra.mxu0 0.0
    %942 = vmatprep.subr.mxu0 0.0
    %943 = vmatpush1.msra.mxu0 0.0
    %944 = vmatprep.subr.mxu0 0.0
    %945 = vmatpush1.msra.mxu0 0.0
    %946 = vmatprep.subr.mxu0 0.0
    %947 = vmatpush1.msra.mxu0 0.0
    %948 = vmatprep.subr.mxu0 0.0
    %949 = vmatpush1.msra.mxu0 0.0
    %950 = vmatprep.subr.mxu0 0.0
    %951 = vmatpush1.msra.mxu0 0.0
    %952 = vmatprep.subr.mxu0 0.0
    %953 = vmatpush1.msra.mxu0 0.0
    %954 = vmatprep.subr.mxu0 0.0
    %955 = vmatpush1.msra.mxu0 0.0
    %956 = vmatprep.subr.mxu0 0.0
    %957 = vmatpush1.msra.mxu0 0.0
    %958 = vmatprep.subr.mxu0 0.0
    %959 = vmatpush1.msra.mxu0 0.0
    %960 = vmatprep.subr.mxu0 0.0
    %961 = vmatpush1.msra.mxu0 0.0
    %962 = vmatprep.subr.mxu0 0.0
    %963 = vmatpush1.msra.mxu0 0.0
    %964 = vmatprep.subr.mxu0 0.0
    %965 = vmatpush1.msra.mxu0 0.0
    %966 = vmatprep.subr.mxu0 0.0
    %967 = vmatpush1.msra.mxu0 0.0
    %968 = vmatprep.subr.mxu0 0.0
    %969 = vmatpush1.msra.mxu0 0.0
    %970 = vmatprep.subr.mxu0 0.0
    %971 = vmatpush1.msra.mxu0 0.0
    %972 = vmatprep.subr.mxu0 0.0
    %973 = vmatpush1.msra.mxu0 0.0
    %974 = vmatprep.subr.mxu0 0.0
    %975 = vmatpush1.msra.mxu0 0.0
    %976 = vmatprep.subr.mxu0 0.0
    %977 = vmatpush1.msra.mxu0 0.0
    %978 = vmatprep.subr.mxu0 0.0
    %979 = vmatpush1.msra.mxu0 0.0
    %980 = vmatprep.subr.mxu0 0.0
    %981 = vmatpush1.msra.mxu0 0.0
    %982 = vmatprep.subr.mxu0 0.0
    %983 = vmatpush1.msra.mxu0 0.0
    %984 = vmatprep.subr.mxu0 0.0
    %985 = vmatpush1.msra.mxu0 0.0
    %986 = vmatprep.subr.mxu0 0.0
    %987 = vmatpush1.msra.mxu0 0.0
    %988 = vmatprep.subr.mxu0 0.0
    %989 = vmatpush1.msra.mxu0 0.0
    %990 = vmatprep.subr.mxu0 0.0
    %991 = vmatpush1.msra.mxu0 0.0
    %992 = vmatprep.subr.mxu0 0.0
    %993 = vmatpush1.msra.mxu0 0.0
    %994 = vmatprep.subr.mxu0 0.0
    %995 = vmatpush1.msra.mxu0 0.0
    %996 = vmatprep.mubr.f32.mxu0 0.0
    %997 = vmatmul.mubr.f32.gmra.mrb[0].mxu0 %v859
    %v998 = vpop.f32.mrb[0].mxu0
    %v999 = vadd.f32 %v783, %v998
    %v1000 = vpop.f32.mrb[0].mxu0
    %v1001 = vadd.f32 %v785, %v1000
    %1002 = vdwg.mxu0
    %1003 = vmatprep.subr.mxu0 %v591
    %1004 = vmatpush1.msra.mxu0 %v593
    %1005 = vmatprep.subr.mxu0 %v592
    %1006 = vmatpush1.msra.mxu0 %v594
    %1007 = vmatprep.subr.mxu0 0.0
    %1008 = vmatpush1.msra.mxu0 0.0
    %1009 = vmatprep.subr.mxu0 0.0
    %1010 = vmatpush1.msra.mxu0 0.0
    %1011 = vmatprep.subr.mxu0 0.0
    %1012 = vmatpush1.msra.mxu0 0.0
    %1013 = vmatprep.subr.mxu0 0.0
    %1014 = vmatpush1.msra.mxu0 0.0
    %1015 = vmatprep.subr.mxu0 0.0
    %1016 = vmatpush1.msra.mxu0 0.0
    %1017 = vmatprep.subr.mxu0 0.0
    %1018 = vmatpush1.msra.mxu0 0.0
    %1019 = vmatprep.subr.mxu0 0.0
    %1020 = vmatpush1.msra.mxu0 0.0
    %1021 = vmatprep.subr.mxu0 0.0
    %1022 = vmatpush1.msra.mxu0 0.0
    %1023 = vmatprep.subr.mxu0 0.0
    %1024 = vmatpush1.msra.mxu0 0.0
    %1025 = vmatprep.subr.mxu0 0.0
    %1026 = vmatpush1.msra.mxu0 0.0
    %1027 = vmatprep.subr.mxu0 0.0
    %1028 = vmatpush1.msra.mxu0 0.0
    %1029 = vmatprep.subr.mxu0 0.0
    %1030 = vmatpush1.msra.mxu0 0.0
    %1031 = vmatprep.subr.mxu0 0.0
    %1032 = vmatpush1.msra.mxu0 0.0
    %1033 = vmatprep.subr.mxu0 0.0
    %1034 = vmatpush1.msra.mxu0 0.0
    %1035 = vmatprep.subr.mxu0 0.0
    %1036 = vmatpush1.msra.mxu0 0.0
    %1037 = vmatprep.subr.mxu0 0.0
    %1038 = vmatpush1.msra.mxu0 0.0
    %1039 = vmatprep.subr.mxu0 0.0
    %1040 = vmatpush1.msra.mxu0 0.0
    %1041 = vmatprep.subr.mxu0 0.0
    %1042 = vmatpush1.msra.mxu0 0.0
    %1043 = vmatprep.subr.mxu0 0.0
    %1044 = vmatpush1.msra.mxu0 0.0
    %1045 = vmatprep.subr.mxu0 0.0
    %1046 = vmatpush1.msra.mxu0 0.0
    %1047 = vmatprep.subr.mxu0 0.0
    %1048 = vmatpush1.msra.mxu0 0.0
    %1049 = vmatprep.subr.mxu0 0.0
    %1050 = vmatpush1.msra.mxu0 0.0
    %1051 = vmatprep.subr.mxu0 0.0
    %1052 = vmatpush1.msra.mxu0 0.0
    %1053 = vmatprep.subr.mxu0 0.0
    %1054 = vmatpush1.msra.mxu0 0.0
    %1055 = vmatprep.subr.mxu0 0.0
    %1056 = vmatpush1.msra.mxu0 0.0
    %1057 = vmatprep.subr.mxu0 0.0
    %1058 = vmatpush1.msra.mxu0 0.0
    %1059 = vmatprep.subr.mxu0 0.0
    %1060 = vmatpush1.msra.mxu0 0.0
    %1061 = vmatprep.subr.mxu0 0.0
    %1062 = vmatpush1.msra.mxu0 0.0
    %1063 = vmatprep.subr.mxu0 0.0
    %1064 = vmatpush1.msra.mxu0 0.0
    %1065 = vmatprep.subr.mxu0 0.0
    %1066 = vmatpush1.msra.mxu0 0.0
    %1067 = vmatprep.mubr.f32.mxu0 0.0
    %1068 = vmatmul.mubr.f32.gmra.mrb[0].mxu0 %v859
    %v1069 = vpop.f32.mrb[0].mxu0
    %v1070 = vadd.f32 %v854, %v1069
    %v1071 = vpop.f32.mrb[0].mxu0
    %v1072 = vadd.f32 %v856, %v1071
    %1073 = vdwg.mxu0
    %s1074 = scalar_lea.vmem %s5, 16
    %v1075 = vld [vmem:[%s1074] sm:$0xff]
    %1076 = vrot.lane.b32.xlu0 %v551, 17
    %v1077 = vpop.permute.xlu0 %1076
    %1078 = vrot.lane.b32.xlu0 %v557, 17
    %v1079 = vpop.permute.xlu0 %1078
    %1080 = vrot.lane.b32.xlu0 %v552, 17
    %v1081 = vpop.permute.xlu0 %1080
    %1082 = vrot.lane.b32.xlu0 %v558, 17
    %v1083 = vpop.permute.xlu0 %1082
    %1084 = vrot.lane.b32.xlu0 %v553, 17
    %v1085 = vpop.permute.xlu0 %1084
    %1086 = vrot.lane.b32.xlu0 %v559, 17
    %v1087 = vpop.permute.xlu0 %1086
    %1088 = vrot.lane.b32.xlu0 %v554, 17
    %v1089 = vpop.permute.xlu0 %1088
    %1090 = vrot.lane.b32.xlu0 %v560, 17
    %v1091 = vpop.permute.xlu0 %1090
    %1092 = vrot.lane.b32.xlu0 %v555, 17
    %v1093 = vpop.permute.xlu0 %1092
    %1094 = vrot.lane.b32.xlu0 %v561, 17
    %v1095 = vpop.permute.xlu0 %1094
    %1096 = vrot.lane.b32.xlu0 %v556, 17
    %v1097 = vpop.permute.xlu0 %1096
    %1098 = vrot.lane.b32.xlu0 %v562, 17
    %v1099 = vpop.permute.xlu0 %1098
    %vm1100 = vcmp.lt.s32.totalorder %v589, 17
    %v1101 = vsel %vm1100, %v1093, %v1097
    %v1102 = vsel %vm1100, %v1095, %v1099
    %v1103 = vsel %vm1100, %v1089, %v1093
    %v1104 = vsel %vm1100, %v1091, %v1095
    %v1105 = vsel %vm1100, %v1085, %v1089
    %v1106 = vsel %vm1100, %v1087, %v1091
    %v1107 = vsel %vm1100, %v1081, %v1085
    %v1108 = vsel %vm1100, %v1083, %v1087
    %v1109 = vsel %vm1100, %v1077, %v1081
    %v1110 = vsel %vm1100, %v1079, %v1083
    %v1111 = vsel %vm1100, %v1097, %v1077
    %v1112 = vsel %vm1100, %v1099, %v1079
    %v1114 = vsel %vm73, %v1075, 0
    %1116 = vmatprep.subr.mxu0 %v1109
    %1117 = vmatpush1.msra.mxu0 %v1111
    %1118 = vmatprep.subr.mxu0 %v1110
    %1119 = vmatpush1.msra.mxu0 %v1112
    %1120 = vmatprep.subr.mxu0 0.0
    %1121 = vmatpush1.msra.mxu0 0.0
    %1122 = vmatprep.subr.mxu0 0.0
    %1123 = vmatpush1.msra.mxu0 0.0
    %1124 = vmatprep.subr.mxu0 0.0
    %1125 = vmatpush1.msra.mxu0 0.0
    %1126 = vmatprep.subr.mxu0 0.0
    %1127 = vmatpush1.msra.mxu0 0.0
    %1128 = vmatprep.subr.mxu0 0.0
    %1129 = vmatpush1.msra.mxu0 0.0
    %1130 = vmatprep.subr.mxu0 0.0
    %1131 = vmatpush1.msra.mxu0 0.0
    %1132 = vmatprep.subr.mxu0 0.0
    %1133 = vmatpush1.msra.mxu0 0.0
    %1134 = vmatprep.subr.mxu0 0.0
    %1135 = vmatpush1.msra.mxu0 0.0
    %1136 = vmatprep.subr.mxu0 0.0
    %1137 = vmatpush1.msra.mxu0 0.0
    %1138 = vmatprep.subr.mxu0 0.0
    %1139 = vmatpush1.msra.mxu0 0.0
    %1140 = vmatprep.subr.mxu0 0.0
    %1141 = vmatpush1.msra.mxu0 0.0
    %1142 = vmatprep.subr.mxu0 0.0
    %1143 = vmatpush1.msra.mxu0 0.0
    %1144 = vmatprep.subr.mxu0 0.0
    %1145 = vmatpush1.msra.mxu0 0.0
    %1146 = vmatprep.subr.mxu0 0.0
    %1147 = vmatpush1.msra.mxu0 0.0
    %1148 = vmatprep.subr.mxu0 0.0
    %1149 = vmatpush1.msra.mxu0 0.0
    %1150 = vmatprep.subr.mxu0 0.0
    %1151 = vmatpush1.msra.mxu0 0.0
    %1152 = vmatprep.subr.mxu0 0.0
    %1153 = vmatpush1.msra.mxu0 0.0
    %1154 = vmatprep.subr.mxu0 0.0
    %1155 = vmatpush1.msra.mxu0 0.0
    %1156 = vmatprep.subr.mxu0 0.0
    %1157 = vmatpush1.msra.mxu0 0.0
    %1158 = vmatprep.subr.mxu0 0.0
    %1159 = vmatpush1.msra.mxu0 0.0
    %1160 = vmatprep.subr.mxu0 0.0
    %1161 = vmatpush1.msra.mxu0 0.0
    %1162 = vmatprep.subr.mxu0 0.0
    %1163 = vmatpush1.msra.mxu0 0.0
    %1164 = vmatprep.subr.mxu0 0.0
    %1165 = vmatpush1.msra.mxu0 0.0
    %1166 = vmatprep.subr.mxu0 0.0
    %1167 = vmatpush1.msra.mxu0 0.0
    %1168 = vmatprep.subr.mxu0 0.0
    %1169 = vmatpush1.msra.mxu0 0.0
    %1170 = vmatprep.subr.mxu0 0.0
    %1171 = vmatpush1.msra.mxu0 0.0
    %1172 = vmatprep.subr.mxu0 0.0
    %1173 = vmatpush1.msra.mxu0 0.0
    %1174 = vmatprep.subr.mxu0 0.0
    %1175 = vmatpush1.msra.mxu0 0.0
    %1176 = vmatprep.subr.mxu0 0.0
    %1177 = vmatpush1.msra.mxu0 0.0
    %1178 = vmatprep.subr.mxu0 0.0
    %1179 = vmatpush1.msra.mxu0 0.0
    %1180 = vmatprep.mubr.f32.mxu0 0.0
    %1181 = vmatmul.mubr.f32.gmra.mrb[0].mxu0 %v1114
    %v1182 = vpop.f32.mrb[0].mxu0
    %v1183 = vadd.f32 0.0, %v1182
    %v1184 = vpop.f32.mrb[0].mxu0
    %v1185 = vadd.f32 0.0, %v1184
    %1186 = vdwg.mxu0
    %1187 = vmatprep.subr.mxu0 %v1105
    %1188 = vmatpush1.msra.mxu0 %v1107
    %1189 = vmatprep.subr.mxu0 %v1106
    %1190 = vmatpush1.msra.mxu0 %v1108
    %1191 = vmatprep.subr.mxu0 0.0
    %1192 = vmatpush1.msra.mxu0 0.0
    %1193 = vmatprep.subr.mxu0 0.0
    %1194 = vmatpush1.msra.mxu0 0.0
    %1195 = vmatprep.subr.mxu0 0.0
    %1196 = vmatpush1.msra.mxu0 0.0
    %1197 = vmatprep.subr.mxu0 0.0
    %1198 = vmatpush1.msra.mxu0 0.0
    %1199 = vmatprep.subr.mxu0 0.0
    %1200 = vmatpush1.msra.mxu0 0.0
    %1201 = vmatprep.subr.mxu0 0.0
    %1202 = vmatpush1.msra.mxu0 0.0
    %1203 = vmatprep.subr.mxu0 0.0
    %1204 = vmatpush1.msra.mxu0 0.0
    %1205 = vmatprep.subr.mxu0 0.0
    %1206 = vmatpush1.msra.mxu0 0.0
    %1207 = vmatprep.subr.mxu0 0.0
    %1208 = vmatpush1.msra.mxu0 0.0
    %1209 = vmatprep.subr.mxu0 0.0
    %1210 = vmatpush1.msra.mxu0 0.0
    %1211 = vmatprep.subr.mxu0 0.0
    %1212 = vmatpush1.msra.mxu0 0.0
    %1213 = vmatprep.subr.mxu0 0.0
    %1214 = vmatpush1.msra.mxu0 0.0
    %1215 = vmatprep.subr.mxu0 0.0
    %1216 = vmatpush1.msra.mxu0 0.0
    %1217 = vmatprep.subr.mxu0 0.0
    %1218 = vmatpush1.msra.mxu0 0.0
    %1219 = vmatprep.subr.mxu0 0.0
    %1220 = vmatpush1.msra.mxu0 0.0
    %1221 = vmatprep.subr.mxu0 0.0
    %1222 = vmatpush1.msra.mxu0 0.0
    %1223 = vmatprep.subr.mxu0 0.0
    %1224 = vmatpush1.msra.mxu0 0.0
    %1225 = vmatprep.subr.mxu0 0.0
    %1226 = vmatpush1.msra.mxu0 0.0
    %1227 = vmatprep.subr.mxu0 0.0
    %1228 = vmatpush1.msra.mxu0 0.0
    %1229 = vmatprep.subr.mxu0 0.0
    %1230 = vmatpush1.msra.mxu0 0.0
    %1231 = vmatprep.subr.mxu0 0.0
    %1232 = vmatpush1.msra.mxu0 0.0
    %1233 = vmatprep.subr.mxu0 0.0
    %1234 = vmatpush1.msra.mxu0 0.0
    %1235 = vmatprep.subr.mxu0 0.0
    %1236 = vmatpush1.msra.mxu0 0.0
    %1237 = vmatprep.subr.mxu0 0.0
    %1238 = vmatpush1.msra.mxu0 0.0
    %1239 = vmatprep.subr.mxu0 0.0
    %1240 = vmatpush1.msra.mxu0 0.0
    %1241 = vmatprep.subr.mxu0 0.0
    %1242 = vmatpush1.msra.mxu0 0.0
    %1243 = vmatprep.subr.mxu0 0.0
    %1244 = vmatpush1.msra.mxu0 0.0
    %1245 = vmatprep.subr.mxu0 0.0
    %1246 = vmatpush1.msra.mxu0 0.0
    %1247 = vmatprep.subr.mxu0 0.0
    %1248 = vmatpush1.msra.mxu0 0.0
    %1249 = vmatprep.subr.mxu0 0.0
    %1250 = vmatpush1.msra.mxu0 0.0
    %1251 = vmatprep.mubr.f32.mxu0 0.0
    %1252 = vmatmul.mubr.f32.gmra.mrb[0].mxu0 %v1114
    %v1253 = vpop.f32.mrb[0].mxu0
    %v1254 = vadd.f32 0.0, %v1253
    %v1255 = vpop.f32.mrb[0].mxu0
    %v1256 = vadd.f32 0.0, %v1255
    %1257 = vdwg.mxu0
    %1258 = vmatprep.subr.mxu0 %v1101
    %1259 = vmatpush1.msra.mxu0 %v1103
    %1260 = vmatprep.subr.mxu0 %v1102
    %1261 = vmatpush1.msra.mxu0 %v1104
    %1262 = vmatprep.subr.mxu0 0.0
    %1263 = vmatpush1.msra.mxu0 0.0
    %1264 = vmatprep.subr.mxu0 0.0
    %1265 = vmatpush1.msra.mxu0 0.0
    %1266 = vmatprep.subr.mxu0 0.0
    %1267 = vmatpush1.msra.mxu0 0.0
    %1268 = vmatprep.subr.mxu0 0.0
    %1269 = vmatpush1.msra.mxu0 0.0
    %1270 = vmatprep.subr.mxu0 0.0
    %1271 = vmatpush1.msra.mxu0 0.0
    %1272 = vmatprep.subr.mxu0 0.0
    %1273 = vmatpush1.msra.mxu0 0.0
    %1274 = vmatprep.subr.mxu0 0.0
    %1275 = vmatpush1.msra.mxu0 0.0
    %1276 = vmatprep.subr.mxu0 0.0
    %1277 = vmatpush1.msra.mxu0 0.0
    %1278 = vmatprep.subr.mxu0 0.0
    %1279 = vmatpush1.msra.mxu0 0.0
    %1280 = vmatprep.subr.mxu0 0.0
    %1281 = vmatpush1.msra.mxu0 0.0
    %1282 = vmatprep.subr.mxu0 0.0
    %1283 = vmatpush1.msra.mxu0 0.0
    %1284 = vmatprep.subr.mxu0 0.0
    %1285 = vmatpush1.msra.mxu0 0.0
    %1286 = vmatprep.subr.mxu0 0.0
    %1287 = vmatpush1.msra.mxu0 0.0
    %1288 = vmatprep.subr.mxu0 0.0
    %1289 = vmatpush1.msra.mxu0 0.0
    %1290 = vmatprep.subr.mxu0 0.0
    %1291 = vmatpush1.msra.mxu0 0.0
    %1292 = vmatprep.subr.mxu0 0.0
    %1293 = vmatpush1.msra.mxu0 0.0
    %1294 = vmatprep.subr.mxu0 0.0
    %1295 = vmatpush1.msra.mxu0 0.0
    %1296 = vmatprep.subr.mxu0 0.0
    %1297 = vmatpush1.msra.mxu0 0.0
    %1298 = vmatprep.subr.mxu0 0.0
    %1299 = vmatpush1.msra.mxu0 0.0
    %1300 = vmatprep.subr.mxu0 0.0
    %1301 = vmatpush1.msra.mxu0 0.0
    %1302 = vmatprep.subr.mxu0 0.0
    %1303 = vmatpush1.msra.mxu0 0.0
    %1304 = vmatprep.subr.mxu0 0.0
    %1305 = vmatpush1.msra.mxu0 0.0
    %1306 = vmatprep.subr.mxu0 0.0
    %1307 = vmatpush1.msra.mxu0 0.0
    %1308 = vmatprep.subr.mxu0 0.0
    %1309 = vmatpush1.msra.mxu0 0.0
    %1310 = vmatprep.subr.mxu0 0.0
    %1311 = vmatpush1.msra.mxu0 0.0
    %1312 = vmatprep.subr.mxu0 0.0
    %1313 = vmatpush1.msra.mxu0 0.0
    %1314 = vmatprep.subr.mxu0 0.0
    %1315 = vmatpush1.msra.mxu0 0.0
    %1316 = vmatprep.subr.mxu0 0.0
    %1317 = vmatpush1.msra.mxu0 0.0
    %1318 = vmatprep.subr.mxu0 0.0
    %1319 = vmatpush1.msra.mxu0 0.0
    %1320 = vmatprep.subr.mxu0 0.0
    %1321 = vmatpush1.msra.mxu0 0.0
    %1322 = vmatprep.mubr.f32.mxu0 0.0
    %1323 = vmatmul.mubr.f32.gmra.mrb[0].mxu0 %v1114
    %v1324 = vpop.f32.mrb[0].mxu0
    %v1325 = vadd.f32 0.0, %v1324
    %v1326 = vpop.f32.mrb[0].mxu0
    %v1327 = vadd.f32 0.0, %v1326
    %1328 = vdwg.mxu0
    %v1329 = vadd.f32 %v928, %v1183
    %v1330 = vadd.f32 %v930, %v1185
    %v1331 = vadd.f32 %v999, %v1254
    %v1332 = vadd.f32 %v1001, %v1256
    %v1333 = vadd.f32 %v1070, %v1325
    %v1334 = vadd.f32 %v1072, %v1327
    %s1335 = scalar_lea.vmem %s5, 24
    %v1336 = vld [vmem:[%s1335] sm:$0xff]
    %1337 = vrot.lane.b32.xlu0 %v551, 1
    %v1338 = vpop.permute.xlu0 %1337
    %1339 = vrot.lane.b32.xlu0 %v557, 1
    %v1340 = vpop.permute.xlu0 %1339
    %1341 = vrot.lane.b32.xlu0 %v552, 1
    %v1342 = vpop.permute.xlu0 %1341
    %1343 = vrot.lane.b32.xlu0 %v558, 1
    %v1344 = vpop.permute.xlu0 %1343
    %1345 = vrot.lane.b32.xlu0 %v553, 1
    %v1346 = vpop.permute.xlu0 %1345
    %1347 = vrot.lane.b32.xlu0 %v559, 1
    %v1348 = vpop.permute.xlu0 %1347
    %1349 = vrot.lane.b32.xlu0 %v554, 1
    %v1350 = vpop.permute.xlu0 %1349
    %1351 = vrot.lane.b32.xlu0 %v560, 1
    %v1352 = vpop.permute.xlu0 %1351
    %1353 = vrot.lane.b32.xlu0 %v555, 1
    %v1354 = vpop.permute.xlu0 %1353
    %1355 = vrot.lane.b32.xlu0 %v561, 1
    %v1356 = vpop.permute.xlu0 %1355
    %1357 = vrot.lane.b32.xlu0 %v556, 1
    %v1358 = vpop.permute.xlu0 %1357
    %1359 = vrot.lane.b32.xlu0 %v562, 1
    %v1360 = vpop.permute.xlu0 %1359
    %vm1361 = vcmp.lt.s32.totalorder %v589, 1
    %v1362 = vsel %vm1361, %v1354, %v1358
    %v1363 = vsel %vm1361, %v1356, %v1360
    %v1364 = vsel %vm1361, %v1350, %v1354
    %v1365 = vsel %vm1361, %v1352, %v1356
    %v1366 = vsel %vm1361, %v1346, %v1350
    %v1367 = vsel %vm1361, %v1348, %v1352
    %v1368 = vsel %vm1361, %v1342, %v1346
    %v1369 = vsel %vm1361, %v1344, %v1348
    %v1370 = vsel %vm1361, %v1338, %v1342
    %v1371 = vsel %vm1361, %v1340, %v1344
    %v1372 = vsel %vm1361, %v1358, %v1338
    %v1373 = vsel %vm1361, %v1360, %v1340
    %v1375 = vsel %vm73, %v1336, 0
    %1377 = vmatprep.subr.mxu0 %v1370
    %1378 = vmatpush1.msra.mxu0 %v1372
    %1379 = vmatprep.subr.mxu0 %v1371
    %1380 = vmatpush1.msra.mxu0 %v1373
    %1381 = vmatprep.subr.mxu0 0.0
    %1382 = vmatpush1.msra.mxu0 0.0
    %1383 = vmatprep.subr.mxu0 0.0
    %1384 = vmatpush1.msra.mxu0 0.0
    %1385 = vmatprep.subr.mxu0 0.0
    %1386 = vmatpush1.msra.mxu0 0.0
    %1387 = vmatprep.subr.mxu0 0.0
    %1388 = vmatpush1.msra.mxu0 0.0
    %1389 = vmatprep.subr.mxu0 0.0
    %1390 = vmatpush1.msra.mxu0 0.0
    %1391 = vmatprep.subr.mxu0 0.0
    %1392 = vmatpush1.msra.mxu0 0.0
    %1393 = vmatprep.subr.mxu0 0.0
    %1394 = vmatpush1.msra.mxu0 0.0
    %1395 = vmatprep.subr.mxu0 0.0
    %1396 = vmatpush1.msra.mxu0 0.0
    %1397 = vmatprep.subr.mxu0 0.0
    %1398 = vmatpush1.msra.mxu0 0.0
    %1399 = vmatprep.subr.mxu0 0.0
    %1400 = vmatpush1.msra.mxu0 0.0
    %1401 = vmatprep.subr.mxu0 0.0
    %1402 = vmatpush1.msra.mxu0 0.0
    %1403 = vmatprep.subr.mxu0 0.0
    %1404 = vmatpush1.msra.mxu0 0.0
    %1405 = vmatprep.subr.mxu0 0.0
    %1406 = vmatpush1.msra.mxu0 0.0
    %1407 = vmatprep.subr.mxu0 0.0
    %1408 = vmatpush1.msra.mxu0 0.0
    %1409 = vmatprep.subr.mxu0 0.0
    %1410 = vmatpush1.msra.mxu0 0.0
    %1411 = vmatprep.subr.mxu0 0.0
    %1412 = vmatpush1.msra.mxu0 0.0
    %1413 = vmatprep.subr.mxu0 0.0
    %1414 = vmatpush1.msra.mxu0 0.0
    %1415 = vmatprep.subr.mxu0 0.0
    %1416 = vmatpush1.msra.mxu0 0.0
    %1417 = vmatprep.subr.mxu0 0.0
    %1418 = vmatpush1.msra.mxu0 0.0
    %1419 = vmatprep.subr.mxu0 0.0
    %1420 = vmatpush1.msra.mxu0 0.0
    %1421 = vmatprep.subr.mxu0 0.0
    %1422 = vmatpush1.msra.mxu0 0.0
    %1423 = vmatprep.subr.mxu0 0.0
    %1424 = vmatpush1.msra.mxu0 0.0
    %1425 = vmatprep.subr.mxu0 0.0
    %1426 = vmatpush1.msra.mxu0 0.0
    %1427 = vmatprep.subr.mxu0 0.0
    %1428 = vmatpush1.msra.mxu0 0.0
    %1429 = vmatprep.subr.mxu0 0.0
    %1430 = vmatpush1.msra.mxu0 0.0
    %1431 = vmatprep.subr.mxu0 0.0
    %1432 = vmatpush1.msra.mxu0 0.0
    %1433 = vmatprep.subr.mxu0 0.0
    %1434 = vmatpush1.msra.mxu0 0.0
    %1435 = vmatprep.subr.mxu0 0.0
    %1436 = vmatpush1.msra.mxu0 0.0
    %1437 = vmatprep.subr.mxu0 0.0
    %1438 = vmatpush1.msra.mxu0 0.0
    %1439 = vmatprep.subr.mxu0 0.0
    %1440 = vmatpush1.msra.mxu0 0.0
    %1441 = vmatprep.mubr.f32.mxu0 0.0
    %1442 = vmatmul.mubr.f32.gmra.mrb[0].mxu0 %v1375
    %v1443 = vpop.f32.mrb[0].mxu0
    %v1444 = vadd.f32 0.0, %v1443
    %v1445 = vpop.f32.mrb[0].mxu0
    %v1446 = vadd.f32 0.0, %v1445
    %1447 = vdwg.mxu0
    %1448 = vmatprep.subr.mxu0 %v1366
    %1449 = vmatpush1.msra.mxu0 %v1368
    %1450 = vmatprep.subr.mxu0 %v1367
    %1451 = vmatpush1.msra.mxu0 %v1369
    %1452 = vmatprep.subr.mxu0 0.0
    %1453 = vmatpush1.msra.mxu0 0.0
    %1454 = vmatprep.subr.mxu0 0.0
    %1455 = vmatpush1.msra.mxu0 0.0
    %1456 = vmatprep.subr.mxu0 0.0
    %1457 = vmatpush1.msra.mxu0 0.0
    %1458 = vmatprep.subr.mxu0 0.0
    %1459 = vmatpush1.msra.mxu0 0.0
    %1460 = vmatprep.subr.mxu0 0.0
    %1461 = vmatpush1.msra.mxu0 0.0
    %1462 = vmatprep.subr.mxu0 0.0
    %1463 = vmatpush1.msra.mxu0 0.0
    %1464 = vmatprep.subr.mxu0 0.0
    %1465 = vmatpush1.msra.mxu0 0.0
    %1466 = vmatprep.subr.mxu0 0.0
    %1467 = vmatpush1.msra.mxu0 0.0
    %1468 = vmatprep.subr.mxu0 0.0
    %1469 = vmatpush1.msra.mxu0 0.0
    %1470 = vmatprep.subr.mxu0 0.0
    %1471 = vmatpush1.msra.mxu0 0.0
    %1472 = vmatprep.subr.mxu0 0.0
    %1473 = vmatpush1.msra.mxu0 0.0
    %1474 = vmatprep.subr.mxu0 0.0
    %1475 = vmatpush1.msra.mxu0 0.0
    %1476 = vmatprep.subr.mxu0 0.0
    %1477 = vmatpush1.msra.mxu0 0.0
    %1478 = vmatprep.subr.mxu0 0.0
    %1479 = vmatpush1.msra.mxu0 0.0
    %1480 = vmatprep.subr.mxu0 0.0
    %1481 = vmatpush1.msra.mxu0 0.0
    %1482 = vmatprep.subr.mxu0 0.0
    %1483 = vmatpush1.msra.mxu0 0.0
    %1484 = vmatprep.subr.mxu0 0.0
    %1485 = vmatpush1.msra.mxu0 0.0
    %1486 = vmatprep.subr.mxu0 0.0
    %1487 = vmatpush1.msra.mxu0 0.0
    %1488 = vmatprep.subr.mxu0 0.0
    %1489 = vmatpush1.msra.mxu0 0.0
    %1490 = vmatprep.subr.mxu0 0.0
    %1491 = vmatpush1.msra.mxu0 0.0
    %1492 = vmatprep.subr.mxu0 0.0
    %1493 = vmatpush1.msra.mxu0 0.0
    %1494 = vmatprep.subr.mxu0 0.0
    %1495 = vmatpush1.msra.mxu0 0.0
    %1496 = vmatprep.subr.mxu0 0.0
    %1497 = vmatpush1.msra.mxu0 0.0
    %1498 = vmatprep.subr.mxu0 0.0
    %1499 = vmatpush1.msra.mxu0 0.0
    %1500 = vmatprep.subr.mxu0 0.0
    %1501 = vmatpush1.msra.mxu0 0.0
    %1502 = vmatprep.subr.mxu0 0.0
    %1503 = vmatpush1.msra.mxu0 0.0
    %1504 = vmatprep.subr.mxu0 0.0
    %1505 = vmatpush1.msra.mxu0 0.0
    %1506 = vmatprep.subr.mxu0 0.0
    %1507 = vmatpush1.msra.mxu0 0.0
    %1508 = vmatprep.subr.mxu0 0.0
    %1509 = vmatpush1.msra.mxu0 0.0
    %1510 = vmatprep.subr.mxu0 0.0
    %1511 = vmatpush1.msra.mxu0 0.0
    %1512 = vmatprep.mubr.f32.mxu0 0.0
    %1513 = vmatmul.mubr.f32.gmra.mrb[0].mxu0 %v1375
    %v1514 = vpop.f32.mrb[0].mxu0
    %v1515 = vadd.f32 0.0, %v1514
    %v1516 = vpop.f32.mrb[0].mxu0
    %v1517 = vadd.f32 0.0, %v1516
    %1518 = vdwg.mxu0
    %1519 = vmatprep.subr.mxu0 %v1362
    %1520 = vmatpush1.msra.mxu0 %v1364
    %1521 = vmatprep.subr.mxu0 %v1363
    %1522 = vmatpush1.msra.mxu0 %v1365
    %1523 = vmatprep.subr.mxu0 0.0
    %1524 = vmatpush1.msra.mxu0 0.0
    %1525 = vmatprep.subr.mxu0 0.0
    %1526 = vmatpush1.msra.mxu0 0.0
    %1527 = vmatprep.subr.mxu0 0.0
    %1528 = vmatpush1.msra.mxu0 0.0
    %1529 = vmatprep.subr.mxu0 0.0
    %1530 = vmatpush1.msra.mxu0 0.0
    %1531 = vmatprep.subr.mxu0 0.0
    %1532 = vmatpush1.msra.mxu0 0.0
    %1533 = vmatprep.subr.mxu0 0.0
    %1534 = vmatpush1.msra.mxu0 0.0
    %1535 = vmatprep.subr.mxu0 0.0
    %1536 = vmatpush1.msra.mxu0 0.0
    %1537 = vmatprep.subr.mxu0 0.0
    %1538 = vmatpush1.msra.mxu0 0.0
    %1539 = vmatprep.subr.mxu0 0.0
    %1540 = vmatpush1.msra.mxu0 0.0
    %1541 = vmatprep.subr.mxu0 0.0
    %1542 = vmatpush1.msra.mxu0 0.0
    %1543 = vmatprep.subr.mxu0 0.0
    %1544 = vmatpush1.msra.mxu0 0.0
    %1545 = vmatprep.subr.mxu0 0.0
    %1546 = vmatpush1.msra.mxu0 0.0
    %1547 = vmatprep.subr.mxu0 0.0
    %1548 = vmatpush1.msra.mxu0 0.0
    %1549 = vmatprep.subr.mxu0 0.0
    %1550 = vmatpush1.msra.mxu0 0.0
    %1551 = vmatprep.subr.mxu0 0.0
    %1552 = vmatpush1.msra.mxu0 0.0
    %1553 = vmatprep.subr.mxu0 0.0
    %1554 = vmatpush1.msra.mxu0 0.0
    %1555 = vmatprep.subr.mxu0 0.0
    %1556 = vmatpush1.msra.mxu0 0.0
    %1557 = vmatprep.subr.mxu0 0.0
    %1558 = vmatpush1.msra.mxu0 0.0
    %1559 = vmatprep.subr.mxu0 0.0
    %1560 = vmatpush1.msra.mxu0 0.0
    %1561 = vmatprep.subr.mxu0 0.0
    %1562 = vmatpush1.msra.mxu0 0.0
    %1563 = vmatprep.subr.mxu0 0.0
    %1564 = vmatpush1.msra.mxu0 0.0
    %1565 = vmatprep.subr.mxu0 0.0
    %1566 = vmatpush1.msra.mxu0 0.0
    %1567 = vmatprep.subr.mxu0 0.0
    %1568 = vmatpush1.msra.mxu0 0.0
    %1569 = vmatprep.subr.mxu0 0.0
    %1570 = vmatpush1.msra.mxu0 0.0
    %1571 = vmatprep.subr.mxu0 0.0
    %1572 = vmatpush1.msra.mxu0 0.0
    %1573 = vmatprep.subr.mxu0 0.0
    %1574 = vmatpush1.msra.mxu0 0.0
    %1575 = vmatprep.subr.mxu0 0.0
    %1576 = vmatpush1.msra.mxu0 0.0
    %1577 = vmatprep.subr.mxu0 0.0
    %1578 = vmatpush1.msra.mxu0 0.0
    %1579 = vmatprep.subr.mxu0 0.0
    %1580 = vmatpush1.msra.mxu0 0.0
    %1581 = vmatprep.subr.mxu0 0.0
    %1582 = vmatpush1.msra.mxu0 0.0
    %1583 = vmatprep.mubr.f32.mxu0 0.0
    %1584 = vmatmul.mubr.f32.gmra.mrb[0].mxu0 %v1375
    %v1585 = vpop.f32.mrb[0].mxu0
    %v1586 = vadd.f32 0.0, %v1585
    %v1587 = vpop.f32.mrb[0].mxu0
    %v1588 = vadd.f32 0.0, %v1587
    %1589 = vdwg.mxu0
    %v1590 = vadd.f32 %v1329, %v1444
    %v1591 = vadd.f32 %v1330, %v1446
    %v1592 = vadd.f32 %v1331, %v1515
    %v1593 = vadd.f32 %v1332, %v1517
    %v1594 = vadd.f32 %v1333, %v1586
    %v1595 = vadd.f32 %v1334, %v1588
    %s1596 = scalar_lea.vmem %s5, 32
    %v1597 = vld [vmem:[%s1596] sm:$0xff]
    %v1599 = vsel %vm73, %v1597, 0
    %1601 = vmatprep.subr.mxu0 %v552
    %1602 = vmatpush1.msra.mxu0 %v551
    %1603 = vmatprep.subr.mxu0 %v558
    %1604 = vmatpush1.msra.mxu0 %v557
    %1605 = vmatprep.subr.mxu0 0.0
    %1606 = vmatpush1.msra.mxu0 0.0
    %1607 = vmatprep.subr.mxu0 0.0
    %1608 = vmatpush1.msra.mxu0 0.0
    %1609 = vmatprep.subr.mxu0 0.0
    %1610 = vmatpush1.msra.mxu0 0.0
    %1611 = vmatprep.subr.mxu0 0.0
    %1612 = vmatpush1.msra.mxu0 0.0
    %1613 = vmatprep.subr.mxu0 0.0
    %1614 = vmatpush1.msra.mxu0 0.0
    %1615 = vmatprep.subr.mxu0 0.0
    %1616 = vmatpush1.msra.mxu0 0.0
    %1617 = vmatprep.subr.mxu0 0.0
    %1618 = vmatpush1.msra.mxu0 0.0
    %1619 = vmatprep.subr.mxu0 0.0
    %1620 = vmatpush1.msra.mxu0 0.0
    %1621 = vmatprep.subr.mxu0 0.0
    %1622 = vmatpush1.msra.mxu0 0.0
    %1623 = vmatprep.subr.mxu0 0.0
    %1624 = vmatpush1.msra.mxu0 0.0
    %1625 = vmatprep.subr.mxu0 0.0
    %1626 = vmatpush1.msra.mxu0 0.0
    %1627 = vmatprep.subr.mxu0 0.0
    %1628 = vmatpush1.msra.mxu0 0.0
    %1629 = vmatprep.subr.mxu0 0.0
    %1630 = vmatpush1.msra.mxu0 0.0
    %1631 = vmatprep.subr.mxu0 0.0
    %1632 = vmatpush1.msra.mxu0 0.0
    %1633 = vmatprep.subr.mxu0 0.0
    %1634 = vmatpush1.msra.mxu0 0.0
    %1635 = vmatprep.subr.mxu0 0.0
    %1636 = vmatpush1.msra.mxu0 0.0
    %1637 = vmatprep.subr.mxu0 0.0
    %1638 = vmatpush1.msra.mxu0 0.0
    %1639 = vmatprep.subr.mxu0 0.0
    %1640 = vmatpush1.msra.mxu0 0.0
    %1641 = vmatprep.subr.mxu0 0.0
    %1642 = vmatpush1.msra.mxu0 0.0
    %1643 = vmatprep.subr.mxu0 0.0
    %1644 = vmatpush1.msra.mxu0 0.0
    %1645 = vmatprep.subr.mxu0 0.0
    %1646 = vmatpush1.msra.mxu0 0.0
    %1647 = vmatprep.subr.mxu0 0.0
    %1648 = vmatpush1.msra.mxu0 0.0
    %1649 = vmatprep.subr.mxu0 0.0
    %1650 = vmatpush1.msra.mxu0 0.0
    %1651 = vmatprep.subr.mxu0 0.0
    %1652 = vmatpush1.msra.mxu0 0.0
    %1653 = vmatprep.subr.mxu0 0.0
    %1654 = vmatpush1.msra.mxu0 0.0
    %1655 = vmatprep.subr.mxu0 0.0
    %1656 = vmatpush1.msra.mxu0 0.0
    %1657 = vmatprep.subr.mxu0 0.0
    %1658 = vmatpush1.msra.mxu0 0.0
    %1659 = vmatprep.subr.mxu0 0.0
    %1660 = vmatpush1.msra.mxu0 0.0
    %1661 = vmatprep.subr.mxu0 0.0
    %1662 = vmatpush1.msra.mxu0 0.0
    %1663 = vmatprep.subr.mxu0 0.0
    %1664 = vmatpush1.msra.mxu0 0.0
    %1665 = vmatprep.mubr.f32.mxu0 0.0
    %1666 = vmatmul.mubr.f32.gmra.mrb[0].mxu0 %v1599
    %v1667 = vpop.f32.mrb[0].mxu0
    %v1668 = vadd.f32 0.0, %v1667
    %v1669 = vpop.f32.mrb[0].mxu0
    %v1670 = vadd.f32 0.0, %v1669
    %1671 = vdwg.mxu0
    %1672 = vmatprep.subr.mxu0 %v554
    %1673 = vmatpush1.msra.mxu0 %v553
    %1674 = vmatprep.subr.mxu0 %v560
    %1675 = vmatpush1.msra.mxu0 %v559
    %1676 = vmatprep.subr.mxu0 0.0
    %1677 = vmatpush1.msra.mxu0 0.0
    %1678 = vmatprep.subr.mxu0 0.0
    %1679 = vmatpush1.msra.mxu0 0.0
    %1680 = vmatprep.subr.mxu0 0.0
    %1681 = vmatpush1.msra.mxu0 0.0
    %1682 = vmatprep.subr.mxu0 0.0
    %1683 = vmatpush1.msra.mxu0 0.0
    %1684 = vmatprep.subr.mxu0 0.0
    %1685 = vmatpush1.msra.mxu0 0.0
    %1686 = vmatprep.subr.mxu0 0.0
    %1687 = vmatpush1.msra.mxu0 0.0
    %1688 = vmatprep.subr.mxu0 0.0
    %1689 = vmatpush1.msra.mxu0 0.0
    %1690 = vmatprep.subr.mxu0 0.0
    %1691 = vmatpush1.msra.mxu0 0.0
    %1692 = vmatprep.subr.mxu0 0.0
    %1693 = vmatpush1.msra.mxu0 0.0
    %1694 = vmatprep.subr.mxu0 0.0
    %1695 = vmatpush1.msra.mxu0 0.0
    %1696 = vmatprep.subr.mxu0 0.0
    %1697 = vmatpush1.msra.mxu0 0.0
    %1698 = vmatprep.subr.mxu0 0.0
    %1699 = vmatpush1.msra.mxu0 0.0
    %1700 = vmatprep.subr.mxu0 0.0
    %1701 = vmatpush1.msra.mxu0 0.0
    %1702 = vmatprep.subr.mxu0 0.0
    %1703 = vmatpush1.msra.mxu0 0.0
    %1704 = vmatprep.subr.mxu0 0.0
    %1705 = vmatpush1.msra.mxu0 0.0
    %1706 = vmatprep.subr.mxu0 0.0
    %1707 = vmatpush1.msra.mxu0 0.0
    %1708 = vmatprep.subr.mxu0 0.0
    %1709 = vmatpush1.msra.mxu0 0.0
    %1710 = vmatprep.subr.mxu0 0.0
    %1711 = vmatpush1.msra.mxu0 0.0
    %1712 = vmatprep.subr.mxu0 0.0
    %1713 = vmatpush1.msra.mxu0 0.0
    %1714 = vmatprep.subr.mxu0 0.0
    %1715 = vmatpush1.msra.mxu0 0.0
    %1716 = vmatprep.subr.mxu0 0.0
    %1717 = vmatpush1.msra.mxu0 0.0
    %1718 = vmatprep.subr.mxu0 0.0
    %1719 = vmatpush1.msra.mxu0 0.0
    %1720 = vmatprep.subr.mxu0 0.0
    %1721 = vmatpush1.msra.mxu0 0.0
    %1722 = vmatprep.subr.mxu0 0.0
    %1723 = vmatpush1.msra.mxu0 0.0
    %1724 = vmatprep.subr.mxu0 0.0
    %1725 = vmatpush1.msra.mxu0 0.0
    %1726 = vmatprep.subr.mxu0 0.0
    %1727 = vmatpush1.msra.mxu0 0.0
    %1728 = vmatprep.subr.mxu0 0.0
    %1729 = vmatpush1.msra.mxu0 0.0
    %1730 = vmatprep.subr.mxu0 0.0
    %1731 = vmatpush1.msra.mxu0 0.0
    %1732 = vmatprep.subr.mxu0 0.0
    %1733 = vmatpush1.msra.mxu0 0.0
    %1734 = vmatprep.subr.mxu0 0.0
    %1735 = vmatpush1.msra.mxu0 0.0
    %1736 = vmatprep.mubr.f32.mxu0 0.0
    %1737 = vmatmul.mubr.f32.gmra.mrb[0].mxu0 %v1599
    %v1738 = vpop.f32.mrb[0].mxu0
    %v1739 = vadd.f32 0.0, %v1738
    %v1740 = vpop.f32.mrb[0].mxu0
    %v1741 = vadd.f32 0.0, %v1740
    %1742 = vdwg.mxu0
    %1743 = vmatprep.subr.mxu0 %v556
    %1744 = vmatpush1.msra.mxu0 %v555
    %1745 = vmatprep.subr.mxu0 %v562
    %1746 = vmatpush1.msra.mxu0 %v561
    %1747 = vmatprep.subr.mxu0 0.0
    %1748 = vmatpush1.msra.mxu0 0.0
    %1749 = vmatprep.subr.mxu0 0.0
    %1750 = vmatpush1.msra.mxu0 0.0
    %1751 = vmatprep.subr.mxu0 0.0
    %1752 = vmatpush1.msra.mxu0 0.0
    %1753 = vmatprep.subr.mxu0 0.0
    %1754 = vmatpush1.msra.mxu0 0.0
    %1755 = vmatprep.subr.mxu0 0.0
    %1756 = vmatpush1.msra.mxu0 0.0
    %1757 = vmatprep.subr.mxu0 0.0
    %1758 = vmatpush1.msra.mxu0 0.0
    %1759 = vmatprep.subr.mxu0 0.0
    %1760 = vmatpush1.msra.mxu0 0.0
    %1761 = vmatprep.subr.mxu0 0.0
    %1762 = vmatpush1.msra.mxu0 0.0
    %1763 = vmatprep.subr.mxu0 0.0
    %1764 = vmatpush1.msra.mxu0 0.0
    %1765 = vmatprep.subr.mxu0 0.0
    %1766 = vmatpush1.msra.mxu0 0.0
    %1767 = vmatprep.subr.mxu0 0.0
    %1768 = vmatpush1.msra.mxu0 0.0
    %1769 = vmatprep.subr.mxu0 0.0
    %1770 = vmatpush1.msra.mxu0 0.0
    %1771 = vmatprep.subr.mxu0 0.0
    %1772 = vmatpush1.msra.mxu0 0.0
    %1773 = vmatprep.subr.mxu0 0.0
    %1774 = vmatpush1.msra.mxu0 0.0
    %1775 = vmatprep.subr.mxu0 0.0
    %1776 = vmatpush1.msra.mxu0 0.0
    %1777 = vmatprep.subr.mxu0 0.0
    %1778 = vmatpush1.msra.mxu0 0.0
    %1779 = vmatprep.subr.mxu0 0.0
    %1780 = vmatpush1.msra.mxu0 0.0
    %1781 = vmatprep.subr.mxu0 0.0
    %1782 = vmatpush1.msra.mxu0 0.0
    %1783 = vmatprep.subr.mxu0 0.0
    %1784 = vmatpush1.msra.mxu0 0.0
    %1785 = vmatprep.subr.mxu0 0.0
    %1786 = vmatpush1.msra.mxu0 0.0
    %1787 = vmatprep.subr.mxu0 0.0
    %1788 = vmatpush1.msra.mxu0 0.0
    %1789 = vmatprep.subr.mxu0 0.0
    %1790 = vmatpush1.msra.mxu0 0.0
    %1791 = vmatprep.subr.mxu0 0.0
    %1792 = vmatpush1.msra.mxu0 0.0
    %1793 = vmatprep.subr.mxu0 0.0
    %1794 = vmatpush1.msra.mxu0 0.0
    %1795 = vmatprep.subr.mxu0 0.0
    %1796 = vmatpush1.msra.mxu0 0.0
    %1797 = vmatprep.subr.mxu0 0.0
    %1798 = vmatpush1.msra.mxu0 0.0
    %1799 = vmatprep.subr.mxu0 0.0
    %1800 = vmatpush1.msra.mxu0 0.0
    %1801 = vmatprep.subr.mxu0 0.0
    %1802 = vmatpush1.msra.mxu0 0.0
    %1803 = vmatprep.subr.mxu0 0.0
    %1804 = vmatpush1.msra.mxu0 0.0
    %1805 = vmatprep.subr.mxu0 0.0
    %1806 = vmatpush1.msra.mxu0 0.0
    %1807 = vmatprep.mubr.f32.mxu0 0.0
    %1808 = vmatmul.mubr.f32.gmra.mrb[0].mxu0 %v1599
    %v1809 = vpop.f32.mrb[0].mxu0
    %v1810 = vadd.f32 0.0, %v1809
    %v1811 = vpop.f32.mrb[0].mxu0
    %v1812 = vadd.f32 0.0, %v1811
    %1813 = vdwg.mxu0
    %v1814 = vadd.f32 %v1590, %v1668
    %v1815 = vadd.f32 %v1591, %v1670
    %v1816 = vadd.f32 %v1592, %v1739
    %v1817 = vadd.f32 %v1593, %v1741
    %v1818 = vadd.f32 %v1594, %v1810
    %v1819 = vadd.f32 %v1595, %v1812
    %s1820 = scalar_lea.vmem %s5, 40
    %v1821 = vld [vmem:[%s1820] sm:$0xff]
    %1822 = vrot.lane.b32.xlu0 %v551, 127
    %v1823 = vpop.permute.xlu0 %1822
    %1824 = vrot.lane.b32.xlu0 %v557, 127
    %v1825 = vpop.permute.xlu0 %1824
    %1826 = vrot.lane.b32.xlu0 %v552, 127
    %v1827 = vpop.permute.xlu0 %1826
    %1828 = vrot.lane.b32.xlu0 %v558, 127
    %v1829 = vpop.permute.xlu0 %1828
    %1830 = vrot.lane.b32.xlu0 %v553, 127
    %v1831 = vpop.permute.xlu0 %1830
    %1832 = vrot.lane.b32.xlu0 %v559, 127
    %v1833 = vpop.permute.xlu0 %1832
    %1834 = vrot.lane.b32.xlu0 %v554, 127
    %v1835 = vpop.permute.xlu0 %1834
    %1836 = vrot.lane.b32.xlu0 %v560, 127
    %v1837 = vpop.permute.xlu0 %1836
    %1838 = vrot.lane.b32.xlu0 %v555, 127
    %v1839 = vpop.permute.xlu0 %1838
    %1840 = vrot.lane.b32.xlu0 %v561, 127
    %v1841 = vpop.permute.xlu0 %1840
    %1842 = vrot.lane.b32.xlu0 %v556, 127
    %v1843 = vpop.permute.xlu0 %1842
    %1844 = vrot.lane.b32.xlu0 %v562, 127
    %v1845 = vpop.permute.xlu0 %1844
    %vm1846 = vcmp.lt.s32.totalorder %v589, 127
    %v1847 = vsel %vm1846, %v1839, %v1843
    %v1848 = vsel %vm1846, %v1841, %v1845
    %v1849 = vsel %vm1846, %v1835, %v1839
    %v1850 = vsel %vm1846, %v1837, %v1841
    %v1851 = vsel %vm1846, %v1831, %v1835
    %v1852 = vsel %vm1846, %v1833, %v1837
    %v1853 = vsel %vm1846, %v1827, %v1831
    %v1854 = vsel %vm1846, %v1829, %v1833
    %v1855 = vsel %vm1846, %v1823, %v1827
    %v1856 = vsel %vm1846, %v1825, %v1829
    %v1857 = vsel %vm1846, %v1843, %v1823
    %v1858 = vsel %vm1846, %v1845, %v1825
    %v1860 = vsel %vm73, %v1821, 0
    %1862 = vmatprep.subr.mxu0 %v1853
    %1863 = vmatpush1.msra.mxu0 %v1855
    %1864 = vmatprep.subr.mxu0 %v1854
    %1865 = vmatpush1.msra.mxu0 %v1856
    %1866 = vmatprep.subr.mxu0 0.0
    %1867 = vmatpush1.msra.mxu0 0.0
    %1868 = vmatprep.subr.mxu0 0.0
    %1869 = vmatpush1.msra.mxu0 0.0
    %1870 = vmatprep.subr.mxu0 0.0
    %1871 = vmatpush1.msra.mxu0 0.0
    %1872 = vmatprep.subr.mxu0 0.0
    %1873 = vmatpush1.msra.mxu0 0.0
    %1874 = vmatprep.subr.mxu0 0.0
    %1875 = vmatpush1.msra.mxu0 0.0
    %1876 = vmatprep.subr.mxu0 0.0
    %1877 = vmatpush1.msra.mxu0 0.0
    %1878 = vmatprep.subr.mxu0 0.0
    %1879 = vmatpush1.msra.mxu0 0.0
    %1880 = vmatprep.subr.mxu0 0.0
    %1881 = vmatpush1.msra.mxu0 0.0
    %1882 = vmatprep.subr.mxu0 0.0
    %1883 = vmatpush1.msra.mxu0 0.0
    %1884 = vmatprep.subr.mxu0 0.0
    %1885 = vmatpush1.msra.mxu0 0.0
    %1886 = vmatprep.subr.mxu0 0.0
    %1887 = vmatpush1.msra.mxu0 0.0
    %1888 = vmatprep.subr.mxu0 0.0
    %1889 = vmatpush1.msra.mxu0 0.0
    %1890 = vmatprep.subr.mxu0 0.0
    %1891 = vmatpush1.msra.mxu0 0.0
    %1892 = vmatprep.subr.mxu0 0.0
    %1893 = vmatpush1.msra.mxu0 0.0
    %1894 = vmatprep.subr.mxu0 0.0
    %1895 = vmatpush1.msra.mxu0 0.0
    %1896 = vmatprep.subr.mxu0 0.0
    %1897 = vmatpush1.msra.mxu0 0.0
    %1898 = vmatprep.subr.mxu0 0.0
    %1899 = vmatpush1.msra.mxu0 0.0
    %1900 = vmatprep.subr.mxu0 0.0
    %1901 = vmatpush1.msra.mxu0 0.0
    %1902 = vmatprep.subr.mxu0 0.0
    %1903 = vmatpush1.msra.mxu0 0.0
    %1904 = vmatprep.subr.mxu0 0.0
    %1905 = vmatpush1.msra.mxu0 0.0
    %1906 = vmatprep.subr.mxu0 0.0
    %1907 = vmatpush1.msra.mxu0 0.0
    %1908 = vmatprep.subr.mxu0 0.0
    %1909 = vmatpush1.msra.mxu0 0.0
    %1910 = vmatprep.subr.mxu0 0.0
    %1911 = vmatpush1.msra.mxu0 0.0
    %1912 = vmatprep.subr.mxu0 0.0
    %1913 = vmatpush1.msra.mxu0 0.0
    %1914 = vmatprep.subr.mxu0 0.0
    %1915 = vmatpush1.msra.mxu0 0.0
    %1916 = vmatprep.subr.mxu0 0.0
    %1917 = vmatpush1.msra.mxu0 0.0
    %1918 = vmatprep.subr.mxu0 0.0
    %1919 = vmatpush1.msra.mxu0 0.0
    %1920 = vmatprep.subr.mxu0 0.0
    %1921 = vmatpush1.msra.mxu0 0.0
    %1922 = vmatprep.subr.mxu0 0.0
    %1923 = vmatpush1.msra.mxu0 0.0
    %1924 = vmatprep.subr.mxu0 0.0
    %1925 = vmatpush1.msra.mxu0 0.0
    %1926 = vmatprep.mubr.f32.mxu0 0.0
    %1927 = vmatmul.mubr.f32.gmra.mrb[0].mxu0 %v1860
    %v1928 = vpop.f32.mrb[0].mxu0
    %v1929 = vadd.f32 0.0, %v1928
    %v1930 = vpop.f32.mrb[0].mxu0
    %v1931 = vadd.f32 0.0, %v1930
    %1932 = vdwg.mxu0
    %1933 = vmatprep.subr.mxu0 %v1849
    %1934 = vmatpush1.msra.mxu0 %v1851
    %1935 = vmatprep.subr.mxu0 %v1850
    %1936 = vmatpush1.msra.mxu0 %v1852
    %1937 = vmatprep.subr.mxu0 0.0
    %1938 = vmatpush1.msra.mxu0 0.0
    %1939 = vmatprep.subr.mxu0 0.0
    %1940 = vmatpush1.msra.mxu0 0.0
    %1941 = vmatprep.subr.mxu0 0.0
    %1942 = vmatpush1.msra.mxu0 0.0
    %1943 = vmatprep.subr.mxu0 0.0
    %1944 = vmatpush1.msra.mxu0 0.0
    %1945 = vmatprep.subr.mxu0 0.0
    %1946 = vmatpush1.msra.mxu0 0.0
    %1947 = vmatprep.subr.mxu0 0.0
    %1948 = vmatpush1.msra.mxu0 0.0
    %1949 = vmatprep.subr.mxu0 0.0
    %1950 = vmatpush1.msra.mxu0 0.0
    %1951 = vmatprep.subr.mxu0 0.0
    %1952 = vmatpush1.msra.mxu0 0.0
    %1953 = vmatprep.subr.mxu0 0.0
    %1954 = vmatpush1.msra.mxu0 0.0
    %1955 = vmatprep.subr.mxu0 0.0
    %1956 = vmatpush1.msra.mxu0 0.0
    %1957 = vmatprep.subr.mxu0 0.0
    %1958 = vmatpush1.msra.mxu0 0.0
    %1959 = vmatprep.subr.mxu0 0.0
    %1960 = vmatpush1.msra.mxu0 0.0
    %1961 = vmatprep.subr.mxu0 0.0
    %1962 = vmatpush1.msra.mxu0 0.0
    %1963 = vmatprep.subr.mxu0 0.0
    %1964 = vmatpush1.msra.mxu0 0.0
    %1965 = vmatprep.subr.mxu0 0.0
    %1966 = vmatpush1.msra.mxu0 0.0
    %1967 = vmatprep.subr.mxu0 0.0
    %1968 = vmatpush1.msra.mxu0 0.0
    %1969 = vmatprep.subr.mxu0 0.0
    %1970 = vmatpush1.msra.mxu0 0.0
    %1971 = vmatprep.subr.mxu0 0.0
    %1972 = vmatpush1.msra.mxu0 0.0
    %1973 = vmatprep.subr.mxu0 0.0
    %1974 = vmatpush1.msra.mxu0 0.0
    %1975 = vmatprep.subr.mxu0 0.0
    %1976 = vmatpush1.msra.mxu0 0.0
    %1977 = vmatprep.subr.mxu0 0.0
    %1978 = vmatpush1.msra.mxu0 0.0
    %1979 = vmatprep.subr.mxu0 0.0
    %1980 = vmatpush1.msra.mxu0 0.0
    %1981 = vmatprep.subr.mxu0 0.0
    %1982 = vmatpush1.msra.mxu0 0.0
    %1983 = vmatprep.subr.mxu0 0.0
    %1984 = vmatpush1.msra.mxu0 0.0
    %1985 = vmatprep.subr.mxu0 0.0
    %1986 = vmatpush1.msra.mxu0 0.0
    %1987 = vmatprep.subr.mxu0 0.0
    %1988 = vmatpush1.msra.mxu0 0.0
    %1989 = vmatprep.subr.mxu0 0.0
    %1990 = vmatpush1.msra.mxu0 0.0
    %1991 = vmatprep.subr.mxu0 0.0
    %1992 = vmatpush1.msra.mxu0 0.0
    %1993 = vmatprep.subr.mxu0 0.0
    %1994 = vmatpush1.msra.mxu0 0.0
    %1995 = vmatprep.subr.mxu0 0.0
    %1996 = vmatpush1.msra.mxu0 0.0
    %1997 = vmatprep.mubr.f32.mxu0 0.0
    %1998 = vmatmul.mubr.f32.gmra.mrb[0].mxu0 %v1860
    %v1999 = vpop.f32.mrb[0].mxu0
    %v2000 = vadd.f32 0.0, %v1999
    %v2001 = vpop.f32.mrb[0].mxu0
    %v2002 = vadd.f32 0.0, %v2001
    %2003 = vdwg.mxu0
    %2004 = vmatprep.subr.mxu0 %v1857
    %2005 = vmatpush1.msra.mxu0 %v1847
    %2006 = vmatprep.subr.mxu0 %v1858
    %2007 = vmatpush1.msra.mxu0 %v1848
    %2008 = vmatprep.subr.mxu0 0.0
    %2009 = vmatpush1.msra.mxu0 0.0
    %2010 = vmatprep.subr.mxu0 0.0
    %2011 = vmatpush1.msra.mxu0 0.0
    %2012 = vmatprep.subr.mxu0 0.0
    %2013 = vmatpush1.msra.mxu0 0.0
    %2014 = vmatprep.subr.mxu0 0.0
    %2015 = vmatpush1.msra.mxu0 0.0
    %2016 = vmatprep.subr.mxu0 0.0
    %2017 = vmatpush1.msra.mxu0 0.0
    %2018 = vmatprep.subr.mxu0 0.0
    %2019 = vmatpush1.msra.mxu0 0.0
    %2020 = vmatprep.subr.mxu0 0.0
    %2021 = vmatpush1.msra.mxu0 0.0
    %2022 = vmatprep.subr.mxu0 0.0
    %2023 = vmatpush1.msra.mxu0 0.0
    %2024 = vmatprep.subr.mxu0 0.0
    %2025 = vmatpush1.msra.mxu0 0.0
    %2026 = vmatprep.subr.mxu0 0.0
    %2027 = vmatpush1.msra.mxu0 0.0
    %2028 = vmatprep.subr.mxu0 0.0
    %2029 = vmatpush1.msra.mxu0 0.0
    %2030 = vmatprep.subr.mxu0 0.0
    %2031 = vmatpush1.msra.mxu0 0.0
    %2032 = vmatprep.subr.mxu0 0.0
    %2033 = vmatpush1.msra.mxu0 0.0
    %2034 = vmatprep.subr.mxu0 0.0
    %2035 = vmatpush1.msra.mxu0 0.0
    %2036 = vmatprep.subr.mxu0 0.0
    %2037 = vmatpush1.msra.mxu0 0.0
    %2038 = vmatprep.subr.mxu0 0.0
    %2039 = vmatpush1.msra.mxu0 0.0
    %2040 = vmatprep.subr.mxu0 0.0
    %2041 = vmatpush1.msra.mxu0 0.0
    %2042 = vmatprep.subr.mxu0 0.0
    %2043 = vmatpush1.msra.mxu0 0.0
    %2044 = vmatprep.subr.mxu0 0.0
    %2045 = vmatpush1.msra.mxu0 0.0
    %2046 = vmatprep.subr.mxu0 0.0
    %2047 = vmatpush1.msra.mxu0 0.0
    %2048 = vmatprep.subr.mxu0 0.0
    %2049 = vmatpush1.msra.mxu0 0.0
    %2050 = vmatprep.subr.mxu0 0.0
    %2051 = vmatpush1.msra.mxu0 0.0
    %2052 = vmatprep.subr.mxu0 0.0
    %2053 = vmatpush1.msra.mxu0 0.0
    %2054 = vmatprep.subr.mxu0 0.0
    %2055 = vmatpush1.msra.mxu0 0.0
    %2056 = vmatprep.subr.mxu0 0.0
    %2057 = vmatpush1.msra.mxu0 0.0
    %2058 = vmatprep.subr.mxu0 0.0
    %2059 = vmatpush1.msra.mxu0 0.0
    %2060 = vmatprep.subr.mxu0 0.0
    %2061 = vmatpush1.msra.mxu0 0.0
    %2062 = vmatprep.subr.mxu0 0.0
    %2063 = vmatpush1.msra.mxu0 0.0
    %2064 = vmatprep.subr.mxu0 0.0
    %2065 = vmatpush1.msra.mxu0 0.0
    %2066 = vmatprep.subr.mxu0 0.0
    %2067 = vmatpush1.msra.mxu0 0.0
    %2068 = vmatprep.mubr.f32.mxu0 0.0
    %2069 = vmatmul.mubr.f32.gmra.mrb[0].mxu0 %v1860
    %v2070 = vpop.f32.mrb[0].mxu0
    %v2071 = vadd.f32 0.0, %v2070
    %v2072 = vpop.f32.mrb[0].mxu0
    %v2073 = vadd.f32 0.0, %v2072
    %2074 = vdwg.mxu0
    %v2075 = vadd.f32 %v1814, %v1929
    %v2076 = vadd.f32 %v1815, %v1931
    %v2077 = vadd.f32 %v1816, %v2000
    %v2078 = vadd.f32 %v1817, %v2002
    %v2079 = vadd.f32 %v1818, %v2071
    %v2080 = vadd.f32 %v1819, %v2073
    %s2081 = scalar_lea.vmem %s5, 48
    %v2082 = vld [vmem:[%s2081] sm:$0xff]
    %2083 = vrot.lane.b32.xlu0 %v551, 111
    %v2084 = vpop.permute.xlu0 %2083
    %2085 = vrot.lane.b32.xlu0 %v557, 111
    %v2086 = vpop.permute.xlu0 %2085
    %2087 = vrot.lane.b32.xlu0 %v552, 111
    %v2088 = vpop.permute.xlu0 %2087
    %2089 = vrot.lane.b32.xlu0 %v558, 111
    %v2090 = vpop.permute.xlu0 %2089
    %2091 = vrot.lane.b32.xlu0 %v553, 111
    %v2092 = vpop.permute.xlu0 %2091
    %2093 = vrot.lane.b32.xlu0 %v559, 111
    %v2094 = vpop.permute.xlu0 %2093
    %2095 = vrot.lane.b32.xlu0 %v554, 111
    %v2096 = vpop.permute.xlu0 %2095
    %2097 = vrot.lane.b32.xlu0 %v560, 111
    %v2098 = vpop.permute.xlu0 %2097
    %2099 = vrot.lane.b32.xlu0 %v555, 111
    %v2100 = vpop.permute.xlu0 %2099
    %2101 = vrot.lane.b32.xlu0 %v561, 111
    %v2102 = vpop.permute.xlu0 %2101
    %2103 = vrot.lane.b32.xlu0 %v556, 111
    %v2104 = vpop.permute.xlu0 %2103
    %2105 = vrot.lane.b32.xlu0 %v562, 111
    %v2106 = vpop.permute.xlu0 %2105
    %vm2107 = vcmp.lt.s32.totalorder %v589, 111
    %v2108 = vsel %vm2107, %v2100, %v2104
    %v2109 = vsel %vm2107, %v2102, %v2106
    %v2110 = vsel %vm2107, %v2096, %v2100
    %v2111 = vsel %vm2107, %v2098, %v2102
    %v2112 = vsel %vm2107, %v2092, %v2096
    %v2113 = vsel %vm2107, %v2094, %v2098
    %v2114 = vsel %vm2107, %v2088, %v2092
    %v2115 = vsel %vm2107, %v2090, %v2094
    %v2116 = vsel %vm2107, %v2084, %v2088
    %v2117 = vsel %vm2107, %v2086, %v2090
    %v2118 = vsel %vm2107, %v2104, %v2084
    %v2119 = vsel %vm2107, %v2106, %v2086
    %v2121 = vsel %vm73, %v2082, 0
    %2123 = vmatprep.subr.mxu0 %v2114
    %2124 = vmatpush1.msra.mxu0 %v2116
    %2125 = vmatprep.subr.mxu0 %v2115
    %2126 = vmatpush1.msra.mxu0 %v2117
    %2127 = vmatprep.subr.mxu0 0.0
    %2128 = vmatpush1.msra.mxu0 0.0
    %2129 = vmatprep.subr.mxu0 0.0
    %2130 = vmatpush1.msra.mxu0 0.0
    %2131 = vmatprep.subr.mxu0 0.0
    %2132 = vmatpush1.msra.mxu0 0.0
    %2133 = vmatprep.subr.mxu0 0.0
    %2134 = vmatpush1.msra.mxu0 0.0
    %2135 = vmatprep.subr.mxu0 0.0
    %2136 = vmatpush1.msra.mxu0 0.0
    %2137 = vmatprep.subr.mxu0 0.0
    %2138 = vmatpush1.msra.mxu0 0.0
    %2139 = vmatprep.subr.mxu0 0.0
    %2140 = vmatpush1.msra.mxu0 0.0
    %2141 = vmatprep.subr.mxu0 0.0
    %2142 = vmatpush1.msra.mxu0 0.0
    %2143 = vmatprep.subr.mxu0 0.0
    %2144 = vmatpush1.msra.mxu0 0.0
    %2145 = vmatprep.subr.mxu0 0.0
    %2146 = vmatpush1.msra.mxu0 0.0
    %2147 = vmatprep.subr.mxu0 0.0
    %2148 = vmatpush1.msra.mxu0 0.0
    %2149 = vmatprep.subr.mxu0 0.0
    %2150 = vmatpush1.msra.mxu0 0.0
    %2151 = vmatprep.subr.mxu0 0.0
    %2152 = vmatpush1.msra.mxu0 0.0
    %2153 = vmatprep.subr.mxu0 0.0
    %2154 = vmatpush1.msra.mxu0 0.0
    %2155 = vmatprep.subr.mxu0 0.0
    %2156 = vmatpush1.msra.mxu0 0.0
    %2157 = vmatprep.subr.mxu0 0.0
    %2158 = vmatpush1.msra.mxu0 0.0
    %2159 = vmatprep.subr.mxu0 0.0
    %2160 = vmatpush1.msra.mxu0 0.0
    %2161 = vmatprep.subr.mxu0 0.0
    %2162 = vmatpush1.msra.mxu0 0.0
    %2163 = vmatprep.subr.mxu0 0.0
    %2164 = vmatpush1.msra.mxu0 0.0
    %2165 = vmatprep.subr.mxu0 0.0
    %2166 = vmatpush1.msra.mxu0 0.0
    %2167 = vmatprep.subr.mxu0 0.0
    %2168 = vmatpush1.msra.mxu0 0.0
    %2169 = vmatprep.subr.mxu0 0.0
    %2170 = vmatpush1.msra.mxu0 0.0
    %2171 = vmatprep.subr.mxu0 0.0
    %2172 = vmatpush1.msra.mxu0 0.0
    %2173 = vmatprep.subr.mxu0 0.0
    %2174 = vmatpush1.msra.mxu0 0.0
    %2175 = vmatprep.subr.mxu0 0.0
    %2176 = vmatpush1.msra.mxu0 0.0
    %2177 = vmatprep.subr.mxu0 0.0
    %2178 = vmatpush1.msra.mxu0 0.0
    %2179 = vmatprep.subr.mxu0 0.0
    %2180 = vmatpush1.msra.mxu0 0.0
    %2181 = vmatprep.subr.mxu0 0.0
    %2182 = vmatpush1.msra.mxu0 0.0
    %2183 = vmatprep.subr.mxu0 0.0
    %2184 = vmatpush1.msra.mxu0 0.0
    %2185 = vmatprep.subr.mxu0 0.0
    %2186 = vmatpush1.msra.mxu0 0.0
    %2187 = vmatprep.mubr.f32.mxu0 0.0
    %2188 = vmatmul.mubr.f32.gmra.mrb[0].mxu0 %v2121
    %v2189 = vpop.f32.mrb[0].mxu0
    %v2190 = vadd.f32 0.0, %v2189
    %v2191 = vpop.f32.mrb[0].mxu0
    %v2192 = vadd.f32 0.0, %v2191
    %2193 = vdwg.mxu0
    %2194 = vmatprep.subr.mxu0 %v2110
    %2195 = vmatpush1.msra.mxu0 %v2112
    %2196 = vmatprep.subr.mxu0 %v2111
    %2197 = vmatpush1.msra.mxu0 %v2113
    %2198 = vmatprep.subr.mxu0 0.0
    %2199 = vmatpush1.msra.mxu0 0.0
    %2200 = vmatprep.subr.mxu0 0.0
    %2201 = vmatpush1.msra.mxu0 0.0
    %2202 = vmatprep.subr.mxu0 0.0
    %2203 = vmatpush1.msra.mxu0 0.0
    %2204 = vmatprep.subr.mxu0 0.0
    %2205 = vmatpush1.msra.mxu0 0.0
    %2206 = vmatprep.subr.mxu0 0.0
    %2207 = vmatpush1.msra.mxu0 0.0
    %2208 = vmatprep.subr.mxu0 0.0
    %2209 = vmatpush1.msra.mxu0 0.0
    %2210 = vmatprep.subr.mxu0 0.0
    %2211 = vmatpush1.msra.mxu0 0.0
    %2212 = vmatprep.subr.mxu0 0.0
    %2213 = vmatpush1.msra.mxu0 0.0
    %2214 = vmatprep.subr.mxu0 0.0
    %2215 = vmatpush1.msra.mxu0 0.0
    %2216 = vmatprep.subr.mxu0 0.0
    %2217 = vmatpush1.msra.mxu0 0.0
    %2218 = vmatprep.subr.mxu0 0.0
    %2219 = vmatpush1.msra.mxu0 0.0
    %2220 = vmatprep.subr.mxu0 0.0
    %2221 = vmatpush1.msra.mxu0 0.0
    %2222 = vmatprep.subr.mxu0 0.0
    %2223 = vmatpush1.msra.mxu0 0.0
    %2224 = vmatprep.subr.mxu0 0.0
    %2225 = vmatpush1.msra.mxu0 0.0
    %2226 = vmatprep.subr.mxu0 0.0
    %2227 = vmatpush1.msra.mxu0 0.0
    %2228 = vmatprep.subr.mxu0 0.0
    %2229 = vmatpush1.msra.mxu0 0.0
    %2230 = vmatprep.subr.mxu0 0.0
    %2231 = vmatpush1.msra.mxu0 0.0
    %2232 = vmatprep.subr.mxu0 0.0
    %2233 = vmatpush1.msra.mxu0 0.0
    %2234 = vmatprep.subr.mxu0 0.0
    %2235 = vmatpush1.msra.mxu0 0.0
    %2236 = vmatprep.subr.mxu0 0.0
    %2237 = vmatpush1.msra.mxu0 0.0
    %2238 = vmatprep.subr.mxu0 0.0
    %2239 = vmatpush1.msra.mxu0 0.0
    %2240 = vmatprep.subr.mxu0 0.0
    %2241 = vmatpush1.msra.mxu0 0.0
    %2242 = vmatprep.subr.mxu0 0.0
    %2243 = vmatpush1.msra.mxu0 0.0
    %2244 = vmatprep.subr.mxu0 0.0
    %2245 = vmatpush1.msra.mxu0 0.0
    %2246 = vmatprep.subr.mxu0 0.0
    %2247 = vmatpush1.msra.mxu0 0.0
    %2248 = vmatprep.subr.mxu0 0.0
    %2249 = vmatpush1.msra.mxu0 0.0
    %2250 = vmatprep.subr.mxu0 0.0
    %2251 = vmatpush1.msra.mxu0 0.0
    %2252 = vmatprep.subr.mxu0 0.0
    %2253 = vmatpush1.msra.mxu0 0.0
    %2254 = vmatprep.subr.mxu0 0.0
    %2255 = vmatpush1.msra.mxu0 0.0
    %2256 = vmatprep.subr.mxu0 0.0
    %2257 = vmatpush1.msra.mxu0 0.0
    %2258 = vmatprep.mubr.f32.mxu0 0.0
    %2259 = vmatmul.mubr.f32.gmra.mrb[0].mxu0 %v2121
    %v2260 = vpop.f32.mrb[0].mxu0
    %v2261 = vadd.f32 0.0, %v2260
    %v2262 = vpop.f32.mrb[0].mxu0
    %v2263 = vadd.f32 0.0, %v2262
    %2264 = vdwg.mxu0
    %2265 = vmatprep.subr.mxu0 %v2118
    %2266 = vmatpush1.msra.mxu0 %v2108
    %2267 = vmatprep.subr.mxu0 %v2119
    %2268 = vmatpush1.msra.mxu0 %v2109
    %2269 = vmatprep.subr.mxu0 0.0
    %2270 = vmatpush1.msra.mxu0 0.0
    %2271 = vmatprep.subr.mxu0 0.0
    %2272 = vmatpush1.msra.mxu0 0.0
    %2273 = vmatprep.subr.mxu0 0.0
    %2274 = vmatpush1.msra.mxu0 0.0
    %2275 = vmatprep.subr.mxu0 0.0
    %2276 = vmatpush1.msra.mxu0 0.0
    %2277 = vmatprep.subr.mxu0 0.0
    %2278 = vmatpush1.msra.mxu0 0.0
    %2279 = vmatprep.subr.mxu0 0.0
    %2280 = vmatpush1.msra.mxu0 0.0
    %2281 = vmatprep.subr.mxu0 0.0
    %2282 = vmatpush1.msra.mxu0 0.0
    %2283 = vmatprep.subr.mxu0 0.0
    %2284 = vmatpush1.msra.mxu0 0.0
    %2285 = vmatprep.subr.mxu0 0.0
    %2286 = vmatpush1.msra.mxu0 0.0
    %2287 = vmatprep.subr.mxu0 0.0
    %2288 = vmatpush1.msra.mxu0 0.0
    %2289 = vmatprep.subr.mxu0 0.0
    %2290 = vmatpush1.msra.mxu0 0.0
    %2291 = vmatprep.subr.mxu0 0.0
    %2292 = vmatpush1.msra.mxu0 0.0
    %2293 = vmatprep.subr.mxu0 0.0
    %2294 = vmatpush1.msra.mxu0 0.0
    %2295 = vmatprep.subr.mxu0 0.0
    %2296 = vmatpush1.msra.mxu0 0.0
    %2297 = vmatprep.subr.mxu0 0.0
    %2298 = vmatpush1.msra.mxu0 0.0
    %2299 = vmatprep.subr.mxu0 0.0
    %2300 = vmatpush1.msra.mxu0 0.0
    %2301 = vmatprep.subr.mxu0 0.0
    %2302 = vmatpush1.msra.mxu0 0.0
    %2303 = vmatprep.subr.mxu0 0.0
    %2304 = vmatpush1.msra.mxu0 0.0
    %2305 = vmatprep.subr.mxu0 0.0
    %2306 = vmatpush1.msra.mxu0 0.0
    %2307 = vmatprep.subr.mxu0 0.0
    %2308 = vmatpush1.msra.mxu0 0.0
    %2309 = vmatprep.subr.mxu0 0.0
    %2310 = vmatpush1.msra.mxu0 0.0
    %2311 = vmatprep.subr.mxu0 0.0
    %2312 = vmatpush1.msra.mxu0 0.0
    %2313 = vmatprep.subr.mxu0 0.0
    %2314 = vmatpush1.msra.mxu0 0.0
    %2315 = vmatprep.subr.mxu0 0.0
    %2316 = vmatpush1.msra.mxu0 0.0
    %2317 = vmatprep.subr.mxu0 0.0
    %2318 = vmatpush1.msra.mxu0 0.0
    %2319 = vmatprep.subr.mxu0 0.0
    %2320 = vmatpush1.msra.mxu0 0.0
    %2321 = vmatprep.subr.mxu0 0.0
    %2322 = vmatpush1.msra.mxu0 0.0
    %2323 = vmatprep.subr.mxu0 0.0
    %2324 = vmatpush1.msra.mxu0 0.0
    %2325 = vmatprep.subr.mxu0 0.0
    %2326 = vmatpush1.msra.mxu0 0.0
    %2327 = vmatprep.subr.mxu0 0.0
    %2328 = vmatpush1.msra.mxu0 0.0
    %2329 = vmatprep.mubr.f32.mxu0 0.0
    %2330 = vmatmul.mubr.f32.gmra.mrb[0].mxu0 %v2121
    %v2331 = vpop.f32.mrb[0].mxu0
    %v2332 = vadd.f32 0.0, %v2331
    %v2333 = vpop.f32.mrb[0].mxu0
    %v2334 = vadd.f32 0.0, %v2333
    %2335 = vdwg.mxu0
    %v2336 = vadd.f32 %v2075, %v2190
    %v2337 = vadd.f32 %v2076, %v2192
    %v2338 = vadd.f32 %v2077, %v2261
    %v2339 = vadd.f32 %v2078, %v2263
    %v2340 = vadd.f32 %v2079, %v2332
    %v2341 = vadd.f32 %v2080, %v2334
    %s2342 = scalar_lea.vmem %s5, 56
    %v2343 = vld [vmem:[%s2342] sm:$0xff]
    %2344 = vrot.lane.b32.xlu0 %v551, 110
    %v2345 = vpop.permute.xlu0 %2344
    %2346 = vrot.lane.b32.xlu0 %v557, 110
    %v2347 = vpop.permute.xlu0 %2346
    %2348 = vrot.lane.b32.xlu0 %v552, 110
    %v2349 = vpop.permute.xlu0 %2348
    %2350 = vrot.lane.b32.xlu0 %v558, 110
    %v2351 = vpop.permute.xlu0 %2350
    %2352 = vrot.lane.b32.xlu0 %v553, 110
    %v2353 = vpop.permute.xlu0 %2352
    %2354 = vrot.lane.b32.xlu0 %v559, 110
    %v2355 = vpop.permute.xlu0 %2354
    %2356 = vrot.lane.b32.xlu0 %v554, 110
    %v2357 = vpop.permute.xlu0 %2356
    %2358 = vrot.lane.b32.xlu0 %v560, 110
    %v2359 = vpop.permute.xlu0 %2358
    %2360 = vrot.lane.b32.xlu0 %v555, 110
    %v2361 = vpop.permute.xlu0 %2360
    %2362 = vrot.lane.b32.xlu0 %v561, 110
    %v2363 = vpop.permute.xlu0 %2362
    %2364 = vrot.lane.b32.xlu0 %v556, 110
    %v2365 = vpop.permute.xlu0 %2364
    %2366 = vrot.lane.b32.xlu0 %v562, 110
    %v2367 = vpop.permute.xlu0 %2366
    %vm2368 = vcmp.lt.s32.totalorder %v589, 110
    %v2369 = vsel %vm2368, %v2361, %v2365
    %v2370 = vsel %vm2368, %v2363, %v2367
    %v2371 = vsel %vm2368, %v2357, %v2361
    %v2372 = vsel %vm2368, %v2359, %v2363
    %v2373 = vsel %vm2368, %v2353, %v2357
    %v2374 = vsel %vm2368, %v2355, %v2359
    %v2375 = vsel %vm2368, %v2349, %v2353
    %v2376 = vsel %vm2368, %v2351, %v2355
    %v2377 = vsel %vm2368, %v2345, %v2349
    %v2378 = vsel %vm2368, %v2347, %v2351
    %v2379 = vsel %vm2368, %v2365, %v2345
    %v2380 = vsel %vm2368, %v2367, %v2347
    %v2382 = vsel %vm73, %v2343, 0
    %2384 = vmatprep.subr.mxu0 %v2375
    %2385 = vmatpush1.msra.mxu0 %v2377
    %2386 = vmatprep.subr.mxu0 %v2376
    %2387 = vmatpush1.msra.mxu0 %v2378
    %2388 = vmatprep.subr.mxu0 0.0
    %2389 = vmatpush1.msra.mxu0 0.0
    %2390 = vmatprep.subr.mxu0 0.0
    %2391 = vmatpush1.msra.mxu0 0.0
    %2392 = vmatprep.subr.mxu0 0.0
    %2393 = vmatpush1.msra.mxu0 0.0
    %2394 = vmatprep.subr.mxu0 0.0
    %2395 = vmatpush1.msra.mxu0 0.0
    %2396 = vmatprep.subr.mxu0 0.0
    %2397 = vmatpush1.msra.mxu0 0.0
    %2398 = vmatprep.subr.mxu0 0.0
    %2399 = vmatpush1.msra.mxu0 0.0
    %2400 = vmatprep.subr.mxu0 0.0
    %2401 = vmatpush1.msra.mxu0 0.0
    %2402 = vmatprep.subr.mxu0 0.0
    %2403 = vmatpush1.msra.mxu0 0.0
    %2404 = vmatprep.subr.mxu0 0.0
    %2405 = vmatpush1.msra.mxu0 0.0
    %2406 = vmatprep.subr.mxu0 0.0
    %2407 = vmatpush1.msra.mxu0 0.0
    %2408 = vmatprep.subr.mxu0 0.0
    %2409 = vmatpush1.msra.mxu0 0.0
    %2410 = vmatprep.subr.mxu0 0.0
    %2411 = vmatpush1.msra.mxu0 0.0
    %2412 = vmatprep.subr.mxu0 0.0
    %2413 = vmatpush1.msra.mxu0 0.0
    %2414 = vmatprep.subr.mxu0 0.0
    %2415 = vmatpush1.msra.mxu0 0.0
    %2416 = vmatprep.subr.mxu0 0.0
    %2417 = vmatpush1.msra.mxu0 0.0
    %2418 = vmatprep.subr.mxu0 0.0
    %2419 = vmatpush1.msra.mxu0 0.0
    %2420 = vmatprep.subr.mxu0 0.0
    %2421 = vmatpush1.msra.mxu0 0.0
    %2422 = vmatprep.subr.mxu0 0.0
    %2423 = vmatpush1.msra.mxu0 0.0
    %2424 = vmatprep.subr.mxu0 0.0
    %2425 = vmatpush1.msra.mxu0 0.0
    %2426 = vmatprep.subr.mxu0 0.0
    %2427 = vmatpush1.msra.mxu0 0.0
    %2428 = vmatprep.subr.mxu0 0.0
    %2429 = vmatpush1.msra.mxu0 0.0
    %2430 = vmatprep.subr.mxu0 0.0
    %2431 = vmatpush1.msra.mxu0 0.0
    %2432 = vmatprep.subr.mxu0 0.0
    %2433 = vmatpush1.msra.mxu0 0.0
    %2434 = vmatprep.subr.mxu0 0.0
    %2435 = vmatpush1.msra.mxu0 0.0
    %2436 = vmatprep.subr.mxu0 0.0
    %2437 = vmatpush1.msra.mxu0 0.0
    %2438 = vmatprep.subr.mxu0 0.0
    %2439 = vmatpush1.msra.mxu0 0.0
    %2440 = vmatprep.subr.mxu0 0.0
    %2441 = vmatpush1.msra.mxu0 0.0
    %2442 = vmatprep.subr.mxu0 0.0
    %2443 = vmatpush1.msra.mxu0 0.0
    %2444 = vmatprep.subr.mxu0 0.0
    %2445 = vmatpush1.msra.mxu0 0.0
    %2446 = vmatprep.subr.mxu0 0.0
    %2447 = vmatpush1.msra.mxu0 0.0
    %2448 = vmatprep.mubr.f32.mxu0 0.0
    %2449 = vmatmul.mubr.f32.gmra.mrb[0].mxu0 %v2382
    %v2450 = vpop.f32.mrb[0].mxu0
    %v2451 = vadd.f32 0.0, %v2450
    %v2452 = vpop.f32.mrb[0].mxu0
    %v2453 = vadd.f32 0.0, %v2452
    %2454 = vdwg.mxu0
    %2455 = vmatprep.subr.mxu0 %v2371
    %2456 = vmatpush1.msra.mxu0 %v2373
    %2457 = vmatprep.subr.mxu0 %v2372
    %2458 = vmatpush1.msra.mxu0 %v2374
    %2459 = vmatprep.subr.mxu0 0.0
    %2460 = vmatpush1.msra.mxu0 0.0
    %2461 = vmatprep.subr.mxu0 0.0
    %2462 = vmatpush1.msra.mxu0 0.0
    %2463 = vmatprep.subr.mxu0 0.0
    %2464 = vmatpush1.msra.mxu0 0.0
    %2465 = vmatprep.subr.mxu0 0.0
    %2466 = vmatpush1.msra.mxu0 0.0
    %2467 = vmatprep.subr.mxu0 0.0
    %2468 = vmatpush1.msra.mxu0 0.0
    %2469 = vmatprep.subr.mxu0 0.0
    %2470 = vmatpush1.msra.mxu0 0.0
    %2471 = vmatprep.subr.mxu0 0.0
    %2472 = vmatpush1.msra.mxu0 0.0
    %2473 = vmatprep.subr.mxu0 0.0
    %2474 = vmatpush1.msra.mxu0 0.0
    %2475 = vmatprep.subr.mxu0 0.0
    %2476 = vmatpush1.msra.mxu0 0.0
    %2477 = vmatprep.subr.mxu0 0.0
    %2478 = vmatpush1.msra.mxu0 0.0
    %2479 = vmatprep.subr.mxu0 0.0
    %2480 = vmatpush1.msra.mxu0 0.0
    %2481 = vmatprep.subr.mxu0 0.0
    %2482 = vmatpush1.msra.mxu0 0.0
    %2483 = vmatprep.subr.mxu0 0.0
    %2484 = vmatpush1.msra.mxu0 0.0
    %2485 = vmatprep.subr.mxu0 0.0
    %2486 = vmatpush1.msra.mxu0 0.0
    %2487 = vmatprep.subr.mxu0 0.0
    %2488 = vmatpush1.msra.mxu0 0.0
    %2489 = vmatprep.subr.mxu0 0.0
    %2490 = vmatpush1.msra.mxu0 0.0
    %2491 = vmatprep.subr.mxu0 0.0
    %2492 = vmatpush1.msra.mxu0 0.0
    %2493 = vmatprep.subr.mxu0 0.0
    %2494 = vmatpush1.msra.mxu0 0.0
    %2495 = vmatprep.subr.mxu0 0.0
    %2496 = vmatpush1.msra.mxu0 0.0
    %2497 = vmatprep.subr.mxu0 0.0
    %2498 = vmatpush1.msra.mxu0 0.0
    %2499 = vmatprep.subr.mxu0 0.0
    %2500 = vmatpush1.msra.mxu0 0.0
    %2501 = vmatprep.subr.mxu0 0.0
    %2502 = vmatpush1.msra.mxu0 0.0
    %2503 = vmatprep.subr.mxu0 0.0
    %2504 = vmatpush1.msra.mxu0 0.0
    %2505 = vmatprep.subr.mxu0 0.0
    %2506 = vmatpush1.msra.mxu0 0.0
    %2507 = vmatprep.subr.mxu0 0.0
    %2508 = vmatpush1.msra.mxu0 0.0
    %2509 = vmatprep.subr.mxu0 0.0
    %2510 = vmatpush1.msra.mxu0 0.0
    %2511 = vmatprep.subr.mxu0 0.0
    %2512 = vmatpush1.msra.mxu0 0.0
    %2513 = vmatprep.subr.mxu0 0.0
    %2514 = vmatpush1.msra.mxu0 0.0
    %2515 = vmatprep.subr.mxu0 0.0
    %2516 = vmatpush1.msra.mxu0 0.0
    %2517 = vmatprep.subr.mxu0 0.0
    %2518 = vmatpush1.msra.mxu0 0.0
    %2519 = vmatprep.mubr.f32.mxu0 0.0
    %2520 = vmatmul.mubr.f32.gmra.mrb[0].mxu0 %v2382
    %v2521 = vpop.f32.mrb[0].mxu0
    %v2522 = vadd.f32 0.0, %v2521
    %v2523 = vpop.f32.mrb[0].mxu0
    %v2524 = vadd.f32 0.0, %v2523
    %2525 = vdwg.mxu0
    %2526 = vmatprep.subr.mxu0 %v2379
    %2527 = vmatpush1.msra.mxu0 %v2369
    %2528 = vmatprep.subr.mxu0 %v2380
    %2529 = vmatpush1.msra.mxu0 %v2370
    %2530 = vmatprep.subr.mxu0 0.0
    %2531 = vmatpush1.msra.mxu0 0.0
    %2532 = vmatprep.subr.mxu0 0.0
    %2533 = vmatpush1.msra.mxu0 0.0
    %2534 = vmatprep.subr.mxu0 0.0
    %2535 = vmatpush1.msra.mxu0 0.0
    %2536 = vmatprep.subr.mxu0 0.0
    %2537 = vmatpush1.msra.mxu0 0.0
    %2538 = vmatprep.subr.mxu0 0.0
    %2539 = vmatpush1.msra.mxu0 0.0
    %2540 = vmatprep.subr.mxu0 0.0
    %2541 = vmatpush1.msra.mxu0 0.0
    %2542 = vmatprep.subr.mxu0 0.0
    %2543 = vmatpush1.msra.mxu0 0.0
    %2544 = vmatprep.subr.mxu0 0.0
    %2545 = vmatpush1.msra.mxu0 0.0
    %2546 = vmatprep.subr.mxu0 0.0
    %2547 = vmatpush1.msra.mxu0 0.0
    %2548 = vmatprep.subr.mxu0 0.0
    %2549 = vmatpush1.msra.mxu0 0.0
    %2550 = vmatprep.subr.mxu0 0.0
    %2551 = vmatpush1.msra.mxu0 0.0
    %2552 = vmatprep.subr.mxu0 0.0
    %2553 = vmatpush1.msra.mxu0 0.0
    %2554 = vmatprep.subr.mxu0 0.0
    %2555 = vmatpush1.msra.mxu0 0.0
    %2556 = vmatprep.subr.mxu0 0.0
    %2557 = vmatpush1.msra.mxu0 0.0
    %2558 = vmatprep.subr.mxu0 0.0
    %2559 = vmatpush1.msra.mxu0 0.0
    %2560 = vmatprep.subr.mxu0 0.0
    %2561 = vmatpush1.msra.mxu0 0.0
    %2562 = vmatprep.subr.mxu0 0.0
    %2563 = vmatpush1.msra.mxu0 0.0
    %2564 = vmatprep.subr.mxu0 0.0
    %2565 = vmatpush1.msra.mxu0 0.0
    %2566 = vmatprep.subr.mxu0 0.0
    %2567 = vmatpush1.msra.mxu0 0.0
    %2568 = vmatprep.subr.mxu0 0.0
    %2569 = vmatpush1.msra.mxu0 0.0
    %2570 = vmatprep.subr.mxu0 0.0
    %2571 = vmatpush1.msra.mxu0 0.0
    %2572 = vmatprep.subr.mxu0 0.0
    %2573 = vmatpush1.msra.mxu0 0.0
    %2574 = vmatprep.subr.mxu0 0.0
    %2575 = vmatpush1.msra.mxu0 0.0
    %2576 = vmatprep.subr.mxu0 0.0
    %2577 = vmatpush1.msra.mxu0 0.0
    %2578 = vmatprep.subr.mxu0 0.0
    %2579 = vmatpush1.msra.mxu0 0.0
    %2580 = vmatprep.subr.mxu0 0.0
    %2581 = vmatpush1.msra.mxu0 0.0
    %2582 = vmatprep.subr.mxu0 0.0
    %2583 = vmatpush1.msra.mxu0 0.0
    %2584 = vmatprep.subr.mxu0 0.0
    %2585 = vmatpush1.msra.mxu0 0.0
    %2586 = vmatprep.subr.mxu0 0.0
    %2587 = vmatpush1.msra.mxu0 0.0
    %2588 = vmatprep.subr.mxu0 0.0
    %2589 = vmatpush1.msra.mxu0 0.0
    %2590 = vmatprep.mubr.f32.mxu0 0.0
    %2591 = vmatmul.mubr.f32.gmra.mrb[0].mxu0 %v2382
    %v2592 = vpop.f32.mrb[0].mxu0
    %v2593 = vadd.f32 0.0, %v2592
    %v2594 = vpop.f32.mrb[0].mxu0
    %v2595 = vadd.f32 0.0, %v2594
    %2596 = vdwg.mxu0
    %v2597 = vadd.f32 %v2336, %v2451
    %v2598 = vadd.f32 %v2337, %v2453
    %v2599 = vadd.f32 %v2338, %v2522
    %v2600 = vadd.f32 %v2339, %v2524
    %v2601 = vadd.f32 %v2340, %v2593
    %v2602 = vadd.f32 %v2341, %v2595
    %s2603 = scalar_lea.vmem %s5, 64
    %v2604 = vld [vmem:[%s2603] sm:$0xff]
    %2605 = vrot.lane.b32.xlu0 %v551, 109
    %v2606 = vpop.permute.xlu0 %2605
    %2607 = vrot.lane.b32.xlu0 %v557, 109
    %v2608 = vpop.permute.xlu0 %2607
    %2609 = vrot.lane.b32.xlu0 %v552, 109
    %v2610 = vpop.permute.xlu0 %2609
    %2611 = vrot.lane.b32.xlu0 %v558, 109
    %v2612 = vpop.permute.xlu0 %2611
    %2613 = vrot.lane.b32.xlu0 %v553, 109
    %v2614 = vpop.permute.xlu0 %2613
    %2615 = vrot.lane.b32.xlu0 %v559, 109
    %v2616 = vpop.permute.xlu0 %2615
    %2617 = vrot.lane.b32.xlu0 %v554, 109
    %v2618 = vpop.permute.xlu0 %2617
    %2619 = vrot.lane.b32.xlu0 %v560, 109
    %v2620 = vpop.permute.xlu0 %2619
    %2621 = vrot.lane.b32.xlu0 %v555, 109
    %v2622 = vpop.permute.xlu0 %2621
    %2623 = vrot.lane.b32.xlu0 %v561, 109
    %v2624 = vpop.permute.xlu0 %2623
    %2625 = vrot.lane.b32.xlu0 %v556, 109
    %v2626 = vpop.permute.xlu0 %2625
    %2627 = vrot.lane.b32.xlu0 %v562, 109
    %v2628 = vpop.permute.xlu0 %2627
    %vm2629 = vcmp.lt.s32.totalorder %v589, 109
    %v2630 = vsel %vm2629, %v2622, %v2626
    %v2631 = vsel %vm2629, %v2624, %v2628
    %v2632 = vsel %vm2629, %v2618, %v2622
    %v2633 = vsel %vm2629, %v2620, %v2624
    %v2634 = vsel %vm2629, %v2614, %v2618
    %v2635 = vsel %vm2629, %v2616, %v2620
    %v2636 = vsel %vm2629, %v2610, %v2614
    %v2637 = vsel %vm2629, %v2612, %v2616
    %v2638 = vsel %vm2629, %v2606, %v2610
    %v2639 = vsel %vm2629, %v2608, %v2612
    %v2640 = vsel %vm2629, %v2626, %v2606
    %v2641 = vsel %vm2629, %v2628, %v2608
    %v2643 = vsel %vm73, %v2604, 0
    %2645 = vmatprep.subr.mxu0 %v2636
    %2646 = vmatpush1.msra.mxu0 %v2638
    %2647 = vmatprep.subr.mxu0 %v2637
    %2648 = vmatpush1.msra.mxu0 %v2639
    %2649 = vmatprep.subr.mxu0 0.0
    %2650 = vmatpush1.msra.mxu0 0.0
    %2651 = vmatprep.subr.mxu0 0.0
    %2652 = vmatpush1.msra.mxu0 0.0
    %2653 = vmatprep.subr.mxu0 0.0
    %2654 = vmatpush1.msra.mxu0 0.0
    %2655 = vmatprep.subr.mxu0 0.0
    %2656 = vmatpush1.msra.mxu0 0.0
    %2657 = vmatprep.subr.mxu0 0.0
    %2658 = vmatpush1.msra.mxu0 0.0
    %2659 = vmatprep.subr.mxu0 0.0
    %2660 = vmatpush1.msra.mxu0 0.0
    %2661 = vmatprep.subr.mxu0 0.0
    %2662 = vmatpush1.msra.mxu0 0.0
    %2663 = vmatprep.subr.mxu0 0.0
    %2664 = vmatpush1.msra.mxu0 0.0
    %2665 = vmatprep.subr.mxu0 0.0
    %2666 = vmatpush1.msra.mxu0 0.0
    %2667 = vmatprep.subr.mxu0 0.0
    %2668 = vmatpush1.msra.mxu0 0.0
    %2669 = vmatprep.subr.mxu0 0.0
    %2670 = vmatpush1.msra.mxu0 0.0
    %2671 = vmatprep.subr.mxu0 0.0
    %2672 = vmatpush1.msra.mxu0 0.0
    %2673 = vmatprep.subr.mxu0 0.0
    %2674 = vmatpush1.msra.mxu0 0.0
    %2675 = vmatprep.subr.mxu0 0.0
    %2676 = vmatpush1.msra.mxu0 0.0
    %2677 = vmatprep.subr.mxu0 0.0
    %2678 = vmatpush1.msra.mxu0 0.0
    %2679 = vmatprep.subr.mxu0 0.0
    %2680 = vmatpush1.msra.mxu0 0.0
    %2681 = vmatprep.subr.mxu0 0.0
    %2682 = vmatpush1.msra.mxu0 0.0
    %2683 = vmatprep.subr.mxu0 0.0
    %2684 = vmatpush1.msra.mxu0 0.0
    %2685 = vmatprep.subr.mxu0 0.0
    %2686 = vmatpush1.msra.mxu0 0.0
    %2687 = vmatprep.subr.mxu0 0.0
    %2688 = vmatpush1.msra.mxu0 0.0
    %2689 = vmatprep.subr.mxu0 0.0
    %2690 = vmatpush1.msra.mxu0 0.0
    %2691 = vmatprep.subr.mxu0 0.0
    %2692 = vmatpush1.msra.mxu0 0.0
    %2693 = vmatprep.subr.mxu0 0.0
    %2694 = vmatpush1.msra.mxu0 0.0
    %2695 = vmatprep.subr.mxu0 0.0
    %2696 = vmatpush1.msra.mxu0 0.0
    %2697 = vmatprep.subr.mxu0 0.0
    %2698 = vmatpush1.msra.mxu0 0.0
    %2699 = vmatprep.subr.mxu0 0.0
    %2700 = vmatpush1.msra.mxu0 0.0
    %2701 = vmatprep.subr.mxu0 0.0
    %2702 = vmatpush1.msra.mxu0 0.0
    %2703 = vmatprep.subr.mxu0 0.0
    %2704 = vmatpush1.msra.mxu0 0.0
    %2705 = vmatprep.subr.mxu0 0.0
    %2706 = vmatpush1.msra.mxu0 0.0
    %2707 = vmatprep.subr.mxu0 0.0
    %2708 = vmatpush1.msra.mxu0 0.0
    %2709 = vmatprep.mubr.f32.mxu0 0.0
    %2710 = vmatmul.mubr.f32.gmra.mrb[0].mxu0 %v2643
    %v2711 = vpop.f32.mrb[0].mxu0
    %v2712 = vadd.f32 0.0, %v2711
    %v2713 = vpop.f32.mrb[0].mxu0
    %v2714 = vadd.f32 0.0, %v2713
    %2715 = vdwg.mxu0
    %2716 = vmatprep.subr.mxu0 %v2632
    %2717 = vmatpush1.msra.mxu0 %v2634
    %2718 = vmatprep.subr.mxu0 %v2633
    %2719 = vmatpush1.msra.mxu0 %v2635
    %2720 = vmatprep.subr.mxu0 0.0
    %2721 = vmatpush1.msra.mxu0 0.0
    %2722 = vmatprep.subr.mxu0 0.0
    %2723 = vmatpush1.msra.mxu0 0.0
    %2724 = vmatprep.subr.mxu0 0.0
    %2725 = vmatpush1.msra.mxu0 0.0
    %2726 = vmatprep.subr.mxu0 0.0
    %2727 = vmatpush1.msra.mxu0 0.0
    %2728 = vmatprep.subr.mxu0 0.0
    %2729 = vmatpush1.msra.mxu0 0.0
    %2730 = vmatprep.subr.mxu0 0.0
    %2731 = vmatpush1.msra.mxu0 0.0
    %2732 = vmatprep.subr.mxu0 0.0
    %2733 = vmatpush1.msra.mxu0 0.0
    %2734 = vmatprep.subr.mxu0 0.0
    %2735 = vmatpush1.msra.mxu0 0.0
    %2736 = vmatprep.subr.mxu0 0.0
    %2737 = vmatpush1.msra.mxu0 0.0
    %2738 = vmatprep.subr.mxu0 0.0
    %2739 = vmatpush1.msra.mxu0 0.0
    %2740 = vmatprep.subr.mxu0 0.0
    %2741 = vmatpush1.msra.mxu0 0.0
    %2742 = vmatprep.subr.mxu0 0.0
    %2743 = vmatpush1.msra.mxu0 0.0
    %2744 = vmatprep.subr.mxu0 0.0
    %2745 = vmatpush1.msra.mxu0 0.0
    %2746 = vmatprep.subr.mxu0 0.0
    %2747 = vmatpush1.msra.mxu0 0.0
    %2748 = vmatprep.subr.mxu0 0.0
    %2749 = vmatpush1.msra.mxu0 0.0
    %2750 = vmatprep.subr.mxu0 0.0
    %2751 = vmatpush1.msra.mxu0 0.0
    %2752 = vmatprep.subr.mxu0 0.0
    %2753 = vmatpush1.msra.mxu0 0.0
    %2754 = vmatprep.subr.mxu0 0.0
    %2755 = vmatpush1.msra.mxu0 0.0
    %2756 = vmatprep.subr.mxu0 0.0
    %2757 = vmatpush1.msra.mxu0 0.0
    %2758 = vmatprep.subr.mxu0 0.0
    %2759 = vmatpush1.msra.mxu0 0.0
    %2760 = vmatprep.subr.mxu0 0.0
    %2761 = vmatpush1.msra.mxu0 0.0
    %2762 = vmatprep.subr.mxu0 0.0
    %2763 = vmatpush1.msra.mxu0 0.0
    %2764 = vmatprep.subr.mxu0 0.0
    %2765 = vmatpush1.msra.mxu0 0.0
    %2766 = vmatprep.subr.mxu0 0.0
    %2767 = vmatpush1.msra.mxu0 0.0
    %2768 = vmatprep.subr.mxu0 0.0
    %2769 = vmatpush1.msra.mxu0 0.0
    %2770 = vmatprep.subr.mxu0 0.0
    %2771 = vmatpush1.msra.mxu0 0.0
    %2772 = vmatprep.subr.mxu0 0.0
    %2773 = vmatpush1.msra.mxu0 0.0
    %2774 = vmatprep.subr.mxu0 0.0
    %2775 = vmatpush1.msra.mxu0 0.0
    %2776 = vmatprep.subr.mxu0 0.0
    %2777 = vmatpush1.msra.mxu0 0.0
    %2778 = vmatprep.subr.mxu0 0.0
    %2779 = vmatpush1.msra.mxu0 0.0
    %2780 = vmatprep.mubr.f32.mxu0 0.0
    %2781 = vmatmul.mubr.f32.gmra.mrb[0].mxu0 %v2643
    %v2782 = vpop.f32.mrb[0].mxu0
    %v2783 = vadd.f32 0.0, %v2782
    %v2784 = vpop.f32.mrb[0].mxu0
    %v2785 = vadd.f32 0.0, %v2784
    %2786 = vdwg.mxu0
    %2787 = vmatprep.subr.mxu0 %v2640
    %2788 = vmatpush1.msra.mxu0 %v2630
    %2789 = vmatprep.subr.mxu0 %v2641
    %2790 = vmatpush1.msra.mxu0 %v2631
    %2791 = vmatprep.subr.mxu0 0.0
    %2792 = vmatpush1.msra.mxu0 0.0
    %2793 = vmatprep.subr.mxu0 0.0
    %2794 = vmatpush1.msra.mxu0 0.0
    %2795 = vmatprep.subr.mxu0 0.0
    %2796 = vmatpush1.msra.mxu0 0.0
    %2797 = vmatprep.subr.mxu0 0.0
    %2798 = vmatpush1.msra.mxu0 0.0
    %2799 = vmatprep.subr.mxu0 0.0
    %2800 = vmatpush1.msra.mxu0 0.0
    %2801 = vmatprep.subr.mxu0 0.0
    %2802 = vmatpush1.msra.mxu0 0.0
    %2803 = vmatprep.subr.mxu0 0.0
    %2804 = vmatpush1.msra.mxu0 0.0
    %2805 = vmatprep.subr.mxu0 0.0
    %2806 = vmatpush1.msra.mxu0 0.0
    %2807 = vmatprep.subr.mxu0 0.0
    %2808 = vmatpush1.msra.mxu0 0.0
    %2809 = vmatprep.subr.mxu0 0.0
    %2810 = vmatpush1.msra.mxu0 0.0
    %2811 = vmatprep.subr.mxu0 0.0
    %2812 = vmatpush1.msra.mxu0 0.0
    %2813 = vmatprep.subr.mxu0 0.0
    %2814 = vmatpush1.msra.mxu0 0.0
    %2815 = vmatprep.subr.mxu0 0.0
    %2816 = vmatpush1.msra.mxu0 0.0
    %2817 = vmatprep.subr.mxu0 0.0
    %2818 = vmatpush1.msra.mxu0 0.0
    %2819 = vmatprep.subr.mxu0 0.0
    %2820 = vmatpush1.msra.mxu0 0.0
    %2821 = vmatprep.subr.mxu0 0.0
    %2822 = vmatpush1.msra.mxu0 0.0
    %2823 = vmatprep.subr.mxu0 0.0
    %2824 = vmatpush1.msra.mxu0 0.0
    %2825 = vmatprep.subr.mxu0 0.0
    %2826 = vmatpush1.msra.mxu0 0.0
    %2827 = vmatprep.subr.mxu0 0.0
    %2828 = vmatpush1.msra.mxu0 0.0
    %2829 = vmatprep.subr.mxu0 0.0
    %2830 = vmatpush1.msra.mxu0 0.0
    %2831 = vmatprep.subr.mxu0 0.0
    %2832 = vmatpush1.msra.mxu0 0.0
    %2833 = vmatprep.subr.mxu0 0.0
    %2834 = vmatpush1.msra.mxu0 0.0
    %2835 = vmatprep.subr.mxu0 0.0
    %2836 = vmatpush1.msra.mxu0 0.0
    %2837 = vmatprep.subr.mxu0 0.0
    %2838 = vmatpush1.msra.mxu0 0.0
    %2839 = vmatprep.subr.mxu0 0.0
    %2840 = vmatpush1.msra.mxu0 0.0
    %2841 = vmatprep.subr.mxu0 0.0
    %2842 = vmatpush1.msra.mxu0 0.0
    %2843 = vmatprep.subr.mxu0 0.0
    %2844 = vmatpush1.msra.mxu0 0.0
    %2845 = vmatprep.subr.mxu0 0.0
    %2846 = vmatpush1.msra.mxu0 0.0
    %2847 = vmatprep.subr.mxu0 0.0
    %2848 = vmatpush1.msra.mxu0 0.0
    %2849 = vmatprep.subr.mxu0 0.0
    %2850 = vmatpush1.msra.mxu0 0.0
    %2851 = vmatprep.mubr.f32.mxu0 0.0
    %2852 = vmatmul.mubr.f32.gmra.mrb[0].mxu0 %v2643
    %v2853 = vpop.f32.mrb[0].mxu0
    %v2854 = vadd.f32 0.0, %v2853
    %v2855 = vpop.f32.mrb[0].mxu0
    %v2856 = vadd.f32 0.0, %v2855
    %2857 = vdwg.mxu0
    %v2858 = vadd.f32 %v2597, %v2712
    %v2859 = vadd.f32 %v2598, %v2714
    %v2860 = vadd.f32 %v2599, %v2783
    %v2861 = vadd.f32 %v2600, %v2785
    %v2862 = vadd.f32 %v2601, %v2854
    %v2863 = vadd.f32 %v2602, %v2856
    %v2864 = vld [vmem:[%s6] sm:$0xff]
    %2866 = vset.pattern.permute.xlu0 0
    %2867 = vperm.xlu0 %2866, %v2864
    %v2868 = vpop.permute.xlu0 %2867
    %v2870 = vmul.f32 %v2858, %v2868
    %v2871 = vmul.f32 %v2859, %v2868
    %v2872 = vmul.f32 %v2860, %v2868
    %v2873 = vmul.f32 %v2861, %v2868
    %v2874 = vmul.f32 %v2862, %v2868
    %v2875 = vmul.f32 %v2863, %v2868
    %v2876 = vld [vmem:[%s7] sm:$0xff]
    %2878 = vset.pattern.permute.xlu0 0
    %2879 = vperm.xlu0 %2878, %v2876
    %v2880 = vpop.permute.xlu0 %2879
    %v2882 = vadd.f32 %v2870, %v2880
    %v2883 = vadd.f32 %v2871, %v2880
    %v2884 = vadd.f32 %v2872, %v2880
    %v2885 = vadd.f32 %v2873, %v2880
    %v2886 = vadd.f32 %v2874, %v2880
    %v2887 = vadd.f32 %v2875, %v2880
    %v2888 = vmax.f32 %v2882, 0.0
    %v2889 = vmax.f32 %v2883, 0.0
    %v2890 = vmax.f32 %v2884, 0.0
    %v2891 = vmax.f32 %v2885, 0.0
    %v2892 = vmax.f32 %v2886, 0.0
    %v2893 = vmax.f32 %v2887, 0.0
    %v2894 = vmul.f32 %v2888, %v530
    %v2895 = vmul.f32 %v2889, %v534
    %v2896 = vmul.f32 %v2890, %v538
    %v2897 = vmul.f32 %v2891, %v542
    %v2898 = vmul.f32 %v2892, %v546
    %v2899 = vmul.f32 %v2893, %v550
    %v2900 = vld [vmem:[%s8] sm:$0xff]
    %2901 = vrot.lane.b32.xlu0 %v2894, 19
    %v2902 = vpop.permute.xlu0 %2901
    %2903 = vrot.lane.b32.xlu0 %v2895, 19
    %v2904 = vpop.permute.xlu0 %2903
    %2905 = vrot.lane.b32.xlu0 %v2896, 19
    %v2906 = vpop.permute.xlu0 %2905
    %2907 = vrot.lane.b32.xlu0 %v2897, 19
    %v2908 = vpop.permute.xlu0 %2907
    %2909 = vrot.lane.b32.xlu0 %v2898, 19
    %v2910 = vpop.permute.xlu0 %2909
    %2911 = vrot.lane.b32.xlu0 %v2899, 19
    %v2912 = vpop.permute.xlu0 %2911
    %v2913 = vsel %vm590, %v2910, %v2912
    %v2914 = vsel %vm590, %v2908, %v2910
    %v2915 = vsel %vm590, %v2906, %v2908
    %v2916 = vsel %vm590, %v2904, %v2906
    %v2917 = vsel %vm590, %v2902, %v2904
    %v2918 = vsel %vm590, %v2912, %v2902
    %s2919 = scalar_lea.vmem %s8, 8
    %v2920 = vld [vmem:[%s2919] sm:$0xff]
    %2921 = vrot.lane.b32.xlu0 %v2894, 18
    %v2922 = vpop.permute.xlu0 %2921
    %2923 = vrot.lane.b32.xlu0 %v2895, 18
    %v2924 = vpop.permute.xlu0 %2923
    %2925 = vrot.lane.b32.xlu0 %v2896, 18
    %v2926 = vpop.permute.xlu0 %2925
    %2927 = vrot.lane.b32.xlu0 %v2897, 18
    %v2928 = vpop.permute.xlu0 %2927
    %2929 = vrot.lane.b32.xlu0 %v2898, 18
    %v2930 = vpop.permute.xlu0 %2929
    %2931 = vrot.lane.b32.xlu0 %v2899, 18
    %v2932 = vpop.permute.xlu0 %2931
    %v2933 = vsel %vm629, %v2930, %v2932
    %v2934 = vsel %vm629, %v2928, %v2930
    %v2935 = vsel %vm629, %v2926, %v2928
    %v2936 = vsel %vm629, %v2924, %v2926
    %v2937 = vsel %vm629, %v2922, %v2924
    %v2938 = vsel %vm629, %v2932, %v2922
    %vm2939 = vcmask 64512
    %v2941 = vsel %vm2939, %v2920, 0
    %2943 = vmatprep.subr.mxu0 %v2937
    %2944 = vmatpush1.msra.mxu0 %v2938
    %2945 = vmatprep.subr.mxu0 0.0
    %2946 = vmatpush1.msra.mxu0 0.0
    %2947 = vmatprep.subr.mxu0 0.0
    %2948 = vmatpush1.msra.mxu0 0.0
    %2949 = vmatprep.subr.mxu0 0.0
    %2950 = vmatpush1.msra.mxu0 0.0
    %2951 = vmatprep.subr.mxu0 0.0
    %2952 = vmatpush1.msra.mxu0 0.0
    %2953 = vmatprep.subr.mxu0 0.0
    %2954 = vmatpush1.msra.mxu0 0.0
    %2955 = vmatprep.subr.mxu0 0.0
    %2956 = vmatpush1.msra.mxu0 0.0
    %2957 = vmatprep.subr.mxu0 0.0
    %2958 = vmatpush1.msra.mxu0 0.0
    %2959 = vmatprep.subr.mxu0 0.0
    %2960 = vmatpush1.msra.mxu0 0.0
    %2961 = vmatprep.subr.mxu0 0.0
    %2962 = vmatpush1.msra.mxu0 0.0
    %2963 = vmatprep.subr.mxu0 0.0
    %2964 = vmatpush1.msra.mxu0 0.0
    %2965 = vmatprep.subr.mxu0 0.0
    %2966 = vmatpush1.msra.mxu0 0.0
    %2967 = vmatprep.subr.mxu0 0.0
    %2968 = vmatpush1.msra.mxu0 0.0
    %2969 = vmatprep.subr.mxu0 0.0
    %2970 = vmatpush1.msra.mxu0 0.0
    %2971 = vmatprep.subr.mxu0 0.0
    %2972 = vmatpush1.msra.mxu0 0.0
    %2973 = vmatprep.subr.mxu0 0.0
    %2974 = vmatpush1.msra.mxu0 0.0
    %2975 = vmatprep.subr.mxu0 0.0
    %2976 = vmatpush1.msra.mxu0 0.0
    %2977 = vmatprep.subr.mxu0 0.0
    %2978 = vmatpush1.msra.mxu0 0.0
    %2979 = vmatprep.subr.mxu0 0.0
    %2980 = vmatpush1.msra.mxu0 0.0
    %2981 = vmatprep.subr.mxu0 0.0
    %2982 = vmatpush1.msra.mxu0 0.0
    %2983 = vmatprep.subr.mxu0 0.0
    %2984 = vmatpush1.msra.mxu0 0.0
    %2985 = vmatprep.subr.mxu0 0.0
    %2986 = vmatpush1.msra.mxu0 0.0
    %2987 = vmatprep.subr.mxu0 0.0
    %2988 = vmatpush1.msra.mxu0 0.0
    %2989 = vmatprep.subr.mxu0 0.0
    %2990 = vmatpush1.msra.mxu0 0.0
    %2991 = vmatprep.subr.mxu0 0.0
    %2992 = vmatpush1.msra.mxu0 0.0
    %2993 = vmatprep.subr.mxu0 0.0
    %2994 = vmatpush1.msra.mxu0 0.0
    %2995 = vmatprep.subr.mxu0 0.0
    %2996 = vmatpush1.msra.mxu0 0.0
    %2997 = vmatprep.subr.mxu0 0.0
    %2998 = vmatpush1.msra.mxu0 0.0
    %2999 = vmatprep.subr.mxu0 0.0
    %3000 = vmatpush1.msra.mxu0 0.0
    %3001 = vmatprep.subr.mxu0 0.0
    %3002 = vmatpush1.msra.mxu0 0.0
    %3003 = vmatprep.subr.mxu0 0.0
    %3004 = vmatpush1.msra.mxu0 0.0
    %3005 = vmatprep.subr.mxu0 0.0
    %3006 = vmatpush1.msra.mxu0 0.0
    %3007 = vmatprep.mubr.f32.mxu0 0.0
    %3008 = vmatmul.mubr.f32.gmra.mrb[0].mxu0 %v2941
    %v3009 = vpop.f32.mrb[0].mxu0
    %v3010 = vadd.f32 0.0, %v3009
    %v3011 = vpop.f32.mrb[0].mxu0
    %v3012 = vadd.f32 0.0, %v3011
    %3013 = vdwg.mxu0
    %3014 = vmatprep.subr.mxu0 %v2935
    %3015 = vmatpush1.msra.mxu0 %v2936
    %3016 = vmatprep.subr.mxu0 0.0
    %3017 = vmatpush1.msra.mxu0 0.0
    %3018 = vmatprep.subr.mxu0 0.0
    %3019 = vmatpush1.msra.mxu0 0.0
    %3020 = vmatprep.subr.mxu0 0.0
    %3021 = vmatpush1.msra.mxu0 0.0
    %3022 = vmatprep.subr.mxu0 0.0
    %3023 = vmatpush1.msra.mxu0 0.0
    %3024 = vmatprep.subr.mxu0 0.0
    %3025 = vmatpush1.msra.mxu0 0.0
    %3026 = vmatprep.subr.mxu0 0.0
    %3027 = vmatpush1.msra.mxu0 0.0
    %3028 = vmatprep.subr.mxu0 0.0
    %3029 = vmatpush1.msra.mxu0 0.0
    %3030 = vmatprep.subr.mxu0 0.0
    %3031 = vmatpush1.msra.mxu0 0.0
    %3032 = vmatprep.subr.mxu0 0.0
    %3033 = vmatpush1.msra.mxu0 0.0
    %3034 = vmatprep.subr.mxu0 0.0
    %3035 = vmatpush1.msra.mxu0 0.0
    %3036 = vmatprep.subr.mxu0 0.0
    %3037 = vmatpush1.msra.mxu0 0.0
    %3038 = vmatprep.subr.mxu0 0.0
    %3039 = vmatpush1.msra.mxu0 0.0
    %3040 = vmatprep.subr.mxu0 0.0
    %3041 = vmatpush1.msra.mxu0 0.0
    %3042 = vmatprep.subr.mxu0 0.0
    %3043 = vmatpush1.msra.mxu0 0.0
    %3044 = vmatprep.subr.mxu0 0.0
    %3045 = vmatpush1.msra.mxu0 0.0
    %3046 = vmatprep.subr.mxu0 0.0
    %3047 = vmatpush1.msra.mxu0 0.0
    %3048 = vmatprep.subr.mxu0 0.0
    %3049 = vmatpush1.msra.mxu0 0.0
    %3050 = vmatprep.subr.mxu0 0.0
    %3051 = vmatpush1.msra.mxu0 0.0
    %3052 = vmatprep.subr.mxu0 0.0
    %3053 = vmatpush1.msra.mxu0 0.0
    %3054 = vmatprep.subr.mxu0 0.0
    %3055 = vmatpush1.msra.mxu0 0.0
    %3056 = vmatprep.subr.mxu0 0.0
    %3057 = vmatpush1.msra.mxu0 0.0
    %3058 = vmatprep.subr.mxu0 0.0
    %3059 = vmatpush1.msra.mxu0 0.0
    %3060 = vmatprep.subr.mxu0 0.0
    %3061 = vmatpush1.msra.mxu0 0.0
    %3062 = vmatprep.subr.mxu0 0.0
    %3063 = vmatpush1.msra.mxu0 0.0
    %3064 = vmatprep.subr.mxu0 0.0
    %3065 = vmatpush1.msra.mxu0 0.0
    %3066 = vmatprep.subr.mxu0 0.0
    %3067 = vmatpush1.msra.mxu0 0.0
    %3068 = vmatprep.subr.mxu0 0.0
    %3069 = vmatpush1.msra.mxu0 0.0
    %3070 = vmatprep.subr.mxu0 0.0
    %3071 = vmatpush1.msra.mxu0 0.0
    %3072 = vmatprep.subr.mxu0 0.0
    %3073 = vmatpush1.msra.mxu0 0.0
    %3074 = vmatprep.subr.mxu0 0.0
    %3075 = vmatpush1.msra.mxu0 0.0
    %3076 = vmatprep.subr.mxu0 0.0
    %3077 = vmatpush1.msra.mxu0 0.0
    %3078 = vmatprep.mubr.f32.mxu0 0.0
    %3079 = vmatmul.mubr.f32.gmra.mrb[0].mxu0 %v2941
    %v3080 = vpop.f32.mrb[0].mxu0
    %v3081 = vadd.f32 0.0, %v3080
    %v3082 = vpop.f32.mrb[0].mxu0
    %v3083 = vadd.f32 0.0, %v3082
    %3084 = vdwg.mxu0
    %3085 = vmatprep.subr.mxu0 %v2933
    %3086 = vmatpush1.msra.mxu0 %v2934
    %3087 = vmatprep.subr.mxu0 0.0
    %3088 = vmatpush1.msra.mxu0 0.0
    %3089 = vmatprep.subr.mxu0 0.0
    %3090 = vmatpush1.msra.mxu0 0.0
    %3091 = vmatprep.subr.mxu0 0.0
    %3092 = vmatpush1.msra.mxu0 0.0
    %3093 = vmatprep.subr.mxu0 0.0
    %3094 = vmatpush1.msra.mxu0 0.0
    %3095 = vmatprep.subr.mxu0 0.0
    %3096 = vmatpush1.msra.mxu0 0.0
    %3097 = vmatprep.subr.mxu0 0.0
    %3098 = vmatpush1.msra.mxu0 0.0
    %3099 = vmatprep.subr.mxu0 0.0
    %3100 = vmatpush1.msra.mxu0 0.0
    %3101 = vmatprep.subr.mxu0 0.0
    %3102 = vmatpush1.msra.mxu0 0.0
    %3103 = vmatprep.subr.mxu0 0.0
    %3104 = vmatpush1.msra.mxu0 0.0
    %3105 = vmatprep.subr.mxu0 0.0
    %3106 = vmatpush1.msra.mxu0 0.0
    %3107 = vmatprep.subr.mxu0 0.0
    %3108 = vmatpush1.msra.mxu0 0.0
    %3109 = vmatprep.subr.mxu0 0.0
    %3110 = vmatpush1.msra.mxu0 0.0
    %3111 = vmatprep.subr.mxu0 0.0
    %3112 = vmatpush1.msra.mxu0 0.0
    %3113 = vmatprep.subr.mxu0 0.0
    %3114 = vmatpush1.msra.mxu0 0.0
    %3115 = vmatprep.subr.mxu0 0.0
    %3116 = vmatpush1.msra.mxu0 0.0
    %3117 = vmatprep.subr.mxu0 0.0
    %3118 = vmatpush1.msra.mxu0 0.0
    %3119 = vmatprep.subr.mxu0 0.0
    %3120 = vmatpush1.msra.mxu0 0.0
    %3121 = vmatprep.subr.mxu0 0.0
    %3122 = vmatpush1.msra.mxu0 0.0
    %3123 = vmatprep.subr.mxu0 0.0
    %3124 = vmatpush1.msra.mxu0 0.0
    %3125 = vmatprep.subr.mxu0 0.0
    %3126 = vmatpush1.msra.mxu0 0.0
    %3127 = vmatprep.subr.mxu0 0.0
    %3128 = vmatpush1.msra.mxu0 0.0
    %3129 = vmatprep.subr.mxu0 0.0
    %3130 = vmatpush1.msra.mxu0 0.0
    %3131 = vmatprep.subr.mxu0 0.0
    %3132 = vmatpush1.msra.mxu0 0.0
    %3133 = vmatprep.subr.mxu0 0.0
    %3134 = vmatpush1.msra.mxu0 0.0
    %3135 = vmatprep.subr.mxu0 0.0
    %3136 = vmatpush1.msra.mxu0 0.0
    %3137 = vmatprep.subr.mxu0 0.0
    %3138 = vmatpush1.msra.mxu0 0.0
    %3139 = vmatprep.subr.mxu0 0.0
    %3140 = vmatpush1.msra.mxu0 0.0
    %3141 = vmatprep.subr.mxu0 0.0
    %3142 = vmatpush1.msra.mxu0 0.0
    %3143 = vmatprep.subr.mxu0 0.0
    %3144 = vmatpush1.msra.mxu0 0.0
    %3145 = vmatprep.subr.mxu0 0.0
    %3146 = vmatpush1.msra.mxu0 0.0
    %3147 = vmatprep.subr.mxu0 0.0
    %3148 = vmatpush1.msra.mxu0 0.0
    %3149 = vmatprep.mubr.f32.mxu0 0.0
    %3150 = vmatmul.mubr.f32.gmra.mrb[0].mxu0 %v2941
    %v3151 = vpop.f32.mrb[0].mxu0
    %v3152 = vadd.f32 0.0, %v3151
    %v3153 = vpop.f32.mrb[0].mxu0
    %v3154 = vadd.f32 0.0, %v3153
    %3155 = vdwg.mxu0
    %v3157 = vsel %vm2939, %v2900, 0
    %3159 = vmatprep.subr.mxu0 %v2917
    %3160 = vmatpush1.msra.mxu0 %v2918
    %3161 = vmatprep.subr.mxu0 0.0
    %3162 = vmatpush1.msra.mxu0 0.0
    %3163 = vmatprep.subr.mxu0 0.0
    %3164 = vmatpush1.msra.mxu0 0.0
    %3165 = vmatprep.subr.mxu0 0.0
    %3166 = vmatpush1.msra.mxu0 0.0
    %3167 = vmatprep.subr.mxu0 0.0
    %3168 = vmatpush1.msra.mxu0 0.0
    %3169 = vmatprep.subr.mxu0 0.0
    %3170 = vmatpush1.msra.mxu0 0.0
    %3171 = vmatprep.subr.mxu0 0.0
    %3172 = vmatpush1.msra.mxu0 0.0
    %3173 = vmatprep.subr.mxu0 0.0
    %3174 = vmatpush1.msra.mxu0 0.0
    %3175 = vmatprep.subr.mxu0 0.0
    %3176 = vmatpush1.msra.mxu0 0.0
    %3177 = vmatprep.subr.mxu0 0.0
    %3178 = vmatpush1.msra.mxu0 0.0
    %3179 = vmatprep.subr.mxu0 0.0
    %3180 = vmatpush1.msra.mxu0 0.0
    %3181 = vmatprep.subr.mxu0 0.0
    %3182 = vmatpush1.msra.mxu0 0.0
    %3183 = vmatprep.subr.mxu0 0.0
    %3184 = vmatpush1.msra.mxu0 0.0
    %3185 = vmatprep.subr.mxu0 0.0
    %3186 = vmatpush1.msra.mxu0 0.0
    %3187 = vmatprep.subr.mxu0 0.0
    %3188 = vmatpush1.msra.mxu0 0.0
    %3189 = vmatprep.subr.mxu0 0.0
    %3190 = vmatpush1.msra.mxu0 0.0
    %3191 = vmatprep.subr.mxu0 0.0
    %3192 = vmatpush1.msra.mxu0 0.0
    %3193 = vmatprep.subr.mxu0 0.0
    %3194 = vmatpush1.msra.mxu0 0.0
    %3195 = vmatprep.subr.mxu0 0.0
    %3196 = vmatpush1.msra.mxu0 0.0
    %3197 = vmatprep.subr.mxu0 0.0
    %3198 = vmatpush1.msra.mxu0 0.0
    %3199 = vmatprep.subr.mxu0 0.0
    %3200 = vmatpush1.msra.mxu0 0.0
    %3201 = vmatprep.subr.mxu0 0.0
    %3202 = vmatpush1.msra.mxu0 0.0
    %3203 = vmatprep.subr.mxu0 0.0
    %3204 = vmatpush1.msra.mxu0 0.0
    %3205 = vmatprep.subr.mxu0 0.0
    %3206 = vmatpush1.msra.mxu0 0.0
    %3207 = vmatprep.subr.mxu0 0.0
    %3208 = vmatpush1.msra.mxu0 0.0
    %3209 = vmatprep.subr.mxu0 0.0
    %3210 = vmatpush1.msra.mxu0 0.0
    %3211 = vmatprep.subr.mxu0 0.0
    %3212 = vmatpush1.msra.mxu0 0.0
    %3213 = vmatprep.subr.mxu0 0.0
    %3214 = vmatpush1.msra.mxu0 0.0
    %3215 = vmatprep.subr.mxu0 0.0
    %3216 = vmatpush1.msra.mxu0 0.0
    %3217 = vmatprep.subr.mxu0 0.0
    %3218 = vmatpush1.msra.mxu0 0.0
    %3219 = vmatprep.subr.mxu0 0.0
    %3220 = vmatpush1.msra.mxu0 0.0
    %3221 = vmatprep.subr.mxu0 0.0
    %3222 = vmatpush1.msra.mxu0 0.0
    %3223 = vmatprep.mubr.f32.mxu0 0.0
    %3224 = vmatmul.mubr.f32.gmra.mrb[0].mxu0 %v3157
    %v3225 = vpop.f32.mrb[0].mxu0
    %v3226 = vadd.f32 %v3010, %v3225
    %v3227 = vpop.f32.mrb[0].mxu0
    %v3228 = vadd.f32 %v3012, %v3227
    %3229 = vdwg.mxu0
    %3230 = vmatprep.subr.mxu0 %v2915
    %3231 = vmatpush1.msra.mxu0 %v2916
    %3232 = vmatprep.subr.mxu0 0.0
    %3233 = vmatpush1.msra.mxu0 0.0
    %3234 = vmatprep.subr.mxu0 0.0
    %3235 = vmatpush1.msra.mxu0 0.0
    %3236 = vmatprep.subr.mxu0 0.0
    %3237 = vmatpush1.msra.mxu0 0.0
    %3238 = vmatprep.subr.mxu0 0.0
    %3239 = vmatpush1.msra.mxu0 0.0
    %3240 = vmatprep.subr.mxu0 0.0
    %3241 = vmatpush1.msra.mxu0 0.0
    %3242 = vmatprep.subr.mxu0 0.0
    %3243 = vmatpush1.msra.mxu0 0.0
    %3244 = vmatprep.subr.mxu0 0.0
    %3245 = vmatpush1.msra.mxu0 0.0
    %3246 = vmatprep.subr.mxu0 0.0
    %3247 = vmatpush1.msra.mxu0 0.0
    %3248 = vmatprep.subr.mxu0 0.0
    %3249 = vmatpush1.msra.mxu0 0.0
    %3250 = vmatprep.subr.mxu0 0.0
    %3251 = vmatpush1.msra.mxu0 0.0
    %3252 = vmatprep.subr.mxu0 0.0
    %3253 = vmatpush1.msra.mxu0 0.0
    %3254 = vmatprep.subr.mxu0 0.0
    %3255 = vmatpush1.msra.mxu0 0.0
    %3256 = vmatprep.subr.mxu0 0.0
    %3257 = vmatpush1.msra.mxu0 0.0
    %3258 = vmatprep.subr.mxu0 0.0
    %3259 = vmatpush1.msra.mxu0 0.0
    %3260 = vmatprep.subr.mxu0 0.0
    %3261 = vmatpush1.msra.mxu0 0.0
    %3262 = vmatprep.subr.mxu0 0.0
    %3263 = vmatpush1.msra.mxu0 0.0
    %3264 = vmatprep.subr.mxu0 0.0
    %3265 = vmatpush1.msra.mxu0 0.0
    %3266 = vmatprep.subr.mxu0 0.0
    %3267 = vmatpush1.msra.mxu0 0.0
    %3268 = vmatprep.subr.mxu0 0.0
    %3269 = vmatpush1.msra.mxu0 0.0
    %3270 = vmatprep.subr.mxu0 0.0
    %3271 = vmatpush1.msra.mxu0 0.0
    %3272 = vmatprep.subr.mxu0 0.0
    %3273 = vmatpush1.msra.mxu0 0.0
    %3274 = vmatprep.subr.mxu0 0.0
    %3275 = vmatpush1.msra.mxu0 0.0
    %3276 = vmatprep.subr.mxu0 0.0
    %3277 = vmatpush1.msra.mxu0 0.0
    %3278 = vmatprep.subr.mxu0 0.0
    %3279 = vmatpush1.msra.mxu0 0.0
    %3280 = vmatprep.subr.mxu0 0.0
    %3281 = vmatpush1.msra.mxu0 0.0
    %3282 = vmatprep.subr.mxu0 0.0
    %3283 = vmatpush1.msra.mxu0 0.0
    %3284 = vmatprep.subr.mxu0 0.0
    %3285 = vmatpush1.msra.mxu0 0.0
    %3286 = vmatprep.subr.mxu0 0.0
    %3287 = vmatpush1.msra.mxu0 0.0
    %3288 = vmatprep.subr.mxu0 0.0
    %3289 = vmatpush1.msra.mxu0 0.0
    %3290 = vmatprep.subr.mxu0 0.0
    %3291 = vmatpush1.msra.mxu0 0.0
    %3292 = vmatprep.subr.mxu0 0.0
    %3293 = vmatpush1.msra.mxu0 0.0
    %3294 = vmatprep.mubr.f32.mxu0 0.0
    %3295 = vmatmul.mubr.f32.gmra.mrb[0].mxu0 %v3157
    %v3296 = vpop.f32.mrb[0].mxu0
    %v3297 = vadd.f32 %v3081, %v3296
    %v3298 = vpop.f32.mrb[0].mxu0
    %v3299 = vadd.f32 %v3083, %v3298
    %3300 = vdwg.mxu0
    %3301 = vmatprep.subr.mxu0 %v2913
    %3302 = vmatpush1.msra.mxu0 %v2914
    %3303 = vmatprep.subr.mxu0 0.0
    %3304 = vmatpush1.msra.mxu0 0.0
    %3305 = vmatprep.subr.mxu0 0.0
    %3306 = vmatpush1.msra.mxu0 0.0
    %3307 = vmatprep.subr.mxu0 0.0
    %3308 = vmatpush1.msra.mxu0 0.0
    %3309 = vmatprep.subr.mxu0 0.0
    %3310 = vmatpush1.msra.mxu0 0.0
    %3311 = vmatprep.subr.mxu0 0.0
    %3312 = vmatpush1.msra.mxu0 0.0
    %3313 = vmatprep.subr.mxu0 0.0
    %3314 = vmatpush1.msra.mxu0 0.0
    %3315 = vmatprep.subr.mxu0 0.0
    %3316 = vmatpush1.msra.mxu0 0.0
    %3317 = vmatprep.subr.mxu0 0.0
    %3318 = vmatpush1.msra.mxu0 0.0
    %3319 = vmatprep.subr.mxu0 0.0
    %3320 = vmatpush1.msra.mxu0 0.0
    %3321 = vmatprep.subr.mxu0 0.0
    %3322 = vmatpush1.msra.mxu0 0.0
    %3323 = vmatprep.subr.mxu0 0.0
    %3324 = vmatpush1.msra.mxu0 0.0
    %3325 = vmatprep.subr.mxu0 0.0
    %3326 = vmatpush1.msra.mxu0 0.0
    %3327 = vmatprep.subr.mxu0 0.0
    %3328 = vmatpush1.msra.mxu0 0.0
    %3329 = vmatprep.subr.mxu0 0.0
    %3330 = vmatpush1.msra.mxu0 0.0
    %3331 = vmatprep.subr.mxu0 0.0
    %3332 = vmatpush1.msra.mxu0 0.0
    %3333 = vmatprep.subr.mxu0 0.0
    %3334 = vmatpush1.msra.mxu0 0.0
    %3335 = vmatprep.subr.mxu0 0.0
    %3336 = vmatpush1.msra.mxu0 0.0
    %3337 = vmatprep.subr.mxu0 0.0
    %3338 = vmatpush1.msra.mxu0 0.0
    %3339 = vmatprep.subr.mxu0 0.0
    %3340 = vmatpush1.msra.mxu0 0.0
    %3341 = vmatprep.subr.mxu0 0.0
    %3342 = vmatpush1.msra.mxu0 0.0
    %3343 = vmatprep.subr.mxu0 0.0
    %3344 = vmatpush1.msra.mxu0 0.0
    %3345 = vmatprep.subr.mxu0 0.0
    %3346 = vmatpush1.msra.mxu0 0.0
    %3347 = vmatprep.subr.mxu0 0.0
    %3348 = vmatpush1.msra.mxu0 0.0
    %3349 = vmatprep.subr.mxu0 0.0
    %3350 = vmatpush1.msra.mxu0 0.0
    %3351 = vmatprep.subr.mxu0 0.0
    %3352 = vmatpush1.msra.mxu0 0.0
    %3353 = vmatprep.subr.mxu0 0.0
    %3354 = vmatpush1.msra.mxu0 0.0
    %3355 = vmatprep.subr.mxu0 0.0
    %3356 = vmatpush1.msra.mxu0 0.0
    %3357 = vmatprep.subr.mxu0 0.0
    %3358 = vmatpush1.msra.mxu0 0.0
    %3359 = vmatprep.subr.mxu0 0.0
    %3360 = vmatpush1.msra.mxu0 0.0
    %3361 = vmatprep.subr.mxu0 0.0
    %3362 = vmatpush1.msra.mxu0 0.0
    %3363 = vmatprep.subr.mxu0 0.0
    %3364 = vmatpush1.msra.mxu0 0.0
    %3365 = vmatprep.mubr.f32.mxu0 0.0
    %3366 = vmatmul.mubr.f32.gmra.mrb[0].mxu0 %v3157
    %v3367 = vpop.f32.mrb[0].mxu0
    %v3368 = vadd.f32 %v3152, %v3367
    %v3369 = vpop.f32.mrb[0].mxu0
    %v3370 = vadd.f32 %v3154, %v3369
    %3371 = vdwg.mxu0
    %s3372 = scalar_lea.vmem %s8, 16
    %v3373 = vld [vmem:[%s3372] sm:$0xff]
    %3374 = vrot.lane.b32.xlu0 %v2894, 17
    %v3375 = vpop.permute.xlu0 %3374
    %3376 = vrot.lane.b32.xlu0 %v2895, 17
    %v3377 = vpop.permute.xlu0 %3376
    %3378 = vrot.lane.b32.xlu0 %v2896, 17
    %v3379 = vpop.permute.xlu0 %3378
    %3380 = vrot.lane.b32.xlu0 %v2897, 17
    %v3381 = vpop.permute.xlu0 %3380
    %3382 = vrot.lane.b32.xlu0 %v2898, 17
    %v3383 = vpop.permute.xlu0 %3382
    %3384 = vrot.lane.b32.xlu0 %v2899, 17
    %v3385 = vpop.permute.xlu0 %3384
    %v3386 = vsel %vm1100, %v3383, %v3385
    %v3387 = vsel %vm1100, %v3381, %v3383
    %v3388 = vsel %vm1100, %v3379, %v3381
    %v3389 = vsel %vm1100, %v3377, %v3379
    %v3390 = vsel %vm1100, %v3375, %v3377
    %v3391 = vsel %vm1100, %v3385, %v3375
    %v3393 = vsel %vm2939, %v3373, 0
    %3395 = vmatprep.subr.mxu0 %v3390
    %3396 = vmatpush1.msra.mxu0 %v3391
    %3397 = vmatprep.subr.mxu0 0.0
    %3398 = vmatpush1.msra.mxu0 0.0
    %3399 = vmatprep.subr.mxu0 0.0
    %3400 = vmatpush1.msra.mxu0 0.0
    %3401 = vmatprep.subr.mxu0 0.0
    %3402 = vmatpush1.msra.mxu0 0.0
    %3403 = vmatprep.subr.mxu0 0.0
    %3404 = vmatpush1.msra.mxu0 0.0
    %3405 = vmatprep.subr.mxu0 0.0
    %3406 = vmatpush1.msra.mxu0 0.0
    %3407 = vmatprep.subr.mxu0 0.0
    %3408 = vmatpush1.msra.mxu0 0.0
    %3409 = vmatprep.subr.mxu0 0.0
    %3410 = vmatpush1.msra.mxu0 0.0
    %3411 = vmatprep.subr.mxu0 0.0
    %3412 = vmatpush1.msra.mxu0 0.0
    %3413 = vmatprep.subr.mxu0 0.0
    %3414 = vmatpush1.msra.mxu0 0.0
    %3415 = vmatprep.subr.mxu0 0.0
    %3416 = vmatpush1.msra.mxu0 0.0
    %3417 = vmatprep.subr.mxu0 0.0
    %3418 = vmatpush1.msra.mxu0 0.0
    %3419 = vmatprep.subr.mxu0 0.0
    %3420 = vmatpush1.msra.mxu0 0.0
    %3421 = vmatprep.subr.mxu0 0.0
    %3422 = vmatpush1.msra.mxu0 0.0
    %3423 = vmatprep.subr.mxu0 0.0
    %3424 = vmatpush1.msra.mxu0 0.0
    %3425 = vmatprep.subr.mxu0 0.0
    %3426 = vmatpush1.msra.mxu0 0.0
    %3427 = vmatprep.subr.mxu0 0.0
    %3428 = vmatpush1.msra.mxu0 0.0
    %3429 = vmatprep.subr.mxu0 0.0
    %3430 = vmatpush1.msra.mxu0 0.0
    %3431 = vmatprep.subr.mxu0 0.0
    %3432 = vmatpush1.msra.mxu0 0.0
    %3433 = vmatprep.subr.mxu0 0.0
    %3434 = vmatpush1.msra.mxu0 0.0
    %3435 = vmatprep.subr.mxu0 0.0
    %3436 = vmatpush1.msra.mxu0 0.0
    %3437 = vmatprep.subr.mxu0 0.0
    %3438 = vmatpush1.msra.mxu0 0.0
    %3439 = vmatprep.subr.mxu0 0.0
    %3440 = vmatpush1.msra.mxu0 0.0
    %3441 = vmatprep.subr.mxu0 0.0
    %3442 = vmatpush1.msra.mxu0 0.0
    %3443 = vmatprep.subr.mxu0 0.0
    %3444 = vmatpush1.msra.mxu0 0.0
    %3445 = vmatprep.subr.mxu0 0.0
    %3446 = vmatpush1.msra.mxu0 0.0
    %3447 = vmatprep.subr.mxu0 0.0
    %3448 = vmatpush1.msra.mxu0 0.0
    %3449 = vmatprep.subr.mxu0 0.0
    %3450 = vmatpush1.msra.mxu0 0.0
    %3451 = vmatprep.subr.mxu0 0.0
    %3452 = vmatpush1.msra.mxu0 0.0
    %3453 = vmatprep.subr.mxu0 0.0
    %3454 = vmatpush1.msra.mxu0 0.0
    %3455 = vmatprep.subr.mxu0 0.0
    %3456 = vmatpush1.msra.mxu0 0.0
    %3457 = vmatprep.subr.mxu0 0.0
    %3458 = vmatpush1.msra.mxu0 0.0
    %3459 = vmatprep.mubr.f32.mxu0 0.0
    %3460 = vmatmul.mubr.f32.gmra.mrb[0].mxu0 %v3393
    %v3461 = vpop.f32.mrb[0].mxu0
    %v3462 = vadd.f32 0.0, %v3461
    %v3463 = vpop.f32.mrb[0].mxu0
    %v3464 = vadd.f32 0.0, %v3463
    %3465 = vdwg.mxu0
    %3466 = vmatprep.subr.mxu0 %v3388
    %3467 = vmatpush1.msra.mxu0 %v3389
    %3468 = vmatprep.subr.mxu0 0.0
    %3469 = vmatpush1.msra.mxu0 0.0
    %3470 = vmatprep.subr.mxu0 0.0
    %3471 = vmatpush1.msra.mxu0 0.0
    %3472 = vmatprep.subr.mxu0 0.0
    %3473 = vmatpush1.msra.mxu0 0.0
    %3474 = vmatprep.subr.mxu0 0.0
    %3475 = vmatpush1.msra.mxu0 0.0
    %3476 = vmatprep.subr.mxu0 0.0
    %3477 = vmatpush1.msra.mxu0 0.0
    %3478 = vmatprep.subr.mxu0 0.0
    %3479 = vmatpush1.msra.mxu0 0.0
    %3480 = vmatprep.subr.mxu0 0.0
    %3481 = vmatpush1.msra.mxu0 0.0
    %3482 = vmatprep.subr.mxu0 0.0
    %3483 = vmatpush1.msra.mxu0 0.0
    %3484 = vmatprep.subr.mxu0 0.0
    %3485 = vmatpush1.msra.mxu0 0.0
    %3486 = vmatprep.subr.mxu0 0.0
    %3487 = vmatpush1.msra.mxu0 0.0
    %3488 = vmatprep.subr.mxu0 0.0
    %3489 = vmatpush1.msra.mxu0 0.0
    %3490 = vmatprep.subr.mxu0 0.0
    %3491 = vmatpush1.msra.mxu0 0.0
    %3492 = vmatprep.subr.mxu0 0.0
    %3493 = vmatpush1.msra.mxu0 0.0
    %3494 = vmatprep.subr.mxu0 0.0
    %3495 = vmatpush1.msra.mxu0 0.0
    %3496 = vmatprep.subr.mxu0 0.0
    %3497 = vmatpush1.msra.mxu0 0.0
    %3498 = vmatprep.subr.mxu0 0.0
    %3499 = vmatpush1.msra.mxu0 0.0
    %3500 = vmatprep.subr.mxu0 0.0
    %3501 = vmatpush1.msra.mxu0 0.0
    %3502 = vmatprep.subr.mxu0 0.0
    %3503 = vmatpush1.msra.mxu0 0.0
    %3504 = vmatprep.subr.mxu0 0.0
    %3505 = vmatpush1.msra.mxu0 0.0
    %3506 = vmatprep.subr.mxu0 0.0
    %3507 = vmatpush1.msra.mxu0 0.0
    %3508 = vmatprep.subr.mxu0 0.0
    %3509 = vmatpush1.msra.mxu0 0.0
    %3510 = vmatprep.subr.mxu0 0.0
    %3511 = vmatpush1.msra.mxu0 0.0
    %3512 = vmatprep.subr.mxu0 0.0
    %3513 = vmatpush1.msra.mxu0 0.0
    %3514 = vmatprep.subr.mxu0 0.0
    %3515 = vmatpush1.msra.mxu0 0.0
    %3516 = vmatprep.subr.mxu0 0.0
    %3517 = vmatpush1.msra.mxu0 0.0
    %3518 = vmatprep.subr.mxu0 0.0
    %3519 = vmatpush1.msra.mxu0 0.0
    %3520 = vmatprep.subr.mxu0 0.0
    %3521 = vmatpush1.msra.mxu0 0.0
    %3522 = vmatprep.subr.mxu0 0.0
    %3523 = vmatpush1.msra.mxu0 0.0
    %3524 = vmatprep.subr.mxu0 0.0
    %3525 = vmatpush1.msra.mxu0 0.0
    %3526 = vmatprep.subr.mxu0 0.0
    %3527 = vmatpush1.msra.mxu0 0.0
    %3528 = vmatprep.subr.mxu0 0.0
    %3529 = vmatpush1.msra.mxu0 0.0
    %3530 = vmatprep.mubr.f32.mxu0 0.0
    %3531 = vmatmul.mubr.f32.gmra.mrb[0].mxu0 %v3393
    %v3532 = vpop.f32.mrb[0].mxu0
    %v3533 = vadd.f32 0.0, %v3532
    %v3534 = vpop.f32.mrb[0].mxu0
    %v3535 = vadd.f32 0.0, %v3534
    %3536 = vdwg.mxu0
    %3537 = vmatprep.subr.mxu0 %v3386
    %3538 = vmatpush1.msra.mxu0 %v3387
    %3539 = vmatprep.subr.mxu0 0.0
    %3540 = vmatpush1.msra.mxu0 0.0
    %3541 = vmatprep.subr.mxu0 0.0
    %3542 = vmatpush1.msra.mxu0 0.0
    %3543 = vmatprep.subr.mxu0 0.0
    %3544 = vmatpush1.msra.mxu0 0.0
    %3545 = vmatprep.subr.mxu0 0.0
    %3546 = vmatpush1.msra.mxu0 0.0
    %3547 = vmatprep.subr.mxu0 0.0
    %3548 = vmatpush1.msra.mxu0 0.0
    %3549 = vmatprep.subr.mxu0 0.0
    %3550 = vmatpush1.msra.mxu0 0.0
    %3551 = vmatprep.subr.mxu0 0.0
    %3552 = vmatpush1.msra.mxu0 0.0
    %3553 = vmatprep.subr.mxu0 0.0
    %3554 = vmatpush1.msra.mxu0 0.0
    %3555 = vmatprep.subr.mxu0 0.0
    %3556 = vmatpush1.msra.mxu0 0.0
    %3557 = vmatprep.subr.mxu0 0.0
    %3558 = vmatpush1.msra.mxu0 0.0
    %3559 = vmatprep.subr.mxu0 0.0
    %3560 = vmatpush1.msra.mxu0 0.0
    %3561 = vmatprep.subr.mxu0 0.0
    %3562 = vmatpush1.msra.mxu0 0.0
    %3563 = vmatprep.subr.mxu0 0.0
    %3564 = vmatpush1.msra.mxu0 0.0
    %3565 = vmatprep.subr.mxu0 0.0
    %3566 = vmatpush1.msra.mxu0 0.0
    %3567 = vmatprep.subr.mxu0 0.0
    %3568 = vmatpush1.msra.mxu0 0.0
    %3569 = vmatprep.subr.mxu0 0.0
    %3570 = vmatpush1.msra.mxu0 0.0
    %3571 = vmatprep.subr.mxu0 0.0
    %3572 = vmatpush1.msra.mxu0 0.0
    %3573 = vmatprep.subr.mxu0 0.0
    %3574 = vmatpush1.msra.mxu0 0.0
    %3575 = vmatprep.subr.mxu0 0.0
    %3576 = vmatpush1.msra.mxu0 0.0
    %3577 = vmatprep.subr.mxu0 0.0
    %3578 = vmatpush1.msra.mxu0 0.0
    %3579 = vmatprep.subr.mxu0 0.0
    %3580 = vmatpush1.msra.mxu0 0.0
    %3581 = vmatprep.subr.mxu0 0.0
    %3582 = vmatpush1.msra.mxu0 0.0
    %3583 = vmatprep.subr.mxu0 0.0
    %3584 = vmatpush1.msra.mxu0 0.0
    %3585 = vmatprep.subr.mxu0 0.0
    %3586 = vmatpush1.msra.mxu0 0.0
    %3587 = vmatprep.subr.mxu0 0.0
    %3588 = vmatpush1.msra.mxu0 0.0
    %3589 = vmatprep.subr.mxu0 0.0
    %3590 = vmatpush1.msra.mxu0 0.0
    %3591 = vmatprep.subr.mxu0 0.0
    %3592 = vmatpush1.msra.mxu0 0.0
    %3593 = vmatprep.subr.mxu0 0.0
    %3594 = vmatpush1.msra.mxu0 0.0
    %3595 = vmatprep.subr.mxu0 0.0
    %3596 = vmatpush1.msra.mxu0 0.0
    %3597 = vmatprep.subr.mxu0 0.0
    %3598 = vmatpush1.msra.mxu0 0.0
    %3599 = vmatprep.subr.mxu0 0.0
    %3600 = vmatpush1.msra.mxu0 0.0
    %3601 = vmatprep.mubr.f32.mxu0 0.0
    %3602 = vmatmul.mubr.f32.gmra.mrb[0].mxu0 %v3393
    %v3603 = vpop.f32.mrb[0].mxu0
    %v3604 = vadd.f32 0.0, %v3603
    %v3605 = vpop.f32.mrb[0].mxu0
    %v3606 = vadd.f32 0.0, %v3605
    %3607 = vdwg.mxu0
    %v3608 = vadd.f32 %v3226, %v3462
    %v3609 = vadd.f32 %v3228, %v3464
    %v3610 = vadd.f32 %v3297, %v3533
    %v3611 = vadd.f32 %v3299, %v3535
    %v3612 = vadd.f32 %v3368, %v3604
    %v3613 = vadd.f32 %v3370, %v3606
    %s3614 = scalar_lea.vmem %s8, 24
    %v3615 = vld [vmem:[%s3614] sm:$0xff]
    %3616 = vrot.lane.b32.xlu0 %v2894, 1
    %v3617 = vpop.permute.xlu0 %3616
    %3618 = vrot.lane.b32.xlu0 %v2895, 1
    %v3619 = vpop.permute.xlu0 %3618
    %3620 = vrot.lane.b32.xlu0 %v2896, 1
    %v3621 = vpop.permute.xlu0 %3620
    %3622 = vrot.lane.b32.xlu0 %v2897, 1
    %v3623 = vpop.permute.xlu0 %3622
    %3624 = vrot.lane.b32.xlu0 %v2898, 1
    %v3625 = vpop.permute.xlu0 %3624
    %3626 = vrot.lane.b32.xlu0 %v2899, 1
    %v3627 = vpop.permute.xlu0 %3626
    %v3628 = vsel %vm1361, %v3625, %v3627
    %v3629 = vsel %vm1361, %v3623, %v3625
    %v3630 = vsel %vm1361, %v3621, %v3623
    %v3631 = vsel %vm1361, %v3619, %v3621
    %v3632 = vsel %vm1361, %v3617, %v3619
    %v3633 = vsel %vm1361, %v3627, %v3617
    %v3635 = vsel %vm2939, %v3615, 0
    %3637 = vmatprep.subr.mxu0 %v3632
    %3638 = vmatpush1.msra.mxu0 %v3633
    %3639 = vmatprep.subr.mxu0 0.0
    %3640 = vmatpush1.msra.mxu0 0.0
    %3641 = vmatprep.subr.mxu0 0.0
    %3642 = vmatpush1.msra.mxu0 0.0
    %3643 = vmatprep.subr.mxu0 0.0
    %3644 = vmatpush1.msra.mxu0 0.0
    %3645 = vmatprep.subr.mxu0 0.0
    %3646 = vmatpush1.msra.mxu0 0.0
    %3647 = vmatprep.subr.mxu0 0.0
    %3648 = vmatpush1.msra.mxu0 0.0
    %3649 = vmatprep.subr.mxu0 0.0
    %3650 = vmatpush1.msra.mxu0 0.0
    %3651 = vmatprep.subr.mxu0 0.0
    %3652 = vmatpush1.msra.mxu0 0.0
    %3653 = vmatprep.subr.mxu0 0.0
    %3654 = vmatpush1.msra.mxu0 0.0
    %3655 = vmatprep.subr.mxu0 0.0
    %3656 = vmatpush1.msra.mxu0 0.0
    %3657 = vmatprep.subr.mxu0 0.0
    %3658 = vmatpush1.msra.mxu0 0.0
    %3659 = vmatprep.subr.mxu0 0.0
    %3660 = vmatpush1.msra.mxu0 0.0
    %3661 = vmatprep.subr.mxu0 0.0
    %3662 = vmatpush1.msra.mxu0 0.0
    %3663 = vmatprep.subr.mxu0 0.0
    %3664 = vmatpush1.msra.mxu0 0.0
    %3665 = vmatprep.subr.mxu0 0.0
    %3666 = vmatpush1.msra.mxu0 0.0
    %3667 = vmatprep.subr.mxu0 0.0
    %3668 = vmatpush1.msra.mxu0 0.0
    %3669 = vmatprep.subr.mxu0 0.0
    %3670 = vmatpush1.msra.mxu0 0.0
    %3671 = vmatprep.subr.mxu0 0.0
    %3672 = vmatpush1.msra.mxu0 0.0
    %3673 = vmatprep.subr.mxu0 0.0
    %3674 = vmatpush1.msra.mxu0 0.0
    %3675 = vmatprep.subr.mxu0 0.0
    %3676 = vmatpush1.msra.mxu0 0.0
    %3677 = vmatprep.subr.mxu0 0.0
    %3678 = vmatpush1.msra.mxu0 0.0
    %3679 = vmatprep.subr.mxu0 0.0
    %3680 = vmatpush1.msra.mxu0 0.0
    %3681 = vmatprep.subr.mxu0 0.0
    %3682 = vmatpush1.msra.mxu0 0.0
    %3683 = vmatprep.subr.mxu0 0.0
    %3684 = vmatpush1.msra.mxu0 0.0
    %3685 = vmatprep.subr.mxu0 0.0
    %3686 = vmatpush1.msra.mxu0 0.0
    %3687 = vmatprep.subr.mxu0 0.0
    %3688 = vmatpush1.msra.mxu0 0.0
    %3689 = vmatprep.subr.mxu0 0.0
    %3690 = vmatpush1.msra.mxu0 0.0
    %3691 = vmatprep.subr.mxu0 0.0
    %3692 = vmatpush1.msra.mxu0 0.0
    %3693 = vmatprep.subr.mxu0 0.0
    %3694 = vmatpush1.msra.mxu0 0.0
    %3695 = vmatprep.subr.mxu0 0.0
    %3696 = vmatpush1.msra.mxu0 0.0
    %3697 = vmatprep.subr.mxu0 0.0
    %3698 = vmatpush1.msra.mxu0 0.0
    %3699 = vmatprep.subr.mxu0 0.0
    %3700 = vmatpush1.msra.mxu0 0.0
    %3701 = vmatprep.mubr.f32.mxu0 0.0
    %3702 = vmatmul.mubr.f32.gmra.mrb[0].mxu0 %v3635
    %v3703 = vpop.f32.mrb[0].mxu0
    %v3704 = vadd.f32 0.0, %v3703
    %v3705 = vpop.f32.mrb[0].mxu0
    %v3706 = vadd.f32 0.0, %v3705
    %3707 = vdwg.mxu0
    %3708 = vmatprep.subr.mxu0 %v3630
    %3709 = vmatpush1.msra.mxu0 %v3631
    %3710 = vmatprep.subr.mxu0 0.0
    %3711 = vmatpush1.msra.mxu0 0.0
    %3712 = vmatprep.subr.mxu0 0.0
    %3713 = vmatpush1.msra.mxu0 0.0
    %3714 = vmatprep.subr.mxu0 0.0
    %3715 = vmatpush1.msra.mxu0 0.0
    %3716 = vmatprep.subr.mxu0 0.0
    %3717 = vmatpush1.msra.mxu0 0.0
    %3718 = vmatprep.subr.mxu0 0.0
    %3719 = vmatpush1.msra.mxu0 0.0
    %3720 = vmatprep.subr.mxu0 0.0
    %3721 = vmatpush1.msra.mxu0 0.0
    %3722 = vmatprep.subr.mxu0 0.0
    %3723 = vmatpush1.msra.mxu0 0.0
    %3724 = vmatprep.subr.mxu0 0.0
    %3725 = vmatpush1.msra.mxu0 0.0
    %3726 = vmatprep.subr.mxu0 0.0
    %3727 = vmatpush1.msra.mxu0 0.0
    %3728 = vmatprep.subr.mxu0 0.0
    %3729 = vmatpush1.msra.mxu0 0.0
    %3730 = vmatprep.subr.mxu0 0.0
    %3731 = vmatpush1.msra.mxu0 0.0
    %3732 = vmatprep.subr.mxu0 0.0
    %3733 = vmatpush1.msra.mxu0 0.0
    %3734 = vmatprep.subr.mxu0 0.0
    %3735 = vmatpush1.msra.mxu0 0.0
    %3736 = vmatprep.subr.mxu0 0.0
    %3737 = vmatpush1.msra.mxu0 0.0
    %3738 = vmatprep.subr.mxu0 0.0
    %3739 = vmatpush1.msra.mxu0 0.0
    %3740 = vmatprep.subr.mxu0 0.0
    %3741 = vmatpush1.msra.mxu0 0.0
    %3742 = vmatprep.subr.mxu0 0.0
    %3743 = vmatpush1.msra.mxu0 0.0
    %3744 = vmatprep.subr.mxu0 0.0
    %3745 = vmatpush1.msra.mxu0 0.0
    %3746 = vmatprep.subr.mxu0 0.0
    %3747 = vmatpush1.msra.mxu0 0.0
    %3748 = vmatprep.subr.mxu0 0.0
    %3749 = vmatpush1.msra.mxu0 0.0
    %3750 = vmatprep.subr.mxu0 0.0
    %3751 = vmatpush1.msra.mxu0 0.0
    %3752 = vmatprep.subr.mxu0 0.0
    %3753 = vmatpush1.msra.mxu0 0.0
    %3754 = vmatprep.subr.mxu0 0.0
    %3755 = vmatpush1.msra.mxu0 0.0
    %3756 = vmatprep.subr.mxu0 0.0
    %3757 = vmatpush1.msra.mxu0 0.0
    %3758 = vmatprep.subr.mxu0 0.0
    %3759 = vmatpush1.msra.mxu0 0.0
    %3760 = vmatprep.subr.mxu0 0.0
    %3761 = vmatpush1.msra.mxu0 0.0
    %3762 = vmatprep.subr.mxu0 0.0
    %3763 = vmatpush1.msra.mxu0 0.0
    %3764 = vmatprep.subr.mxu0 0.0
    %3765 = vmatpush1.msra.mxu0 0.0
    %3766 = vmatprep.subr.mxu0 0.0
    %3767 = vmatpush1.msra.mxu0 0.0
    %3768 = vmatprep.subr.mxu0 0.0
    %3769 = vmatpush1.msra.mxu0 0.0
    %3770 = vmatprep.subr.mxu0 0.0
    %3771 = vmatpush1.msra.mxu0 0.0
    %3772 = vmatprep.mubr.f32.mxu0 0.0
    %3773 = vmatmul.mubr.f32.gmra.mrb[0].mxu0 %v3635
    %v3774 = vpop.f32.mrb[0].mxu0
    %v3775 = vadd.f32 0.0, %v3774
    %v3776 = vpop.f32.mrb[0].mxu0
    %v3777 = vadd.f32 0.0, %v3776
    %3778 = vdwg.mxu0
    %3779 = vmatprep.subr.mxu0 %v3628
    %3780 = vmatpush1.msra.mxu0 %v3629
    %3781 = vmatprep.subr.mxu0 0.0
    %3782 = vmatpush1.msra.mxu0 0.0
    %3783 = vmatprep.subr.mxu0 0.0
    %3784 = vmatpush1.msra.mxu0 0.0
    %3785 = vmatprep.subr.mxu0 0.0
    %3786 = vmatpush1.msra.mxu0 0.0
    %3787 = vmatprep.subr.mxu0 0.0
    %3788 = vmatpush1.msra.mxu0 0.0
    %3789 = vmatprep.subr.mxu0 0.0
    %3790 = vmatpush1.msra.mxu0 0.0
    %3791 = vmatprep.subr.mxu0 0.0
    %3792 = vmatpush1.msra.mxu0 0.0
    %3793 = vmatprep.subr.mxu0 0.0
    %3794 = vmatpush1.msra.mxu0 0.0
    %3795 = vmatprep.subr.mxu0 0.0
    %3796 = vmatpush1.msra.mxu0 0.0
    %3797 = vmatprep.subr.mxu0 0.0
    %3798 = vmatpush1.msra.mxu0 0.0
    %3799 = vmatprep.subr.mxu0 0.0
    %3800 = vmatpush1.msra.mxu0 0.0
    %3801 = vmatprep.subr.mxu0 0.0
    %3802 = vmatpush1.msra.mxu0 0.0
    %3803 = vmatprep.subr.mxu0 0.0
    %3804 = vmatpush1.msra.mxu0 0.0
    %3805 = vmatprep.subr.mxu0 0.0
    %3806 = vmatpush1.msra.mxu0 0.0
    %3807 = vmatprep.subr.mxu0 0.0
    %3808 = vmatpush1.msra.mxu0 0.0
    %3809 = vmatprep.subr.mxu0 0.0
    %3810 = vmatpush1.msra.mxu0 0.0
    %3811 = vmatprep.subr.mxu0 0.0
    %3812 = vmatpush1.msra.mxu0 0.0
    %3813 = vmatprep.subr.mxu0 0.0
    %3814 = vmatpush1.msra.mxu0 0.0
    %3815 = vmatprep.subr.mxu0 0.0
    %3816 = vmatpush1.msra.mxu0 0.0
    %3817 = vmatprep.subr.mxu0 0.0
    %3818 = vmatpush1.msra.mxu0 0.0
    %3819 = vmatprep.subr.mxu0 0.0
    %3820 = vmatpush1.msra.mxu0 0.0
    %3821 = vmatprep.subr.mxu0 0.0
    %3822 = vmatpush1.msra.mxu0 0.0
    %3823 = vmatprep.subr.mxu0 0.0
    %3824 = vmatpush1.msra.mxu0 0.0
    %3825 = vmatprep.subr.mxu0 0.0
    %3826 = vmatpush1.msra.mxu0 0.0
    %3827 = vmatprep.subr.mxu0 0.0
    %3828 = vmatpush1.msra.mxu0 0.0
    %3829 = vmatprep.subr.mxu0 0.0
    %3830 = vmatpush1.msra.mxu0 0.0
    %3831 = vmatprep.subr.mxu0 0.0
    %3832 = vmatpush1.msra.mxu0 0.0
    %3833 = vmatprep.subr.mxu0 0.0
    %3834 = vmatpush1.msra.mxu0 0.0
    %3835 = vmatprep.subr.mxu0 0.0
    %3836 = vmatpush1.msra.mxu0 0.0
    %3837 = vmatprep.subr.mxu0 0.0
    %3838 = vmatpush1.msra.mxu0 0.0
    %3839 = vmatprep.subr.mxu0 0.0
    %3840 = vmatpush1.msra.mxu0 0.0
    %3841 = vmatprep.subr.mxu0 0.0
    %3842 = vmatpush1.msra.mxu0 0.0
    %3843 = vmatprep.mubr.f32.mxu0 0.0
    %3844 = vmatmul.mubr.f32.gmra.mrb[0].mxu0 %v3635
    %v3845 = vpop.f32.mrb[0].mxu0
    %v3846 = vadd.f32 0.0, %v3845
    %v3847 = vpop.f32.mrb[0].mxu0
    %v3848 = vadd.f32 0.0, %v3847
    %3849 = vdwg.mxu0
    %v3850 = vadd.f32 %v3608, %v3704
    %v3851 = vadd.f32 %v3609, %v3706
    %v3852 = vadd.f32 %v3610, %v3775
    %v3853 = vadd.f32 %v3611, %v3777
    %v3854 = vadd.f32 %v3612, %v3846
    %v3855 = vadd.f32 %v3613, %v3848
    %s3856 = scalar_lea.vmem %s8, 32
    %v3857 = vld [vmem:[%s3856] sm:$0xff]
    %v3859 = vsel %vm2939, %v3857, 0
    %3861 = vmatprep.subr.mxu0 %v2895
    %3862 = vmatpush1.msra.mxu0 %v2894
    %3863 = vmatprep.subr.mxu0 0.0
    %3864 = vmatpush1.msra.mxu0 0.0
    %3865 = vmatprep.subr.mxu0 0.0
    %3866 = vmatpush1.msra.mxu0 0.0
    %3867 = vmatprep.subr.mxu0 0.0
    %3868 = vmatpush1.msra.mxu0 0.0
    %3869 = vmatprep.subr.mxu0 0.0
    %3870 = vmatpush1.msra.mxu0 0.0
    %3871 = vmatprep.subr.mxu0 0.0
    %3872 = vmatpush1.msra.mxu0 0.0
    %3873 = vmatprep.subr.mxu0 0.0
    %3874 = vmatpush1.msra.mxu0 0.0
    %3875 = vmatprep.subr.mxu0 0.0
    %3876 = vmatpush1.msra.mxu0 0.0
    %3877 = vmatprep.subr.mxu0 0.0
    %3878 = vmatpush1.msra.mxu0 0.0
    %3879 = vmatprep.subr.mxu0 0.0
    %3880 = vmatpush1.msra.mxu0 0.0
    %3881 = vmatprep.subr.mxu0 0.0
    %3882 = vmatpush1.msra.mxu0 0.0
    %3883 = vmatprep.subr.mxu0 0.0
    %3884 = vmatpush1.msra.mxu0 0.0
    %3885 = vmatprep.subr.mxu0 0.0
    %3886 = vmatpush1.msra.mxu0 0.0
    %3887 = vmatprep.subr.mxu0 0.0
    %3888 = vmatpush1.msra.mxu0 0.0
    %3889 = vmatprep.subr.mxu0 0.0
    %3890 = vmatpush1.msra.mxu0 0.0
    %3891 = vmatprep.subr.mxu0 0.0
    %3892 = vmatpush1.msra.mxu0 0.0
    %3893 = vmatprep.subr.mxu0 0.0
    %3894 = vmatpush1.msra.mxu0 0.0
    %3895 = vmatprep.subr.mxu0 0.0
    %3896 = vmatpush1.msra.mxu0 0.0
    %3897 = vmatprep.subr.mxu0 0.0
    %3898 = vmatpush1.msra.mxu0 0.0
    %3899 = vmatprep.subr.mxu0 0.0
    %3900 = vmatpush1.msra.mxu0 0.0
    %3901 = vmatprep.subr.mxu0 0.0
    %3902 = vmatpush1.msra.mxu0 0.0
    %3903 = vmatprep.subr.mxu0 0.0
    %3904 = vmatpush1.msra.mxu0 0.0
    %3905 = vmatprep.subr.mxu0 0.0
    %3906 = vmatpush1.msra.mxu0 0.0
    %3907 = vmatprep.subr.mxu0 0.0
    %3908 = vmatpush1.msra.mxu0 0.0
    %3909 = vmatprep.subr.mxu0 0.0
    %3910 = vmatpush1.msra.mxu0 0.0
    %3911 = vmatprep.subr.mxu0 0.0
    %3912 = vmatpush1.msra.mxu0 0.0
    %3913 = vmatprep.subr.mxu0 0.0
    %3914 = vmatpush1.msra.mxu0 0.0
    %3915 = vmatprep.subr.mxu0 0.0
    %3916 = vmatpush1.msra.mxu0 0.0
    %3917 = vmatprep.subr.mxu0 0.0
    %3918 = vmatpush1.msra.mxu0 0.0
    %3919 = vmatprep.subr.mxu0 0.0
    %3920 = vmatpush1.msra.mxu0 0.0
    %3921 = vmatprep.subr.mxu0 0.0
    %3922 = vmatpush1.msra.mxu0 0.0
    %3923 = vmatprep.subr.mxu0 0.0
    %3924 = vmatpush1.msra.mxu0 0.0
    %3925 = vmatprep.mubr.f32.mxu0 0.0
    %3926 = vmatmul.mubr.f32.gmra.mrb[0].mxu0 %v3859
    %v3927 = vpop.f32.mrb[0].mxu0
    %v3928 = vadd.f32 0.0, %v3927
    %v3929 = vpop.f32.mrb[0].mxu0
    %v3930 = vadd.f32 0.0, %v3929
    %3931 = vdwg.mxu0
    %3932 = vmatprep.subr.mxu0 %v2897
    %3933 = vmatpush1.msra.mxu0 %v2896
    %3934 = vmatprep.subr.mxu0 0.0
    %3935 = vmatpush1.msra.mxu0 0.0
    %3936 = vmatprep.subr.mxu0 0.0
    %3937 = vmatpush1.msra.mxu0 0.0
    %3938 = vmatprep.subr.mxu0 0.0
    %3939 = vmatpush1.msra.mxu0 0.0
    %3940 = vmatprep.subr.mxu0 0.0
    %3941 = vmatpush1.msra.mxu0 0.0
    %3942 = vmatprep.subr.mxu0 0.0
    %3943 = vmatpush1.msra.mxu0 0.0
    %3944 = vmatprep.subr.mxu0 0.0
    %3945 = vmatpush1.msra.mxu0 0.0
    %3946 = vmatprep.subr.mxu0 0.0
    %3947 = vmatpush1.msra.mxu0 0.0
    %3948 = vmatprep.subr.mxu0 0.0
    %3949 = vmatpush1.msra.mxu0 0.0
    %3950 = vmatprep.subr.mxu0 0.0
    %3951 = vmatpush1.msra.mxu0 0.0
    %3952 = vmatprep.subr.mxu0 0.0
    %3953 = vmatpush1.msra.mxu0 0.0
    %3954 = vmatprep.subr.mxu0 0.0
    %3955 = vmatpush1.msra.mxu0 0.0
    %3956 = vmatprep.subr.mxu0 0.0
    %3957 = vmatpush1.msra.mxu0 0.0
    %3958 = vmatprep.subr.mxu0 0.0
    %3959 = vmatpush1.msra.mxu0 0.0
    %3960 = vmatprep.subr.mxu0 0.0
    %3961 = vmatpush1.msra.mxu0 0.0
    %3962 = vmatprep.subr.mxu0 0.0
    %3963 = vmatpush1.msra.mxu0 0.0
    %3964 = vmatprep.subr.mxu0 0.0
    %3965 = vmatpush1.msra.mxu0 0.0
    %3966 = vmatprep.subr.mxu0 0.0
    %3967 = vmatpush1.msra.mxu0 0.0
    %3968 = vmatprep.subr.mxu0 0.0
    %3969 = vmatpush1.msra.mxu0 0.0
    %3970 = vmatprep.subr.mxu0 0.0
    %3971 = vmatpush1.msra.mxu0 0.0
    %3972 = vmatprep.subr.mxu0 0.0
    %3973 = vmatpush1.msra.mxu0 0.0
    %3974 = vmatprep.subr.mxu0 0.0
    %3975 = vmatpush1.msra.mxu0 0.0
    %3976 = vmatprep.subr.mxu0 0.0
    %3977 = vmatpush1.msra.mxu0 0.0
    %3978 = vmatprep.subr.mxu0 0.0
    %3979 = vmatpush1.msra.mxu0 0.0
    %3980 = vmatprep.subr.mxu0 0.0
    %3981 = vmatpush1.msra.mxu0 0.0
    %3982 = vmatprep.subr.mxu0 0.0
    %3983 = vmatpush1.msra.mxu0 0.0
    %3984 = vmatprep.subr.mxu0 0.0
    %3985 = vmatpush1.msra.mxu0 0.0
    %3986 = vmatprep.subr.mxu0 0.0
    %3987 = vmatpush1.msra.mxu0 0.0
    %3988 = vmatprep.subr.mxu0 0.0
    %3989 = vmatpush1.msra.mxu0 0.0
    %3990 = vmatprep.subr.mxu0 0.0
    %3991 = vmatpush1.msra.mxu0 0.0
    %3992 = vmatprep.subr.mxu0 0.0
    %3993 = vmatpush1.msra.mxu0 0.0
    %3994 = vmatprep.subr.mxu0 0.0
    %3995 = vmatpush1.msra.mxu0 0.0
    %3996 = vmatprep.mubr.f32.mxu0 0.0
    %3997 = vmatmul.mubr.f32.gmra.mrb[0].mxu0 %v3859
    %v3998 = vpop.f32.mrb[0].mxu0
    %v3999 = vadd.f32 0.0, %v3998
    %v4000 = vpop.f32.mrb[0].mxu0
    %v4001 = vadd.f32 0.0, %v4000
    %4002 = vdwg.mxu0
    %4003 = vmatprep.subr.mxu0 %v2899
    %4004 = vmatpush1.msra.mxu0 %v2898
    %4005 = vmatprep.subr.mxu0 0.0
    %4006 = vmatpush1.msra.mxu0 0.0
    %4007 = vmatprep.subr.mxu0 0.0
    %4008 = vmatpush1.msra.mxu0 0.0
    %4009 = vmatprep.subr.mxu0 0.0
    %4010 = vmatpush1.msra.mxu0 0.0
    %4011 = vmatprep.subr.mxu0 0.0
    %4012 = vmatpush1.msra.mxu0 0.0
    %4013 = vmatprep.subr.mxu0 0.0
    %4014 = vmatpush1.msra.mxu0 0.0
    %4015 = vmatprep.subr.mxu0 0.0
    %4016 = vmatpush1.msra.mxu0 0.0
    %4017 = vmatprep.subr.mxu0 0.0
    %4018 = vmatpush1.msra.mxu0 0.0
    %4019 = vmatprep.subr.mxu0 0.0
    %4020 = vmatpush1.msra.mxu0 0.0
    %4021 = vmatprep.subr.mxu0 0.0
    %4022 = vmatpush1.msra.mxu0 0.0
    %4023 = vmatprep.subr.mxu0 0.0
    %4024 = vmatpush1.msra.mxu0 0.0
    %4025 = vmatprep.subr.mxu0 0.0
    %4026 = vmatpush1.msra.mxu0 0.0
    %4027 = vmatprep.subr.mxu0 0.0
    %4028 = vmatpush1.msra.mxu0 0.0
    %4029 = vmatprep.subr.mxu0 0.0
    %4030 = vmatpush1.msra.mxu0 0.0
    %4031 = vmatprep.subr.mxu0 0.0
    %4032 = vmatpush1.msra.mxu0 0.0
    %4033 = vmatprep.subr.mxu0 0.0
    %4034 = vmatpush1.msra.mxu0 0.0
    %4035 = vmatprep.subr.mxu0 0.0
    %4036 = vmatpush1.msra.mxu0 0.0
    %4037 = vmatprep.subr.mxu0 0.0
    %4038 = vmatpush1.msra.mxu0 0.0
    %4039 = vmatprep.subr.mxu0 0.0
    %4040 = vmatpush1.msra.mxu0 0.0
    %4041 = vmatprep.subr.mxu0 0.0
    %4042 = vmatpush1.msra.mxu0 0.0
    %4043 = vmatprep.subr.mxu0 0.0
    %4044 = vmatpush1.msra.mxu0 0.0
    %4045 = vmatprep.subr.mxu0 0.0
    %4046 = vmatpush1.msra.mxu0 0.0
    %4047 = vmatprep.subr.mxu0 0.0
    %4048 = vmatpush1.msra.mxu0 0.0
    %4049 = vmatprep.subr.mxu0 0.0
    %4050 = vmatpush1.msra.mxu0 0.0
    %4051 = vmatprep.subr.mxu0 0.0
    %4052 = vmatpush1.msra.mxu0 0.0
    %4053 = vmatprep.subr.mxu0 0.0
    %4054 = vmatpush1.msra.mxu0 0.0
    %4055 = vmatprep.subr.mxu0 0.0
    %4056 = vmatpush1.msra.mxu0 0.0
    %4057 = vmatprep.subr.mxu0 0.0
    %4058 = vmatpush1.msra.mxu0 0.0
    %4059 = vmatprep.subr.mxu0 0.0
    %4060 = vmatpush1.msra.mxu0 0.0
    %4061 = vmatprep.subr.mxu0 0.0
    %4062 = vmatpush1.msra.mxu0 0.0
    %4063 = vmatprep.subr.mxu0 0.0
    %4064 = vmatpush1.msra.mxu0 0.0
    %4065 = vmatprep.subr.mxu0 0.0
    %4066 = vmatpush1.msra.mxu0 0.0
    %4067 = vmatprep.mubr.f32.mxu0 0.0
    %4068 = vmatmul.mubr.f32.gmra.mrb[0].mxu0 %v3859
    %v4069 = vpop.f32.mrb[0].mxu0
    %v4070 = vadd.f32 0.0, %v4069
    %v4071 = vpop.f32.mrb[0].mxu0
    %v4072 = vadd.f32 0.0, %v4071
    %4073 = vdwg.mxu0
    %v4074 = vadd.f32 %v3850, %v3928
    %v4075 = vadd.f32 %v3851, %v3930
    %v4076 = vadd.f32 %v3852, %v3999
    %v4077 = vadd.f32 %v3853, %v4001
    %v4078 = vadd.f32 %v3854, %v4070
    %v4079 = vadd.f32 %v3855, %v4072
    %s4080 = scalar_lea.vmem %s8, 40
    %v4081 = vld [vmem:[%s4080] sm:$0xff]
    %4082 = vrot.lane.b32.xlu0 %v2894, 127
    %v4083 = vpop.permute.xlu0 %4082
    %4084 = vrot.lane.b32.xlu0 %v2895, 127
    %v4085 = vpop.permute.xlu0 %4084
    %4086 = vrot.lane.b32.xlu0 %v2896, 127
    %v4087 = vpop.permute.xlu0 %4086
    %4088 = vrot.lane.b32.xlu0 %v2897, 127
    %v4089 = vpop.permute.xlu0 %4088
    %4090 = vrot.lane.b32.xlu0 %v2898, 127
    %v4091 = vpop.permute.xlu0 %4090
    %4092 = vrot.lane.b32.xlu0 %v2899, 127
    %v4093 = vpop.permute.xlu0 %4092
    %v4094 = vsel %vm1846, %v4091, %v4093
    %v4095 = vsel %vm1846, %v4089, %v4091
    %v4096 = vsel %vm1846, %v4087, %v4089
    %v4097 = vsel %vm1846, %v4085, %v4087
    %v4098 = vsel %vm1846, %v4083, %v4085
    %v4099 = vsel %vm1846, %v4093, %v4083
    %v4101 = vsel %vm2939, %v4081, 0
    %4103 = vmatprep.subr.mxu0 %v4097
    %4104 = vmatpush1.msra.mxu0 %v4098
    %4105 = vmatprep.subr.mxu0 0.0
    %4106 = vmatpush1.msra.mxu0 0.0
    %4107 = vmatprep.subr.mxu0 0.0
    %4108 = vmatpush1.msra.mxu0 0.0
    %4109 = vmatprep.subr.mxu0 0.0
    %4110 = vmatpush1.msra.mxu0 0.0
    %4111 = vmatprep.subr.mxu0 0.0
    %4112 = vmatpush1.msra.mxu0 0.0
    %4113 = vmatprep.subr.mxu0 0.0
    %4114 = vmatpush1.msra.mxu0 0.0
    %4115 = vmatprep.subr.mxu0 0.0
    %4116 = vmatpush1.msra.mxu0 0.0
    %4117 = vmatprep.subr.mxu0 0.0
    %4118 = vmatpush1.msra.mxu0 0.0
    %4119 = vmatprep.subr.mxu0 0.0
    %4120 = vmatpush1.msra.mxu0 0.0
    %4121 = vmatprep.subr.mxu0 0.0
    %4122 = vmatpush1.msra.mxu0 0.0
    %4123 = vmatprep.subr.mxu0 0.0
    %4124 = vmatpush1.msra.mxu0 0.0
    %4125 = vmatprep.subr.mxu0 0.0
    %4126 = vmatpush1.msra.mxu0 0.0
    %4127 = vmatprep.subr.mxu0 0.0
    %4128 = vmatpush1.msra.mxu0 0.0
    %4129 = vmatprep.subr.mxu0 0.0
    %4130 = vmatpush1.msra.mxu0 0.0
    %4131 = vmatprep.subr.mxu0 0.0
    %4132 = vmatpush1.msra.mxu0 0.0
    %4133 = vmatprep.subr.mxu0 0.0
    %4134 = vmatpush1.msra.mxu0 0.0
    %4135 = vmatprep.subr.mxu0 0.0
    %4136 = vmatpush1.msra.mxu0 0.0
    %4137 = vmatprep.subr.mxu0 0.0
    %4138 = vmatpush1.msra.mxu0 0.0
    %4139 = vmatprep.subr.mxu0 0.0
    %4140 = vmatpush1.msra.mxu0 0.0
    %4141 = vmatprep.subr.mxu0 0.0
    %4142 = vmatpush1.msra.mxu0 0.0
    %4143 = vmatprep.subr.mxu0 0.0
    %4144 = vmatpush1.msra.mxu0 0.0
    %4145 = vmatprep.subr.mxu0 0.0
    %4146 = vmatpush1.msra.mxu0 0.0
    %4147 = vmatprep.subr.mxu0 0.0
    %4148 = vmatpush1.msra.mxu0 0.0
    %4149 = vmatprep.subr.mxu0 0.0
    %4150 = vmatpush1.msra.mxu0 0.0
    %4151 = vmatprep.subr.mxu0 0.0
    %4152 = vmatpush1.msra.mxu0 0.0
    %4153 = vmatprep.subr.mxu0 0.0
    %4154 = vmatpush1.msra.mxu0 0.0
    %4155 = vmatprep.subr.mxu0 0.0
    %4156 = vmatpush1.msra.mxu0 0.0
    %4157 = vmatprep.subr.mxu0 0.0
    %4158 = vmatpush1.msra.mxu0 0.0
    %4159 = vmatprep.subr.mxu0 0.0
    %4160 = vmatpush1.msra.mxu0 0.0
    %4161 = vmatprep.subr.mxu0 0.0
    %4162 = vmatpush1.msra.mxu0 0.0
    %4163 = vmatprep.subr.mxu0 0.0
    %4164 = vmatpush1.msra.mxu0 0.0
    %4165 = vmatprep.subr.mxu0 0.0
    %4166 = vmatpush1.msra.mxu0 0.0
    %4167 = vmatprep.mubr.f32.mxu0 0.0
    %4168 = vmatmul.mubr.f32.gmra.mrb[0].mxu0 %v4101
    %v4169 = vpop.f32.mrb[0].mxu0
    %v4170 = vadd.f32 0.0, %v4169
    %v4171 = vpop.f32.mrb[0].mxu0
    %v4172 = vadd.f32 0.0, %v4171
    %4173 = vdwg.mxu0
    %4174 = vmatprep.subr.mxu0 %v4095
    %4175 = vmatpush1.msra.mxu0 %v4096
    %4176 = vmatprep.subr.mxu0 0.0
    %4177 = vmatpush1.msra.mxu0 0.0
    %4178 = vmatprep.subr.mxu0 0.0
    %4179 = vmatpush1.msra.mxu0 0.0
    %4180 = vmatprep.subr.mxu0 0.0
    %4181 = vmatpush1.msra.mxu0 0.0
    %4182 = vmatprep.subr.mxu0 0.0
    %4183 = vmatpush1.msra.mxu0 0.0
    %4184 = vmatprep.subr.mxu0 0.0
    %4185 = vmatpush1.msra.mxu0 0.0
    %4186 = vmatprep.subr.mxu0 0.0
    %4187 = vmatpush1.msra.mxu0 0.0
    %4188 = vmatprep.subr.mxu0 0.0
    %4189 = vmatpush1.msra.mxu0 0.0
    %4190 = vmatprep.subr.mxu0 0.0
    %4191 = vmatpush1.msra.mxu0 0.0
    %4192 = vmatprep.subr.mxu0 0.0
    %4193 = vmatpush1.msra.mxu0 0.0
    %4194 = vmatprep.subr.mxu0 0.0
    %4195 = vmatpush1.msra.mxu0 0.0
    %4196 = vmatprep.subr.mxu0 0.0
    %4197 = vmatpush1.msra.mxu0 0.0
    %4198 = vmatprep.subr.mxu0 0.0
    %4199 = vmatpush1.msra.mxu0 0.0
    %4200 = vmatprep.subr.mxu0 0.0
    %4201 = vmatpush1.msra.mxu0 0.0
    %4202 = vmatprep.subr.mxu0 0.0
    %4203 = vmatpush1.msra.mxu0 0.0
    %4204 = vmatprep.subr.mxu0 0.0
    %4205 = vmatpush1.msra.mxu0 0.0
    %4206 = vmatprep.subr.mxu0 0.0
    %4207 = vmatpush1.msra.mxu0 0.0
    %4208 = vmatprep.subr.mxu0 0.0
    %4209 = vmatpush1.msra.mxu0 0.0
    %4210 = vmatprep.subr.mxu0 0.0
    %4211 = vmatpush1.msra.mxu0 0.0
    %4212 = vmatprep.subr.mxu0 0.0
    %4213 = vmatpush1.msra.mxu0 0.0
    %4214 = vmatprep.subr.mxu0 0.0
    %4215 = vmatpush1.msra.mxu0 0.0
    %4216 = vmatprep.subr.mxu0 0.0
    %4217 = vmatpush1.msra.mxu0 0.0
    %4218 = vmatprep.subr.mxu0 0.0
    %4219 = vmatpush1.msra.mxu0 0.0
    %4220 = vmatprep.subr.mxu0 0.0
    %4221 = vmatpush1.msra.mxu0 0.0
    %4222 = vmatprep.subr.mxu0 0.0
    %4223 = vmatpush1.msra.mxu0 0.0
    %4224 = vmatprep.subr.mxu0 0.0
    %4225 = vmatpush1.msra.mxu0 0.0
    %4226 = vmatprep.subr.mxu0 0.0
    %4227 = vmatpush1.msra.mxu0 0.0
    %4228 = vmatprep.subr.mxu0 0.0
    %4229 = vmatpush1.msra.mxu0 0.0
    %4230 = vmatprep.subr.mxu0 0.0
    %4231 = vmatpush1.msra.mxu0 0.0
    %4232 = vmatprep.subr.mxu0 0.0
    %4233 = vmatpush1.msra.mxu0 0.0
    %4234 = vmatprep.subr.mxu0 0.0
    %4235 = vmatpush1.msra.mxu0 0.0
    %4236 = vmatprep.subr.mxu0 0.0
    %4237 = vmatpush1.msra.mxu0 0.0
    %4238 = vmatprep.mubr.f32.mxu0 0.0
    %4239 = vmatmul.mubr.f32.gmra.mrb[0].mxu0 %v4101
    %v4240 = vpop.f32.mrb[0].mxu0
    %v4241 = vadd.f32 0.0, %v4240
    %v4242 = vpop.f32.mrb[0].mxu0
    %v4243 = vadd.f32 0.0, %v4242
    %4244 = vdwg.mxu0
    %4245 = vmatprep.subr.mxu0 %v4099
    %4246 = vmatpush1.msra.mxu0 %v4094
    %4247 = vmatprep.subr.mxu0 0.0
    %4248 = vmatpush1.msra.mxu0 0.0
    %4249 = vmatprep.subr.mxu0 0.0
    %4250 = vmatpush1.msra.mxu0 0.0
    %4251 = vmatprep.subr.mxu0 0.0
    %4252 = vmatpush1.msra.mxu0 0.0
    %4253 = vmatprep.subr.mxu0 0.0
    %4254 = vmatpush1.msra.mxu0 0.0
    %4255 = vmatprep.subr.mxu0 0.0
    %4256 = vmatpush1.msra.mxu0 0.0
    %4257 = vmatprep.subr.mxu0 0.0
    %4258 = vmatpush1.msra.mxu0 0.0
    %4259 = vmatprep.subr.mxu0 0.0
    %4260 = vmatpush1.msra.mxu0 0.0
    %4261 = vmatprep.subr.mxu0 0.0
    %4262 = vmatpush1.msra.mxu0 0.0
    %4263 = vmatprep.subr.mxu0 0.0
    %4264 = vmatpush1.msra.mxu0 0.0
    %4265 = vmatprep.subr.mxu0 0.0
    %4266 = vmatpush1.msra.mxu0 0.0
    %4267 = vmatprep.subr.mxu0 0.0
    %4268 = vmatpush1.msra.mxu0 0.0
    %4269 = vmatprep.subr.mxu0 0.0
    %4270 = vmatpush1.msra.mxu0 0.0
    %4271 = vmatprep.subr.mxu0 0.0
    %4272 = vmatpush1.msra.mxu0 0.0
    %4273 = vmatprep.subr.mxu0 0.0
    %4274 = vmatpush1.msra.mxu0 0.0
    %4275 = vmatprep.subr.mxu0 0.0
    %4276 = vmatpush1.msra.mxu0 0.0
    %4277 = vmatprep.subr.mxu0 0.0
    %4278 = vmatpush1.msra.mxu0 0.0
    %4279 = vmatprep.subr.mxu0 0.0
    %4280 = vmatpush1.msra.mxu0 0.0
    %4281 = vmatprep.subr.mxu0 0.0
    %4282 = vmatpush1.msra.mxu0 0.0
    %4283 = vmatprep.subr.mxu0 0.0
    %4284 = vmatpush1.msra.mxu0 0.0
    %4285 = vmatprep.subr.mxu0 0.0
    %4286 = vmatpush1.msra.mxu0 0.0
    %4287 = vmatprep.subr.mxu0 0.0
    %4288 = vmatpush1.msra.mxu0 0.0
    %4289 = vmatprep.subr.mxu0 0.0
    %4290 = vmatpush1.msra.mxu0 0.0
    %4291 = vmatprep.subr.mxu0 0.0
    %4292 = vmatpush1.msra.mxu0 0.0
    %4293 = vmatprep.subr.mxu0 0.0
    %4294 = vmatpush1.msra.mxu0 0.0
    %4295 = vmatprep.subr.mxu0 0.0
    %4296 = vmatpush1.msra.mxu0 0.0
    %4297 = vmatprep.subr.mxu0 0.0
    %4298 = vmatpush1.msra.mxu0 0.0
    %4299 = vmatprep.subr.mxu0 0.0
    %4300 = vmatpush1.msra.mxu0 0.0
    %4301 = vmatprep.subr.mxu0 0.0
    %4302 = vmatpush1.msra.mxu0 0.0
    %4303 = vmatprep.subr.mxu0 0.0
    %4304 = vmatpush1.msra.mxu0 0.0
    %4305 = vmatprep.subr.mxu0 0.0
    %4306 = vmatpush1.msra.mxu0 0.0
    %4307 = vmatprep.subr.mxu0 0.0
    %4308 = vmatpush1.msra.mxu0 0.0
    %4309 = vmatprep.mubr.f32.mxu0 0.0
    %4310 = vmatmul.mubr.f32.gmra.mrb[0].mxu0 %v4101
    %v4311 = vpop.f32.mrb[0].mxu0
    %v4312 = vadd.f32 0.0, %v4311
    %v4313 = vpop.f32.mrb[0].mxu0
    %v4314 = vadd.f32 0.0, %v4313
    %4315 = vdwg.mxu0
    %v4316 = vadd.f32 %v4074, %v4170
    %v4317 = vadd.f32 %v4075, %v4172
    %v4318 = vadd.f32 %v4076, %v4241
    %v4319 = vadd.f32 %v4077, %v4243
    %v4320 = vadd.f32 %v4078, %v4312
    %v4321 = vadd.f32 %v4079, %v4314
    %s4322 = scalar_lea.vmem %s8, 48
    %v4323 = vld [vmem:[%s4322] sm:$0xff]
    %4324 = vrot.lane.b32.xlu0 %v2894, 111
    %v4325 = vpop.permute.xlu0 %4324
    %4326 = vrot.lane.b32.xlu0 %v2895, 111
    %v4327 = vpop.permute.xlu0 %4326
    %4328 = vrot.lane.b32.xlu0 %v2896, 111
    %v4329 = vpop.permute.xlu0 %4328
    %4330 = vrot.lane.b32.xlu0 %v2897, 111
    %v4331 = vpop.permute.xlu0 %4330
    %4332 = vrot.lane.b32.xlu0 %v2898, 111
    %v4333 = vpop.permute.xlu0 %4332
    %4334 = vrot.lane.b32.xlu0 %v2899, 111
    %v4335 = vpop.permute.xlu0 %4334
    %v4336 = vsel %vm2107, %v4333, %v4335
    %v4337 = vsel %vm2107, %v4331, %v4333
    %v4338 = vsel %vm2107, %v4329, %v4331
    %v4339 = vsel %vm2107, %v4327, %v4329
    %v4340 = vsel %vm2107, %v4325, %v4327
    %v4341 = vsel %vm2107, %v4335, %v4325
    %v4343 = vsel %vm2939, %v4323, 0
    %4345 = vmatprep.subr.mxu0 %v4339
    %4346 = vmatpush1.msra.mxu0 %v4340
    %4347 = vmatprep.subr.mxu0 0.0
    %4348 = vmatpush1.msra.mxu0 0.0
    %4349 = vmatprep.subr.mxu0 0.0
    %4350 = vmatpush1.msra.mxu0 0.0
    %4351 = vmatprep.subr.mxu0 0.0
    %4352 = vmatpush1.msra.mxu0 0.0
    %4353 = vmatprep.subr.mxu0 0.0
    %4354 = vmatpush1.msra.mxu0 0.0
    %4355 = vmatprep.subr.mxu0 0.0
    %4356 = vmatpush1.msra.mxu0 0.0
    %4357 = vmatprep.subr.mxu0 0.0
    %4358 = vmatpush1.msra.mxu0 0.0
    %4359 = vmatprep.subr.mxu0 0.0
    %4360 = vmatpush1.msra.mxu0 0.0
    %4361 = vmatprep.subr.mxu0 0.0
    %4362 = vmatpush1.msra.mxu0 0.0
    %4363 = vmatprep.subr.mxu0 0.0
    %4364 = vmatpush1.msra.mxu0 0.0
    %4365 = vmatprep.subr.mxu0 0.0
    %4366 = vmatpush1.msra.mxu0 0.0
    %4367 = vmatprep.subr.mxu0 0.0
    %4368 = vmatpush1.msra.mxu0 0.0
    %4369 = vmatprep.subr.mxu0 0.0
    %4370 = vmatpush1.msra.mxu0 0.0
    %4371 = vmatprep.subr.mxu0 0.0
    %4372 = vmatpush1.msra.mxu0 0.0
    %4373 = vmatprep.subr.mxu0 0.0
    %4374 = vmatpush1.msra.mxu0 0.0
    %4375 = vmatprep.subr.mxu0 0.0
    %4376 = vmatpush1.msra.mxu0 0.0
    %4377 = vmatprep.subr.mxu0 0.0
    %4378 = vmatpush1.msra.mxu0 0.0
    %4379 = vmatprep.subr.mxu0 0.0
    %4380 = vmatpush1.msra.mxu0 0.0
    %4381 = vmatprep.subr.mxu0 0.0
    %4382 = vmatpush1.msra.mxu0 0.0
    %4383 = vmatprep.subr.mxu0 0.0
    %4384 = vmatpush1.msra.mxu0 0.0
    %4385 = vmatprep.subr.mxu0 0.0
    %4386 = vmatpush1.msra.mxu0 0.0
    %4387 = vmatprep.subr.mxu0 0.0
    %4388 = vmatpush1.msra.mxu0 0.0
    %4389 = vmatprep.subr.mxu0 0.0
    %4390 = vmatpush1.msra.mxu0 0.0
    %4391 = vmatprep.subr.mxu0 0.0
    %4392 = vmatpush1.msra.mxu0 0.0
    %4393 = vmatprep.subr.mxu0 0.0
    %4394 = vmatpush1.msra.mxu0 0.0
    %4395 = vmatprep.subr.mxu0 0.0
    %4396 = vmatpush1.msra.mxu0 0.0
    %4397 = vmatprep.subr.mxu0 0.0
    %4398 = vmatpush1.msra.mxu0 0.0
    %4399 = vmatprep.subr.mxu0 0.0
    %4400 = vmatpush1.msra.mxu0 0.0
    %4401 = vmatprep.subr.mxu0 0.0
    %4402 = vmatpush1.msra.mxu0 0.0
    %4403 = vmatprep.subr.mxu0 0.0
    %4404 = vmatpush1.msra.mxu0 0.0
    %4405 = vmatprep.subr.mxu0 0.0
    %4406 = vmatpush1.msra.mxu0 0.0
    %4407 = vmatprep.subr.mxu0 0.0
    %4408 = vmatpush1.msra.mxu0 0.0
    %4409 = vmatprep.mubr.f32.mxu0 0.0
    %4410 = vmatmul.mubr.f32.gmra.mrb[0].mxu0 %v4343
    %v4411 = vpop.f32.mrb[0].mxu0
    %v4412 = vadd.f32 0.0, %v4411
    %v4413 = vpop.f32.mrb[0].mxu0
    %v4414 = vadd.f32 0.0, %v4413
    %4415 = vdwg.mxu0
    %4416 = vmatprep.subr.mxu0 %v4337
    %4417 = vmatpush1.msra.mxu0 %v4338
    %4418 = vmatprep.subr.mxu0 0.0
    %4419 = vmatpush1.msra.mxu0 0.0
    %4420 = vmatprep.subr.mxu0 0.0
    %4421 = vmatpush1.msra.mxu0 0.0
    %4422 = vmatprep.subr.mxu0 0.0
    %4423 = vmatpush1.msra.mxu0 0.0
    %4424 = vmatprep.subr.mxu0 0.0
    %4425 = vmatpush1.msra.mxu0 0.0
    %4426 = vmatprep.subr.mxu0 0.0
    %4427 = vmatpush1.msra.mxu0 0.0
    %4428 = vmatprep.subr.mxu0 0.0
    %4429 = vmatpush1.msra.mxu0 0.0
    %4430 = vmatprep.subr.mxu0 0.0
    %4431 = vmatpush1.msra.mxu0 0.0
    %4432 = vmatprep.subr.mxu0 0.0
    %4433 = vmatpush1.msra.mxu0 0.0
    %4434 = vmatprep.subr.mxu0 0.0
    %4435 = vmatpush1.msra.mxu0 0.0
    %4436 = vmatprep.subr.mxu0 0.0
    %4437 = vmatpush1.msra.mxu0 0.0
    %4438 = vmatprep.subr.mxu0 0.0
    %4439 = vmatpush1.msra.mxu0 0.0
    %4440 = vmatprep.subr.mxu0 0.0
    %4441 = vmatpush1.msra.mxu0 0.0
    %4442 = vmatprep.subr.mxu0 0.0
    %4443 = vmatpush1.msra.mxu0 0.0
    %4444 = vmatprep.subr.mxu0 0.0
    %4445 = vmatpush1.msra.mxu0 0.0
    %4446 = vmatprep.subr.mxu0 0.0
    %4447 = vmatpush1.msra.mxu0 0.0
    %4448 = vmatprep.subr.mxu0 0.0
    %4449 = vmatpush1.msra.mxu0 0.0
    %4450 = vmatprep.subr.mxu0 0.0
    %4451 = vmatpush1.msra.mxu0 0.0
    %4452 = vmatprep.subr.mxu0 0.0
    %4453 = vmatpush1.msra.mxu0 0.0
    %4454 = vmatprep.subr.mxu0 0.0
    %4455 = vmatpush1.msra.mxu0 0.0
    %4456 = vmatprep.subr.mxu0 0.0
    %4457 = vmatpush1.msra.mxu0 0.0
    %4458 = vmatprep.subr.mxu0 0.0
    %4459 = vmatpush1.msra.mxu0 0.0
    %4460 = vmatprep.subr.mxu0 0.0
    %4461 = vmatpush1.msra.mxu0 0.0
    %4462 = vmatprep.subr.mxu0 0.0
    %4463 = vmatpush1.msra.mxu0 0.0
    %4464 = vmatprep.subr.mxu0 0.0
    %4465 = vmatpush1.msra.mxu0 0.0
    %4466 = vmatprep.subr.mxu0 0.0
    %4467 = vmatpush1.msra.mxu0 0.0
    %4468 = vmatprep.subr.mxu0 0.0
    %4469 = vmatpush1.msra.mxu0 0.0
    %4470 = vmatprep.subr.mxu0 0.0
    %4471 = vmatpush1.msra.mxu0 0.0
    %4472 = vmatprep.subr.mxu0 0.0
    %4473 = vmatpush1.msra.mxu0 0.0
    %4474 = vmatprep.subr.mxu0 0.0
    %4475 = vmatpush1.msra.mxu0 0.0
    %4476 = vmatprep.subr.mxu0 0.0
    %4477 = vmatpush1.msra.mxu0 0.0
    %4478 = vmatprep.subr.mxu0 0.0
    %4479 = vmatpush1.msra.mxu0 0.0
    %4480 = vmatprep.mubr.f32.mxu0 0.0
    %4481 = vmatmul.mubr.f32.gmra.mrb[0].mxu0 %v4343
    %v4482 = vpop.f32.mrb[0].mxu0
    %v4483 = vadd.f32 0.0, %v4482
    %v4484 = vpop.f32.mrb[0].mxu0
    %v4485 = vadd.f32 0.0, %v4484
    %4486 = vdwg.mxu0
    %4487 = vmatprep.subr.mxu0 %v4341
    %4488 = vmatpush1.msra.mxu0 %v4336
    %4489 = vmatprep.subr.mxu0 0.0
    %4490 = vmatpush1.msra.mxu0 0.0
    %4491 = vmatprep.subr.mxu0 0.0
    %4492 = vmatpush1.msra.mxu0 0.0
    %4493 = vmatprep.subr.mxu0 0.0
    %4494 = vmatpush1.msra.mxu0 0.0
    %4495 = vmatprep.subr.mxu0 0.0
    %4496 = vmatpush1.msra.mxu0 0.0
    %4497 = vmatprep.subr.mxu0 0.0
    %4498 = vmatpush1.msra.mxu0 0.0
    %4499 = vmatprep.subr.mxu0 0.0
    %4500 = vmatpush1.msra.mxu0 0.0
    %4501 = vmatprep.subr.mxu0 0.0
    %4502 = vmatpush1.msra.mxu0 0.0
    %4503 = vmatprep.subr.mxu0 0.0
    %4504 = vmatpush1.msra.mxu0 0.0
    %4505 = vmatprep.subr.mxu0 0.0
    %4506 = vmatpush1.msra.mxu0 0.0
    %4507 = vmatprep.subr.mxu0 0.0
    %4508 = vmatpush1.msra.mxu0 0.0
    %4509 = vmatprep.subr.mxu0 0.0
    %4510 = vmatpush1.msra.mxu0 0.0
    %4511 = vmatprep.subr.mxu0 0.0
    %4512 = vmatpush1.msra.mxu0 0.0
    %4513 = vmatprep.subr.mxu0 0.0
    %4514 = vmatpush1.msra.mxu0 0.0
    %4515 = vmatprep.subr.mxu0 0.0
    %4516 = vmatpush1.msra.mxu0 0.0
    %4517 = vmatprep.subr.mxu0 0.0
    %4518 = vmatpush1.msra.mxu0 0.0
    %4519 = vmatprep.subr.mxu0 0.0
    %4520 = vmatpush1.msra.mxu0 0.0
    %4521 = vmatprep.subr.mxu0 0.0
    %4522 = vmatpush1.msra.mxu0 0.0
    %4523 = vmatprep.subr.mxu0 0.0
    %4524 = vmatpush1.msra.mxu0 0.0
    %4525 = vmatprep.subr.mxu0 0.0
    %4526 = vmatpush1.msra.mxu0 0.0
    %4527 = vmatprep.subr.mxu0 0.0
    %4528 = vmatpush1.msra.mxu0 0.0
    %4529 = vmatprep.subr.mxu0 0.0
    %4530 = vmatpush1.msra.mxu0 0.0
    %4531 = vmatprep.subr.mxu0 0.0
    %4532 = vmatpush1.msra.mxu0 0.0
    %4533 = vmatprep.subr.mxu0 0.0
    %4534 = vmatpush1.msra.mxu0 0.0
    %4535 = vmatprep.subr.mxu0 0.0
    %4536 = vmatpush1.msra.mxu0 0.0
    %4537 = vmatprep.subr.mxu0 0.0
    %4538 = vmatpush1.msra.mxu0 0.0
    %4539 = vmatprep.subr.mxu0 0.0
    %4540 = vmatpush1.msra.mxu0 0.0
    %4541 = vmatprep.subr.mxu0 0.0
    %4542 = vmatpush1.msra.mxu0 0.0
    %4543 = vmatprep.subr.mxu0 0.0
    %4544 = vmatpush1.msra.mxu0 0.0
    %4545 = vmatprep.subr.mxu0 0.0
    %4546 = vmatpush1.msra.mxu0 0.0
    %4547 = vmatprep.subr.mxu0 0.0
    %4548 = vmatpush1.msra.mxu0 0.0
    %4549 = vmatprep.subr.mxu0 0.0
    %4550 = vmatpush1.msra.mxu0 0.0
    %4551 = vmatprep.mubr.f32.mxu0 0.0
    %4552 = vmatmul.mubr.f32.gmra.mrb[0].mxu0 %v4343
    %v4553 = vpop.f32.mrb[0].mxu0
    %v4554 = vadd.f32 0.0, %v4553
    %v4555 = vpop.f32.mrb[0].mxu0
    %v4556 = vadd.f32 0.0, %v4555
    %4557 = vdwg.mxu0
    %v4558 = vadd.f32 %v4316, %v4412
    %v4559 = vadd.f32 %v4317, %v4414
    %v4560 = vadd.f32 %v4318, %v4483
    %v4561 = vadd.f32 %v4319, %v4485
    %v4562 = vadd.f32 %v4320, %v4554
    %v4563 = vadd.f32 %v4321, %v4556
    %s4564 = scalar_lea.vmem %s8, 56
    %v4565 = vld [vmem:[%s4564] sm:$0xff]
    %4566 = vrot.lane.b32.xlu0 %v2894, 110
    %v4567 = vpop.permute.xlu0 %4566
    %4568 = vrot.lane.b32.xlu0 %v2895, 110
    %v4569 = vpop.permute.xlu0 %4568
    %4570 = vrot.lane.b32.xlu0 %v2896, 110
    %v4571 = vpop.permute.xlu0 %4570
    %4572 = vrot.lane.b32.xlu0 %v2897, 110
    %v4573 = vpop.permute.xlu0 %4572
    %4574 = vrot.lane.b32.xlu0 %v2898, 110
    %v4575 = vpop.permute.xlu0 %4574
    %4576 = vrot.lane.b32.xlu0 %v2899, 110
    %v4577 = vpop.permute.xlu0 %4576
    %v4578 = vsel %vm2368, %v4575, %v4577
    %v4579 = vsel %vm2368, %v4573, %v4575
    %v4580 = vsel %vm2368, %v4571, %v4573
    %v4581 = vsel %vm2368, %v4569, %v4571
    %v4582 = vsel %vm2368, %v4567, %v4569
    %v4583 = vsel %vm2368, %v4577, %v4567
    %v4585 = vsel %vm2939, %v4565, 0
    %4587 = vmatprep.subr.mxu0 %v4581
    %4588 = vmatpush1.msra.mxu0 %v4582
    %4589 = vmatprep.subr.mxu0 0.0
    %4590 = vmatpush1.msra.mxu0 0.0
    %4591 = vmatprep.subr.mxu0 0.0
    %4592 = vmatpush1.msra.mxu0 0.0
    %4593 = vmatprep.subr.mxu0 0.0
    %4594 = vmatpush1.msra.mxu0 0.0
    %4595 = vmatprep.subr.mxu0 0.0
    %4596 = vmatpush1.msra.mxu0 0.0
    %4597 = vmatprep.subr.mxu0 0.0
    %4598 = vmatpush1.msra.mxu0 0.0
    %4599 = vmatprep.subr.mxu0 0.0
    %4600 = vmatpush1.msra.mxu0 0.0
    %4601 = vmatprep.subr.mxu0 0.0
    %4602 = vmatpush1.msra.mxu0 0.0
    %4603 = vmatprep.subr.mxu0 0.0
    %4604 = vmatpush1.msra.mxu0 0.0
    %4605 = vmatprep.subr.mxu0 0.0
    %4606 = vmatpush1.msra.mxu0 0.0
    %4607 = vmatprep.subr.mxu0 0.0
    %4608 = vmatpush1.msra.mxu0 0.0
    %4609 = vmatprep.subr.mxu0 0.0
    %4610 = vmatpush1.msra.mxu0 0.0
    %4611 = vmatprep.subr.mxu0 0.0
    %4612 = vmatpush1.msra.mxu0 0.0
    %4613 = vmatprep.subr.mxu0 0.0
    %4614 = vmatpush1.msra.mxu0 0.0
    %4615 = vmatprep.subr.mxu0 0.0
    %4616 = vmatpush1.msra.mxu0 0.0
    %4617 = vmatprep.subr.mxu0 0.0
    %4618 = vmatpush1.msra.mxu0 0.0
    %4619 = vmatprep.subr.mxu0 0.0
    %4620 = vmatpush1.msra.mxu0 0.0
    %4621 = vmatprep.subr.mxu0 0.0
    %4622 = vmatpush1.msra.mxu0 0.0
    %4623 = vmatprep.subr.mxu0 0.0
    %4624 = vmatpush1.msra.mxu0 0.0
    %4625 = vmatprep.subr.mxu0 0.0
    %4626 = vmatpush1.msra.mxu0 0.0
    %4627 = vmatprep.subr.mxu0 0.0
    %4628 = vmatpush1.msra.mxu0 0.0
    %4629 = vmatprep.subr.mxu0 0.0
    %4630 = vmatpush1.msra.mxu0 0.0
    %4631 = vmatprep.subr.mxu0 0.0
    %4632 = vmatpush1.msra.mxu0 0.0
    %4633 = vmatprep.subr.mxu0 0.0
    %4634 = vmatpush1.msra.mxu0 0.0
    %4635 = vmatprep.subr.mxu0 0.0
    %4636 = vmatpush1.msra.mxu0 0.0
    %4637 = vmatprep.subr.mxu0 0.0
    %4638 = vmatpush1.msra.mxu0 0.0
    %4639 = vmatprep.subr.mxu0 0.0
    %4640 = vmatpush1.msra.mxu0 0.0
    %4641 = vmatprep.subr.mxu0 0.0
    %4642 = vmatpush1.msra.mxu0 0.0
    %4643 = vmatprep.subr.mxu0 0.0
    %4644 = vmatpush1.msra.mxu0 0.0
    %4645 = vmatprep.subr.mxu0 0.0
    %4646 = vmatpush1.msra.mxu0 0.0
    %4647 = vmatprep.subr.mxu0 0.0
    %4648 = vmatpush1.msra.mxu0 0.0
    %4649 = vmatprep.subr.mxu0 0.0
    %4650 = vmatpush1.msra.mxu0 0.0
    %4651 = vmatprep.mubr.f32.mxu0 0.0
    %4652 = vmatmul.mubr.f32.gmra.mrb[0].mxu0 %v4585
    %v4653 = vpop.f32.mrb[0].mxu0
    %v4654 = vadd.f32 0.0, %v4653
    %v4655 = vpop.f32.mrb[0].mxu0
    %v4656 = vadd.f32 0.0, %v4655
    %4657 = vdwg.mxu0
    %4658 = vmatprep.subr.mxu0 %v4579
    %4659 = vmatpush1.msra.mxu0 %v4580
    %4660 = vmatprep.subr.mxu0 0.0
    %4661 = vmatpush1.msra.mxu0 0.0
    %4662 = vmatprep.subr.mxu0 0.0
    %4663 = vmatpush1.msra.mxu0 0.0
    %4664 = vmatprep.subr.mxu0 0.0
    %4665 = vmatpush1.msra.mxu0 0.0
    %4666 = vmatprep.subr.mxu0 0.0
    %4667 = vmatpush1.msra.mxu0 0.0
    %4668 = vmatprep.subr.mxu0 0.0
    %4669 = vmatpush1.msra.mxu0 0.0
    %4670 = vmatprep.subr.mxu0 0.0
    %4671 = vmatpush1.msra.mxu0 0.0
    %4672 = vmatprep.subr.mxu0 0.0
    %4673 = vmatpush1.msra.mxu0 0.0
    %4674 = vmatprep.subr.mxu0 0.0
    %4675 = vmatpush1.msra.mxu0 0.0
    %4676 = vmatprep.subr.mxu0 0.0
    %4677 = vmatpush1.msra.mxu0 0.0
    %4678 = vmatprep.subr.mxu0 0.0
    %4679 = vmatpush1.msra.mxu0 0.0
    %4680 = vmatprep.subr.mxu0 0.0
    %4681 = vmatpush1.msra.mxu0 0.0
    %4682 = vmatprep.subr.mxu0 0.0
    %4683 = vmatpush1.msra.mxu0 0.0
    %4684 = vmatprep.subr.mxu0 0.0
    %4685 = vmatpush1.msra.mxu0 0.0
    %4686 = vmatprep.subr.mxu0 0.0
    %4687 = vmatpush1.msra.mxu0 0.0
    %4688 = vmatprep.subr.mxu0 0.0
    %4689 = vmatpush1.msra.mxu0 0.0
    %4690 = vmatprep.subr.mxu0 0.0
    %4691 = vmatpush1.msra.mxu0 0.0
    %4692 = vmatprep.subr.mxu0 0.0
    %4693 = vmatpush1.msra.mxu0 0.0
    %4694 = vmatprep.subr.mxu0 0.0
    %4695 = vmatpush1.msra.mxu0 0.0
    %4696 = vmatprep.subr.mxu0 0.0
    %4697 = vmatpush1.msra.mxu0 0.0
    %4698 = vmatprep.subr.mxu0 0.0
    %4699 = vmatpush1.msra.mxu0 0.0
    %4700 = vmatprep.subr.mxu0 0.0
    %4701 = vmatpush1.msra.mxu0 0.0
    %4702 = vmatprep.subr.mxu0 0.0
    %4703 = vmatpush1.msra.mxu0 0.0
    %4704 = vmatprep.subr.mxu0 0.0
    %4705 = vmatpush1.msra.mxu0 0.0
    %4706 = vmatprep.subr.mxu0 0.0
    %4707 = vmatpush1.msra.mxu0 0.0
    %4708 = vmatprep.subr.mxu0 0.0
    %4709 = vmatpush1.msra.mxu0 0.0
    %4710 = vmatprep.subr.mxu0 0.0
    %4711 = vmatpush1.msra.mxu0 0.0
    %4712 = vmatprep.subr.mxu0 0.0
    %4713 = vmatpush1.msra.mxu0 0.0
    %4714 = vmatprep.subr.mxu0 0.0
    %4715 = vmatpush1.msra.mxu0 0.0
    %4716 = vmatprep.subr.mxu0 0.0
    %4717 = vmatpush1.msra.mxu0 0.0
    %4718 = vmatprep.subr.mxu0 0.0
    %4719 = vmatpush1.msra.mxu0 0.0
    %4720 = vmatprep.subr.mxu0 0.0
    %4721 = vmatpush1.msra.mxu0 0.0
    %4722 = vmatprep.mubr.f32.mxu0 0.0
    %4723 = vmatmul.mubr.f32.gmra.mrb[0].mxu0 %v4585
    %v4724 = vpop.f32.mrb[0].mxu0
    %v4725 = vadd.f32 0.0, %v4724
    %v4726 = vpop.f32.mrb[0].mxu0
    %v4727 = vadd.f32 0.0, %v4726
    %4728 = vdwg.mxu0
    %4729 = vmatprep.subr.mxu0 %v4583
    %4730 = vmatpush1.msra.mxu0 %v4578
    %4731 = vmatprep.subr.mxu0 0.0
    %4732 = vmatpush1.msra.mxu0 0.0
    %4733 = vmatprep.subr.mxu0 0.0
    %4734 = vmatpush1.msra.mxu0 0.0
    %4735 = vmatprep.subr.mxu0 0.0
    %4736 = vmatpush1.msra.mxu0 0.0
    %4737 = vmatprep.subr.mxu0 0.0
    %4738 = vmatpush1.msra.mxu0 0.0
    %4739 = vmatprep.subr.mxu0 0.0
    %4740 = vmatpush1.msra.mxu0 0.0
    %4741 = vmatprep.subr.mxu0 0.0
    %4742 = vmatpush1.msra.mxu0 0.0
    %4743 = vmatprep.subr.mxu0 0.0
    %4744 = vmatpush1.msra.mxu0 0.0
    %4745 = vmatprep.subr.mxu0 0.0
    %4746 = vmatpush1.msra.mxu0 0.0
    %4747 = vmatprep.subr.mxu0 0.0
    %4748 = vmatpush1.msra.mxu0 0.0
    %4749 = vmatprep.subr.mxu0 0.0
    %4750 = vmatpush1.msra.mxu0 0.0
    %4751 = vmatprep.subr.mxu0 0.0
    %4752 = vmatpush1.msra.mxu0 0.0
    %4753 = vmatprep.subr.mxu0 0.0
    %4754 = vmatpush1.msra.mxu0 0.0
    %4755 = vmatprep.subr.mxu0 0.0
    %4756 = vmatpush1.msra.mxu0 0.0
    %4757 = vmatprep.subr.mxu0 0.0
    %4758 = vmatpush1.msra.mxu0 0.0
    %4759 = vmatprep.subr.mxu0 0.0
    %4760 = vmatpush1.msra.mxu0 0.0
    %4761 = vmatprep.subr.mxu0 0.0
    %4762 = vmatpush1.msra.mxu0 0.0
    %4763 = vmatprep.subr.mxu0 0.0
    %4764 = vmatpush1.msra.mxu0 0.0
    %4765 = vmatprep.subr.mxu0 0.0
    %4766 = vmatpush1.msra.mxu0 0.0
    %4767 = vmatprep.subr.mxu0 0.0
    %4768 = vmatpush1.msra.mxu0 0.0
    %4769 = vmatprep.subr.mxu0 0.0
    %4770 = vmatpush1.msra.mxu0 0.0
    %4771 = vmatprep.subr.mxu0 0.0
    %4772 = vmatpush1.msra.mxu0 0.0
    %4773 = vmatprep.subr.mxu0 0.0
    %4774 = vmatpush1.msra.mxu0 0.0
    %4775 = vmatprep.subr.mxu0 0.0
    %4776 = vmatpush1.msra.mxu0 0.0
    %4777 = vmatprep.subr.mxu0 0.0
    %4778 = vmatpush1.msra.mxu0 0.0
    %4779 = vmatprep.subr.mxu0 0.0
    %4780 = vmatpush1.msra.mxu0 0.0
    %4781 = vmatprep.subr.mxu0 0.0
    %4782 = vmatpush1.msra.mxu0 0.0
    %4783 = vmatprep.subr.mxu0 0.0
    %4784 = vmatpush1.msra.mxu0 0.0
    %4785 = vmatprep.subr.mxu0 0.0
    %4786 = vmatpush1.msra.mxu0 0.0
    %4787 = vmatprep.subr.mxu0 0.0
    %4788 = vmatpush1.msra.mxu0 0.0
    %4789 = vmatprep.subr.mxu0 0.0
    %4790 = vmatpush1.msra.mxu0 0.0
    %4791 = vmatprep.subr.mxu0 0.0
    %4792 = vmatpush1.msra.mxu0 0.0
    %4793 = vmatprep.mubr.f32.mxu0 0.0
    %4794 = vmatmul.mubr.f32.gmra.mrb[0].mxu0 %v4585
    %v4795 = vpop.f32.mrb[0].mxu0
    %v4796 = vadd.f32 0.0, %v4795
    %v4797 = vpop.f32.mrb[0].mxu0
    %v4798 = vadd.f32 0.0, %v4797
    %4799 = vdwg.mxu0
    %v4800 = vadd.f32 %v4558, %v4654
    %v4801 = vadd.f32 %v4559, %v4656
    %v4802 = vadd.f32 %v4560, %v4725
    %v4803 = vadd.f32 %v4561, %v4727
    %v4804 = vadd.f32 %v4562, %v4796
    %v4805 = vadd.f32 %v4563, %v4798
    %s4806 = scalar_lea.vmem %s8, 64
    %v4807 = vld [vmem:[%s4806] sm:$0xff]
    %4808 = vrot.lane.b32.xlu0 %v2894, 109
    %v4809 = vpop.permute.xlu0 %4808
    %4810 = vrot.lane.b32.xlu0 %v2895, 109
    %v4811 = vpop.permute.xlu0 %4810
    %4812 = vrot.lane.b32.xlu0 %v2896, 109
    %v4813 = vpop.permute.xlu0 %4812
    %4814 = vrot.lane.b32.xlu0 %v2897, 109
    %v4815 = vpop.permute.xlu0 %4814
    %4816 = vrot.lane.b32.xlu0 %v2898, 109
    %v4817 = vpop.permute.xlu0 %4816
    %4818 = vrot.lane.b32.xlu0 %v2899, 109
    %v4819 = vpop.permute.xlu0 %4818
    %v4820 = vsel %vm2629, %v4817, %v4819
    %v4821 = vsel %vm2629, %v4815, %v4817
    %v4822 = vsel %vm2629, %v4813, %v4815
    %v4823 = vsel %vm2629, %v4811, %v4813
    %v4824 = vsel %vm2629, %v4809, %v4811
    %v4825 = vsel %vm2629, %v4819, %v4809
    %v4827 = vsel %vm2939, %v4807, 0
    %4829 = vmatprep.subr.mxu0 %v4823
    %4830 = vmatpush1.msra.mxu0 %v4824
    %4831 = vmatprep.subr.mxu0 0.0
    %4832 = vmatpush1.msra.mxu0 0.0
    %4833 = vmatprep.subr.mxu0 0.0
    %4834 = vmatpush1.msra.mxu0 0.0
    %4835 = vmatprep.subr.mxu0 0.0
    %4836 = vmatpush1.msra.mxu0 0.0
    %4837 = vmatprep.subr.mxu0 0.0
    %4838 = vmatpush1.msra.mxu0 0.0
    %4839 = vmatprep.subr.mxu0 0.0
    %4840 = vmatpush1.msra.mxu0 0.0
    %4841 = vmatprep.subr.mxu0 0.0
    %4842 = vmatpush1.msra.mxu0 0.0
    %4843 = vmatprep.subr.mxu0 0.0
    %4844 = vmatpush1.msra.mxu0 0.0
    %4845 = vmatprep.subr.mxu0 0.0
    %4846 = vmatpush1.msra.mxu0 0.0
    %4847 = vmatprep.subr.mxu0 0.0
    %4848 = vmatpush1.msra.mxu0 0.0
    %4849 = vmatprep.subr.mxu0 0.0
    %4850 = vmatpush1.msra.mxu0 0.0
    %4851 = vmatprep.subr.mxu0 0.0
    %4852 = vmatpush1.msra.mxu0 0.0
    %4853 = vmatprep.subr.mxu0 0.0
    %4854 = vmatpush1.msra.mxu0 0.0
    %4855 = vmatprep.subr.mxu0 0.0
    %4856 = vmatpush1.msra.mxu0 0.0
    %4857 = vmatprep.subr.mxu0 0.0
    %4858 = vmatpush1.msra.mxu0 0.0
    %4859 = vmatprep.subr.mxu0 0.0
    %4860 = vmatpush1.msra.mxu0 0.0
    %4861 = vmatprep.subr.mxu0 0.0
    %4862 = vmatpush1.msra.mxu0 0.0
    %4863 = vmatprep.subr.mxu0 0.0
    %4864 = vmatpush1.msra.mxu0 0.0
    %4865 = vmatprep.subr.mxu0 0.0
    %4866 = vmatpush1.msra.mxu0 0.0
    %4867 = vmatprep.subr.mxu0 0.0
    %4868 = vmatpush1.msra.mxu0 0.0
    %4869 = vmatprep.subr.mxu0 0.0
    %4870 = vmatpush1.msra.mxu0 0.0
    %4871 = vmatprep.subr.mxu0 0.0
    %4872 = vmatpush1.msra.mxu0 0.0
    %4873 = vmatprep.subr.mxu0 0.0
    %4874 = vmatpush1.msra.mxu0 0.0
    %4875 = vmatprep.subr.mxu0 0.0
    %4876 = vmatpush1.msra.mxu0 0.0
    %4877 = vmatprep.subr.mxu0 0.0
    %4878 = vmatpush1.msra.mxu0 0.0
    %4879 = vmatprep.subr.mxu0 0.0
    %4880 = vmatpush1.msra.mxu0 0.0
    %4881 = vmatprep.subr.mxu0 0.0
    %4882 = vmatpush1.msra.mxu0 0.0
    %4883 = vmatprep.subr.mxu0 0.0
    %4884 = vmatpush1.msra.mxu0 0.0
    %4885 = vmatprep.subr.mxu0 0.0
    %4886 = vmatpush1.msra.mxu0 0.0
    %4887 = vmatprep.subr.mxu0 0.0
    %4888 = vmatpush1.msra.mxu0 0.0
    %4889 = vmatprep.subr.mxu0 0.0
    %4890 = vmatpush1.msra.mxu0 0.0
    %4891 = vmatprep.subr.mxu0 0.0
    %4892 = vmatpush1.msra.mxu0 0.0
    %4893 = vmatprep.mubr.f32.mxu0 0.0
    %4894 = vmatmul.mubr.f32.gmra.mrb[0].mxu0 %v4827
    %v4895 = vpop.f32.mrb[0].mxu0
    %v4896 = vadd.f32 0.0, %v4895
    %v4897 = vpop.f32.mrb[0].mxu0
    %v4898 = vadd.f32 0.0, %v4897
    %4899 = vdwg.mxu0
    %4900 = vmatprep.subr.mxu0 %v4821
    %4901 = vmatpush1.msra.mxu0 %v4822
    %4902 = vmatprep.subr.mxu0 0.0
    %4903 = vmatpush1.msra.mxu0 0.0
    %4904 = vmatprep.subr.mxu0 0.0
    %4905 = vmatpush1.msra.mxu0 0.0
    %4906 = vmatprep.subr.mxu0 0.0
    %4907 = vmatpush1.msra.mxu0 0.0
    %4908 = vmatprep.subr.mxu0 0.0
    %4909 = vmatpush1.msra.mxu0 0.0
    %4910 = vmatprep.subr.mxu0 0.0
    %4911 = vmatpush1.msra.mxu0 0.0
    %4912 = vmatprep.subr.mxu0 0.0
    %4913 = vmatpush1.msra.mxu0 0.0
    %4914 = vmatprep.subr.mxu0 0.0
    %4915 = vmatpush1.msra.mxu0 0.0
    %4916 = vmatprep.subr.mxu0 0.0
    %4917 = vmatpush1.msra.mxu0 0.0
    %4918 = vmatprep.subr.mxu0 0.0
    %4919 = vmatpush1.msra.mxu0 0.0
    %4920 = vmatprep.subr.mxu0 0.0
    %4921 = vmatpush1.msra.mxu0 0.0
    %4922 = vmatprep.subr.mxu0 0.0
    %4923 = vmatpush1.msra.mxu0 0.0
    %4924 = vmatprep.subr.mxu0 0.0
    %4925 = vmatpush1.msra.mxu0 0.0
    %4926 = vmatprep.subr.mxu0 0.0
    %4927 = vmatpush1.msra.mxu0 0.0
    %4928 = vmatprep.subr.mxu0 0.0
    %4929 = vmatpush1.msra.mxu0 0.0
    %4930 = vmatprep.subr.mxu0 0.0
    %4931 = vmatpush1.msra.mxu0 0.0
    %4932 = vmatprep.subr.mxu0 0.0
    %4933 = vmatpush1.msra.mxu0 0.0
    %4934 = vmatprep.subr.mxu0 0.0
    %4935 = vmatpush1.msra.mxu0 0.0
    %4936 = vmatprep.subr.mxu0 0.0
    %4937 = vmatpush1.msra.mxu0 0.0
    %4938 = vmatprep.subr.mxu0 0.0
    %4939 = vmatpush1.msra.mxu0 0.0
    %4940 = vmatprep.subr.mxu0 0.0
    %4941 = vmatpush1.msra.mxu0 0.0
    %4942 = vmatprep.subr.mxu0 0.0
    %4943 = vmatpush1.msra.mxu0 0.0
    %4944 = vmatprep.subr.mxu0 0.0
    %4945 = vmatpush1.msra.mxu0 0.0
    %4946 = vmatprep.subr.mxu0 0.0
    %4947 = vmatpush1.msra.mxu0 0.0
    %4948 = vmatprep.subr.mxu0 0.0
    %4949 = vmatpush1.msra.mxu0 0.0
    %4950 = vmatprep.subr.mxu0 0.0
    %4951 = vmatpush1.msra.mxu0 0.0
    %4952 = vmatprep.subr.mxu0 0.0
    %4953 = vmatpush1.msra.mxu0 0.0
    %4954 = vmatprep.subr.mxu0 0.0
    %4955 = vmatpush1.msra.mxu0 0.0
    %4956 = vmatprep.subr.mxu0 0.0
    %4957 = vmatpush1.msra.mxu0 0.0
    %4958 = vmatprep.subr.mxu0 0.0
    %4959 = vmatpush1.msra.mxu0 0.0
    %4960 = vmatprep.subr.mxu0 0.0
    %4961 = vmatpush1.msra.mxu0 0.0
    %4962 = vmatprep.subr.mxu0 0.0
    %4963 = vmatpush1.msra.mxu0 0.0
    %4964 = vmatprep.mubr.f32.mxu0 0.0
    %4965 = vmatmul.mubr.f32.gmra.mrb[0].mxu0 %v4827
    %v4966 = vpop.f32.mrb[0].mxu0
    %v4967 = vadd.f32 0.0, %v4966
    %v4968 = vpop.f32.mrb[0].mxu0
    %v4969 = vadd.f32 0.0, %v4968
    %4970 = vdwg.mxu0
    %4971 = vmatprep.subr.mxu0 %v4825
    %4972 = vmatpush1.msra.mxu0 %v4820
    %4973 = vmatprep.subr.mxu0 0.0
    %4974 = vmatpush1.msra.mxu0 0.0
    %4975 = vmatprep.subr.mxu0 0.0
    %4976 = vmatpush1.msra.mxu0 0.0
    %4977 = vmatprep.subr.mxu0 0.0
    %4978 = vmatpush1.msra.mxu0 0.0
    %4979 = vmatprep.subr.mxu0 0.0
    %4980 = vmatpush1.msra.mxu0 0.0
    %4981 = vmatprep.subr.mxu0 0.0
    %4982 = vmatpush1.msra.mxu0 0.0
    %4983 = vmatprep.subr.mxu0 0.0
    %4984 = vmatpush1.msra.mxu0 0.0
    %4985 = vmatprep.subr.mxu0 0.0
    %4986 = vmatpush1.msra.mxu0 0.0
    %4987 = vmatprep.subr.mxu0 0.0
    %4988 = vmatpush1.msra.mxu0 0.0
    %4989 = vmatprep.subr.mxu0 0.0
    %4990 = vmatpush1.msra.mxu0 0.0
    %4991 = vmatprep.subr.mxu0 0.0
    %4992 = vmatpush1.msra.mxu0 0.0
    %4993 = vmatprep.subr.mxu0 0.0
    %4994 = vmatpush1.msra.mxu0 0.0
    %4995 = vmatprep.subr.mxu0 0.0
    %4996 = vmatpush1.msra.mxu0 0.0
    %4997 = vmatprep.subr.mxu0 0.0
    %4998 = vmatpush1.msra.mxu0 0.0
    %4999 = vmatprep.subr.mxu0 0.0
    %5000 = vmatpush1.msra.mxu0 0.0
    %5001 = vmatprep.subr.mxu0 0.0
    %5002 = vmatpush1.msra.mxu0 0.0
    %5003 = vmatprep.subr.mxu0 0.0
    %5004 = vmatpush1.msra.mxu0 0.0
    %5005 = vmatprep.subr.mxu0 0.0
    %5006 = vmatpush1.msra.mxu0 0.0
    %5007 = vmatprep.subr.mxu0 0.0
    %5008 = vmatpush1.msra.mxu0 0.0
    %5009 = vmatprep.subr.mxu0 0.0
    %5010 = vmatpush1.msra.mxu0 0.0
    %5011 = vmatprep.subr.mxu0 0.0
    %5012 = vmatpush1.msra.mxu0 0.0
    %5013 = vmatprep.subr.mxu0 0.0
    %5014 = vmatpush1.msra.mxu0 0.0
    %5015 = vmatprep.subr.mxu0 0.0
    %5016 = vmatpush1.msra.mxu0 0.0
    %5017 = vmatprep.subr.mxu0 0.0
    %5018 = vmatpush1.msra.mxu0 0.0
    %5019 = vmatprep.subr.mxu0 0.0
    %5020 = vmatpush1.msra.mxu0 0.0
    %5021 = vmatprep.subr.mxu0 0.0
    %5022 = vmatpush1.msra.mxu0 0.0
    %5023 = vmatprep.subr.mxu0 0.0
    %5024 = vmatpush1.msra.mxu0 0.0
    %5025 = vmatprep.subr.mxu0 0.0
    %5026 = vmatpush1.msra.mxu0 0.0
    %5027 = vmatprep.subr.mxu0 0.0
    %5028 = vmatpush1.msra.mxu0 0.0
    %5029 = vmatprep.subr.mxu0 0.0
    %5030 = vmatpush1.msra.mxu0 0.0
    %5031 = vmatprep.subr.mxu0 0.0
    %5032 = vmatpush1.msra.mxu0 0.0
    %5033 = vmatprep.subr.mxu0 0.0
    %5034 = vmatpush1.msra.mxu0 0.0
    %5035 = vmatprep.mubr.f32.mxu0 0.0
    %5036 = vmatmul.mubr.f32.gmra.mrb[0].mxu0 %v4827
    %v5037 = vpop.f32.mrb[0].mxu0
    %v5038 = vadd.f32 0.0, %v5037
    %v5039 = vpop.f32.mrb[0].mxu0
    %v5040 = vadd.f32 0.0, %v5039
    %5041 = vdwg.mxu0
    %v5042 = vadd.f32 %v4800, %v4896
    %v5043 = vadd.f32 %v4801, %v4898
    %v5044 = vadd.f32 %v4802, %v4967
    %v5045 = vadd.f32 %v4803, %v4969
    %v5046 = vadd.f32 %v4804, %v5038
    %v5047 = vadd.f32 %v4805, %v5040
    %v5048 = vld [vmem:[%s9] sm:$0xff]
    %5050 = vset.pattern.permute.xlu0 0
    %5051 = vperm.xlu0 %5050, %v5048
    %v5052 = vpop.permute.xlu0 %5051
    %v5054 = vmul.f32 %v5042, %v5052
    %v5055 = vmul.f32 %v5043, %v5052
    %v5056 = vmul.f32 %v5044, %v5052
    %v5057 = vmul.f32 %v5045, %v5052
    %v5058 = vmul.f32 %v5046, %v5052
    %v5059 = vmul.f32 %v5047, %v5052
    %v5060 = vld [vmem:[%s10] sm:$0xff]
    %5062 = vset.pattern.permute.xlu0 0
    %5063 = vperm.xlu0 %5062, %v5060
    %v5064 = vpop.permute.xlu0 %5063
    %v5066 = vadd.f32 %v5054, %v5064
    %v5067 = vadd.f32 %v5055, %v5064
    %v5068 = vadd.f32 %v5056, %v5064
    %v5069 = vadd.f32 %v5057, %v5064
    %v5070 = vadd.f32 %v5058, %v5064
    %v5071 = vadd.f32 %v5059, %v5064
    %v5072 = vmax.f32 %v5066, 0.0
    %v5073 = vmax.f32 %v5067, 0.0
    %v5074 = vmax.f32 %v5068, 0.0
    %v5075 = vmax.f32 %v5069, 0.0
    %v5076 = vmax.f32 %v5070, 0.0
    %v5077 = vmax.f32 %v5071, 0.0
    %5078 = vst [vmem:[#allocation5] sm:$0xff] %v5072
    %5079 = vst [vmem:[#allocation5 + $0x8] sm:$0xff] %v5073
    %5080 = vst [vmem:[#allocation5 + $0x10] sm:$0xff] %v5074
    %5081 = vst [vmem:[#allocation5 + $0x18] sm:$0xff] %v5075
    %5082 = vst [vmem:[#allocation5 + $0x20] sm:$0xff] %v5076
    %5083 = vst [vmem:[#allocation5 + $0x28] sm:$0xff] %v5077
    // Predicated region
    $region50: #{tpu_custom_call.1} parent=1 // pred_check
      _
    $region51: #{tpu_custom_call.1} parent=1 // pred_check_branch
      %5085 = sbr.rel (0) target = $region53
    $region52: #{tpu_custom_call.1} parent=1 // pred_region
      %s5087 = ssub.s32 768, 768
      %5088 = vsyncadd [#allocation4], %s5087
      %s5090 = sshll.u32 [#allocation5], 4
      %s5091 = int_to_ptr.vmem [resolvable:$true] %s5090
      %5093 = dma.vmem_to_hbm [thread:$0]  %s5091, 768, %s11, [#allocation4]
    $region53: #{tpu_custom_call.1} parent=1 // pred_fallthru
      _
    // Predicated region
    $region54: #{tpu_custom_call.1} parent=1 // pred_check
      _
    $region55: #{tpu_custom_call.1} parent=1 // pred_check_branch
      %5095 = sbr.rel (0) target = $region57
    $region56: #{tpu_custom_call.1} parent=1 // pred_region
      %5096 = dma.done [#allocation4], 768
    $region57: #{tpu_custom_call.1} parent=1 // pred_fallthru
      _
    %5097 = vsyncpa [#allocation3], 1
    %5098 = vsyncpa [#allocation4], 1

</llo_original>
